<compile_context>
chip_gen: v7x
topology: tpu7x:2x2x1
jax: 0.10.0
libtpu: 0.0.40
codegen_flags: <defaults>
</compile_context>

<pallas_src>
import math
from functools import partial

import numpy as np
import jax
import jax.numpy as jnp
from jax.experimental import pallas as pl
from jax.experimental.pallas import tpu as pltpu

# ----------------------------- configuration -------------------------------
NUM_LAYERS = 2          # config['bert']['num_layer']
HIDDEN = 32             # config['bert']['hidden_size']
NUM_HEADS = 4
HEAD_DIM = HIDDEN // NUM_HEADS
INTERMEDIATE = 64
INPUT_SIZE = 4
MAX_POSITION = 16
OUTPUT_SIZE = 8
BATCH = 2
SEQ = 8
LN_EPS = 1e-12
INIT_W = 0.003
Z_ROW_PAD = 8           # sublane-aligned padding rows appended for z in the output slab


# ------------------------------- helpers ------------------------------------
def _layernorm(x, gamma, beta):
    mean = jnp.mean(x, axis=-1, keepdims=True)
    var = jnp.mean(jnp.square(x - mean), axis=-1, keepdims=True)
    return (x - mean) * jax.lax.rsqrt(var + LN_EPS) * gamma + beta


def _gelu(x):
    # tanh approximation of GELU (identical in kernel and reference)
    c = math.sqrt(2.0 / math.pi)
    return 0.5 * x * (1.0 + jnp.tanh(c * (x + 0.044715 * x * x * x)))


def _softplus(x):
    # numerically stable softplus: max(x, 0) + log1p(exp(-|x|))
    return jnp.maximum(x, 0.0) + jnp.log1p(jnp.exp(-jnp.abs(x)))


# ----------------------------- fused Pallas kernel ---------------------------
def fused_bert_kernel(inp_ref, pe_ref, mask_row_ref, mask_col_ref, eps_ref,
                      embed_ref, wqkv_ref, wo_ref, wi_ref, w2_ref,
                      vecs_ref, head_ref, out_ref):
    B = mask_row_ref.shape[0]
    S = mask_row_ref.shape[2]
    BS = B * S
    H = HIDDEN
    HD = HEAD_DIM

    # ---------------- embedding: Linear + pos-emb add + LayerNorm ------------
    emb = embed_ref[...]                                    # (IN+3, H) packed slab
    we = emb[:INPUT_SIZE, :]                                # (IN, H)
    be = emb[INPUT_SIZE:INPUT_SIZE + 1, :]                  # (1, H)
    ge = emb[INPUT_SIZE + 1:INPUT_SIZE + 2, :]
    bte = emb[INPUT_SIZE + 2:INPUT_SIZE + 3, :]
    h = jnp.dot(inp_ref[...], we, preferred_element_type=jnp.float32) + be
    h = _layernorm(h + pe_ref[...], ge, bte)                # (BS, H)

    # additive attention mask, replicated once for all heads (head-major batch)
    ext = (1.0 - mask_row_ref[...]) * (-10000.0)            # (B, 1, S)
    ext_full = jnp.concatenate([ext] * NUM_HEADS, axis=0)   # (NH*B, 1, S), hoisted
    scale = 1.0 / math.sqrt(HEAD_DIM)

    def to_heads(x2d):
        """(BS, H) -> (NH*B, S, HD): heads stacked on the leading batch axis."""
        x3 = x2d.reshape(B, S, H)
        return jnp.concatenate(
            [x3[:, :, hd * HD:(hd + 1) * HD] for hd in range(NUM_HEADS)], axis=0)

    # ---------------------------- BERT layers --------------------------------
    for li in range(NUM_LAYERS):                            # static, unrolled
        lv = vecs_ref[li]                                   # (8, 3H) packed small vectors
        bqkv = lv[0:1, :]                                   # (1, 3H)
        bi = lv[1:2, :INTERMEDIATE]                         # (1, I)
        bo = lv[2:3, :H]
        g1 = lv[3:4, :H]
        be1 = lv[4:5, :H]
        b2 = lv[5:6, :H]
        g2 = lv[6:7, :H]
        be2 = lv[7:8, :H]

        # fused QKV projection: one MXU dot instead of three
        qkv = jnp.dot(h, wqkv_ref[li], preferred_element_type=jnp.float32) + bqkv
        q_bh = to_heads(qkv[:, :H] * scale)                 # scale folded into q
        k_bh = to_heads(qkv[:, H:2 * H])
        v_bh = to_heads(qkv[:, 2 * H:])

        # attention over all (head, batch) pairs in one einsum / one softmax pass
        s = jnp.einsum('bqd,bkd->bqk', q_bh, k_bh,
                       preferred_element_type=jnp.float32) + ext_full
        s = s - jnp.max(s, axis=-1, keepdims=True)          # kept for numerical safety
        p = jnp.exp(s)
        p = p * pl.reciprocal(jnp.sum(p, axis=-1, keepdims=True), approx=True)
        ctx_bh = jnp.einsum('bqk,bkd->bqd', p, v_bh,
                            preferred_element_type=jnp.float32)   # (NH*B, S, HD)
        ctx = jnp.concatenate(
            [ctx_bh[hd * B:(hd + 1) * B] for hd in range(NUM_HEADS)],
            axis=-1).reshape(BS, H)

        attn_out = jnp.dot(ctx, wo_ref[li], preferred_element_type=jnp.float32) + bo
        h1 = _layernorm(attn_out + h, g1, be1)

        inter = _gelu(jnp.dot(h1, wi_ref[li], preferred_element_type=jnp.float32) + bi)
        ffn = jnp.dot(inter, w2_ref[li], preferred_element_type=jnp.float32) + b2
        h = _layernorm(ffn + h1, g2, be2)

    out_ref[0:BS, :] = h                                    # hidden_states slab

    # ---------------- head: masked mean-pool + last_fc + rsample -------------
    hp = head_ref[...]                                      # (H+1, 2*OUT) packed slab
    wl = hp[:H, :]
    bl = hp[H:H + 1, :]
    m = mask_col_ref[...]                                   # (B, S, 1)
    h3 = h.reshape(B, S, H)
    inv_cnt = pl.reciprocal(jnp.sum(m, axis=1), approx=True)         # (B, 1)
    pooled = jnp.sum(h3 * m, axis=1) * inv_cnt                       # (B, H)
    pre = jnp.dot(pooled, wl, preferred_element_type=jnp.float32) + bl
    mu = pre[:, :OUTPUT_SIZE]
    sigma = jnp.sqrt(jnp.maximum(_softplus(pre[:, OUTPUT_SIZE:]), 1e-7))
    # z = Normal(mu, sigma).rsample() written into the padded tail rows
    out_ref[BS:BS + B, :OUTPUT_SIZE] = mu + sigma * eps_ref[...]


# ------------------------------ pallas wrapper --------------------------------
def bert_fused_pallas(inp_flat, pe_flat, mask_row, mask_col, eps,
                      embed_pack, wqkv, wo, wi, w2, layer_vecs, head_pack):
    BS, H = pe_flat.shape
    args = (inp_flat, pe_flat, mask_row, mask_col, eps,
            embed_pack, wqkv, wo, wi, w2, layer_vecs, head_pack)
    vmem = lambda: pl.BlockSpec(memory_space=pltpu.MemorySpace.VMEM)
    # No grid: single invocation, all operands resident whole in VMEM
    # (~0.1 MiB total), no pipeline prologue/epilogue or double buffers.
    out = pl.pallas_call(
        fused_bert_kernel,
        in_specs=[vmem() for _ in args],
        out_specs=vmem(),
        out_shape=jax.ShapeDtypeStruct((BS + Z_ROW_PAD, H), jnp.float32),
    )(*args)
    return out


@partial(jax.jit, static_argnames=("is_deterministic",))
def bert_encoder_forward(params, inp, pos, attention_mask, eps, is_deterministic=False):
    """Mirrors BertEncoder.forward (bidirection=1, bert_pooler='mean', kl_div=False)."""
    B, S, _ = inp.shape
    pe = params["pos_table"][pos]                           # position-embedding gather (glue)
    eff_eps = jnp.zeros_like(eps) if is_deterministic else eps
    hz = bert_fused_pallas(
        inp.reshape(B * S, INPUT_SIZE),
        pe.reshape(B * S, HIDDEN),
        attention_mask[:, None, :],                         # (B, 1, S) additive-mask source
        attention_mask[:, :, None],                         # (B, S, 1) mean-pool mask
        eff_eps,
        params["embed_pack"], params["wqkv"], params["wo"], params["wi"],
        params["w2"], params["layer_vecs"], params["head_pack"])
    hidden = hz[:B * S].reshape(B, S, HIDDEN)
    z = hz[B * S:B * S + B, :OUTPUT_SIZE]
    return z, hidden


# ------------------------------ parameter init -------------------------------
def init_params(key):
    ks = jax.random.split(key, 3 + NUM_LAYERS)

    def dense(k, din, dout, scale=0.02):
        kw, _ = jax.random.split(k)
        w = scale * jax.random.normal(kw, (din, dout), jnp.float32)
        b = jnp.zeros((1, dout), jnp.float32)
        return w, b

    we, be = dense(ks[0], INPUT_SIZE, HIDDEN)
    ge = jnp.ones((1, HIDDEN), jnp.float32)
    bte = jnp.zeros((1, HIDDEN), jnp.float32)
    pos_table = 0.02 * jax.random.normal(ks[1], (MAX_POSITION + 1, HIDDEN), jnp.float32)
    pos_table = pos_table.at[0].set(0.0)                    # padding_idx=0

    layers = []
    for li in range(NUM_LAYERS):
        kk = jax.random.split(ks[2 + li], 6)
        wq, bq = dense(kk[0], HIDDEN, HIDDEN)
        wk, bk = dense(kk[1], HIDDEN, HIDDEN)
        wv, bv = dense(kk[2], HIDDEN, HIDDEN)
        wo, bo = dense(kk[3], HIDDEN, HIDDEN)
        g1 = jnp.ones((1, HIDDEN), jnp.float32)
        be1 = jnp.zeros((1, HIDDEN), jnp.float32)
        wi, bi = dense(kk[4], HIDDEN, INTERMEDIATE)
        w2, b2 = dense(kk[5], INTERMEDIATE, HIDDEN)
        g2 = jnp.ones((1, HIDDEN), jnp.float32)
        be2 = jnp.zeros((1, HIDDEN), jnp.float32)
        layers.append((wq, bq, wk, bk, wv, bv, wo, bo, g1, be1,
                       wi, bi, w2, b2, g2, be2))

    klw, klb = jax.random.split(ks[2 + NUM_LAYERS])
    w_last = jax.random.uniform(klw, (HIDDEN, 2 * OUTPUT_SIZE), jnp.float32, -INIT_W, INIT_W)
    b_last = jax.random.uniform(klb, (1, 2 * OUTPUT_SIZE), jnp.float32, -INIT_W, INIT_W)

    # -------- packed / fused kernel parameters (built once, outside jit) -----
    W3 = 3 * HIDDEN

    def pad_to(v, width):
        return jnp.pad(v, ((0, 0), (0, width - v.shape[1])))

    wqkv_s, wo_s, wi_s, w2_s, vec_s = [], [], [], [], []
    for (wq, bq, wk, bk, wv, bv, wo, bo, g1, be1, wi, bi, w2, b2, g2, be2) in layers:
        wqkv_s.append(jnp.concatenate([wq, wk, wv], axis=1))          # (H, 3H)
        wo_s.append(wo)
        wi_s.append(wi)
        w2_s.append(w2)
        vec_s.append(jnp.concatenate([
            jnp.concatenate([bq, bk, bv], axis=1),                    # row 0: bqkv (1, 3H)
            pad_to(bi, W3),                                           # row 1: bi
            pad_to(bo, W3), pad_to(g1, W3), pad_to(be1, W3),          # rows 2-4
            pad_to(b2, W3), pad_to(g2, W3), pad_to(be2, W3),          # rows 5-7
        ], axis=0))                                                   # (8, 3H)

    embed_pack = jnp.concatenate([we, be, ge, bte], axis=0)           # (IN+3, H)
    head_pack = jnp.concatenate([w_last, b_last], axis=0)             # (H+1, 2*OUT)

    return {"embed": (we, be, ge, bte), "pos_table": pos_table,
            "layers": layers, "head": (w_last, b_last),
            "embed_pack": embed_pack, "head_pack": head_pack,
            "wqkv": jnp.stack(wqkv_s), "wo": jnp.stack(wo_s),
            "wi": jnp.stack(wi_s), "w2": jnp.stack(w2_s),
            "layer_vecs": jnp.stack(vec_s)}


# ------------------------------ pure-JAX reference ---------------------------
def reference_forward(params, inp, pos, attention_mask, eps):
    we, be, ge, bte = params["embed"]
    h = inp @ we + be + params["pos_table"][pos]
    h = _layernorm(h, ge, bte)
    ext = (1.0 - attention_mask)[:, None, None, :] * -10000.0
    B, S, _ = h.shape
    for (wq, bq, wk, bk, wv, bv, wo, bo, g1, be1, wi, bi, w2, b2, g2, be2) in params["layers"]:
        def split(x):
            return x.reshape(B, S, NUM_HEADS, HEAD_DIM).transpose(0, 2, 1, 3)
        q, k, v = split(h @ wq + bq), split(h @ wk + bk), split(h @ wv + bv)
        s = jnp.einsum("bhqd,bhkd->bhqk", q, k) / math.sqrt(HEAD_DIM) + ext
        p = jax.nn.softmax(s, axis=-1)
        ctx = jnp.einsum("bhqk,bhkd->bhqd", p, v).transpose(0, 2, 1, 3).reshape(B, S, HIDDEN)
        h1 = _layernorm(ctx @ wo + bo + h, g1, be1)
        inter = _gelu(h1 @ wi + bi)
        h = _layernorm(inter @ w2 + b2 + h1, g2, be2)
    pooled = (h * attention_mask[:, :, None]).sum(1) / attention_mask.sum(1, keepdims=True)
    w_last, b_last = params["head"]
    pre = pooled @ w_last + b_last
    mu = pre[:, :OUTPUT_SIZE]
    sigma = jnp.sqrt(jnp.maximum(_softplus(pre[:, OUTPUT_SIZE:]), 1e-7))
    return mu + sigma * eps, h


# ------------------------------------ main -----------------------------------
if __name__ == "__main__":
    key = jax.random.PRNGKey(0)
    kp, ki, ke = jax.random.split(key, 3)
    params = init_params(kp)

    inp = jax.random.normal(ki, (BATCH, SEQ, INPUT_SIZE), jnp.float32)
    attention_mask = jnp.array([[1.0] * SEQ,
                                [1.0] * 6 + [0.0] * 2], jnp.float32)      # (B, S)
    pos = jnp.array([list(range(1, SEQ + 1)),
                     list(range(1, 7)) + [0, 0]], jnp.int32)              # (B, S)
    eps = jax.random.normal(ke, (BATCH, OUTPUT_SIZE), jnp.float32)        # rsample noise

    z, hidden = bert_encoder_forward(params, inp, pos, attention_mask, eps)
    jax.block_until_ready(z)
    jax.block_until_ready(hidden)

    z_ref, h_ref = reference_forward(params, inp, pos, attention_mask, eps)
    # tolerance 2e-3: kernel uses the approximate EUP reciprocal for the
    # softmax / mean-pool normalization; reference divides exactly.
    np.testing.assert_allclose(np.asarray(hidden), np.asarray(h_ref), rtol=2e-3, atol=2e-3)
    np.testing.assert_allclose(np.asarray(z), np.asarray(z_ref), rtol=2e-3, atol=2e-3)

    print("KERNEL_OK")
</pallas_src>

<mosaic_0001>
module attributes {stable_mosaic.version = 11 : i64} {
  func.func @fused_bert_kernel(%arg0: memref<16x4xf32, #tpu.memory_space<vmem>>, %arg1: memref<16x32xf32, #tpu.memory_space<vmem>>, %arg2: memref<2x1x8xf32, #tpu.memory_space<vmem>>, %arg3: memref<2x8x1xf32, #tpu.memory_space<vmem>>, %arg4: memref<2x8xf32, #tpu.memory_space<vmem>>, %arg5: memref<7x32xf32, #tpu.memory_space<vmem>>, %arg6: memref<2x32x96xf32, #tpu.memory_space<vmem>>, %arg7: memref<2x32x32xf32, #tpu.memory_space<vmem>>, %arg8: memref<2x32x64xf32, #tpu.memory_space<vmem>>, %arg9: memref<2x64x32xf32, #tpu.memory_space<vmem>>, %arg10: memref<2x8x96xf32, #tpu.memory_space<vmem>>, %arg11: memref<33x16xf32, #tpu.memory_space<vmem>>, %arg12: memref<24x32xf32, #tpu.memory_space<vmem>>) attributes {dimension_semantics = [], scalar_prefetch = 0 : i64, scratch_operands = 0 : i64, tpu.core_type = #tpu.core_type<tc>} {
    %c0 = arith.constant 0 : index
    %c0_0 = arith.constant 0 : index
    %0 = vector.load %arg5[%c0, %c0_0] : memref<7x32xf32, #tpu.memory_space<vmem>>, vector<7x32xf32>
    %1 = vector.extract_strided_slice %0 {offsets = [0, 0], sizes = [4, 32], strides = [1, 1]} : vector<7x32xf32> to vector<4x32xf32>
    %2 = vector.extract_strided_slice %0 {offsets = [4, 0], sizes = [1, 32], strides = [1, 1]} : vector<7x32xf32> to vector<1x32xf32>
    %3 = vector.extract_strided_slice %0 {offsets = [5, 0], sizes = [1, 32], strides = [1, 1]} : vector<7x32xf32> to vector<1x32xf32>
    %4 = vector.extract_strided_slice %0 {offsets = [6, 0], sizes = [1, 32], strides = [1, 1]} : vector<7x32xf32> to vector<1x32xf32>
    %c0_1 = arith.constant 0 : index
    %c0_2 = arith.constant 0 : index
    %5 = vector.load %arg0[%c0_1, %c0_2] : memref<16x4xf32, #tpu.memory_space<vmem>>, vector<16x4xf32>
    %cst = arith.constant dense<0.000000e+00> : vector<16x32xf32>
    %6 = tpu.matmul %5, %1, %cst {dimension_numbers = #tpu.dot_dimension_numbers<[1], [0], [0], [1], [0, 0, 1, 1], [], []>} : vector<16x4xf32>, vector<4x32xf32>, vector<16x32xf32> -> vector<16x32xf32>
    %7 = vector.broadcast %2 : vector<1x32xf32> to vector<16x32xf32>
    %8 = arith.addf %6, %7 : vector<16x32xf32>
    %c0_3 = arith.constant 0 : index
    %c0_4 = arith.constant 0 : index
    %9 = vector.load %arg1[%c0_3, %c0_4] : memref<16x32xf32, #tpu.memory_space<vmem>>, vector<16x32xf32>
    %10 = arith.addf %8, %9 : vector<16x32xf32>
    %cst_5 = arith.constant dense<0.000000e+00> : vector<16xf32>
    %11 = vector.multi_reduction <add>, %10, %cst_5 [1] : vector<16x32xf32> to vector<16xf32>
    %12 = vector.shape_cast %11 : vector<16xf32> to vector<16x1xf32>
    %cst_6 = arith.constant 3.200000e+01 : f32
    %13 = vector.broadcast %cst_6 : f32 to vector<16x1xf32>
    %14 = arith.divf %12, %13 : vector<16x1xf32>
    %15 = vector.broadcast %14 : vector<16x1xf32> to vector<16x32xf32>
    %16 = arith.subf %10, %15 : vector<16x32xf32>
    %17 = arith.mulf %16, %16 : vector<16x32xf32>
    %cst_7 = arith.constant dense<0.000000e+00> : vector<16xf32>
    %18 = vector.multi_reduction <add>, %17, %cst_7 [1] : vector<16x32xf32> to vector<16xf32>
    %19 = vector.shape_cast %18 : vector<16xf32> to vector<16x1xf32>
    %cst_8 = arith.constant 3.200000e+01 : f32
    %20 = vector.broadcast %cst_8 : f32 to vector<16x1xf32>
    %21 = arith.divf %19, %20 : vector<16x1xf32>
    %22 = vector.broadcast %14 : vector<16x1xf32> to vector<16x32xf32>
    %23 = arith.subf %10, %22 : vector<16x32xf32>
    %cst_9 = arith.constant 9.99999996E-13 : f32
    %24 = vector.broadcast %cst_9 : f32 to vector<16x1xf32>
    %25 = arith.addf %21, %24 : vector<16x1xf32>
    %26 = math.rsqrt %25 : vector<16x1xf32>
    %27 = vector.broadcast %26 : vector<16x1xf32> to vector<16x32xf32>
    %28 = arith.mulf %23, %27 : vector<16x32xf32>
    %29 = vector.broadcast %3 : vector<1x32xf32> to vector<16x32xf32>
    %30 = arith.mulf %28, %29 : vector<16x32xf32>
    %31 = vector.broadcast %4 : vector<1x32xf32> to vector<16x32xf32>
    %32 = arith.addf %30, %31 : vector<16x32xf32>
    %c0_10 = arith.constant 0 : index
    %c0_11 = arith.constant 0 : index
    %c0_12 = arith.constant 0 : index
    %33 = vector.load %arg2[%c0_10, %c0_11, %c0_12] : memref<2x1x8xf32, #tpu.memory_space<vmem>>, vector<2x1x8xf32>
    %cst_13 = arith.constant 1.000000e+00 : f32
    %34 = vector.broadcast %cst_13 : f32 to vector<2x1x8xf32>
    %35 = arith.subf %34, %33 : vector<2x1x8xf32>
    %cst_14 = arith.constant -1.000000e+04 : f32
    %36 = vector.broadcast %cst_14 : f32 to vector<2x1x8xf32>
    %37 = arith.mulf %35, %36 : vector<2x1x8xf32>
    %38 = tpu.concatenate %37, %37, %37, %37 in 0 : vector<2x1x8xf32>, vector<2x1x8xf32>, vector<2x1x8xf32>, vector<2x1x8xf32> -> vector<8x1x8xf32>
    %c0_15 = arith.constant 0 : index
    %c0_16 = arith.constant 0 : index
    %c0_17 = arith.constant 0 : index
    %39 = vector.load %arg10[%c0_15, %c0_16, %c0_17] : memref<2x8x96xf32, #tpu.memory_space<vmem>>, vector<1x8x96xf32>
    %40 = vector.shape_cast %39 : vector<1x8x96xf32> to vector<8x96xf32>
    %41 = vector.extract_strided_slice %40 {offsets = [0, 0], sizes = [1, 96], strides = [1, 1]} : vector<8x96xf32> to vector<1x96xf32>
    %42 = vector.extract_strided_slice %40 {offsets = [1, 0], sizes = [1, 64], strides = [1, 1]} : vector<8x96xf32> to vector<1x64xf32>
    %43 = vector.extract_strided_slice %40 {offsets = [2, 0], sizes = [1, 32], strides = [1, 1]} : vector<8x96xf32> to vector<1x32xf32>
    %44 = vector.extract_strided_slice %40 {offsets = [3, 0], sizes = [1, 32], strides = [1, 1]} : vector<8x96xf32> to vector<1x32xf32>
    %45 = vector.extract_strided_slice %40 {offsets = [4, 0], sizes = [1, 32], strides = [1, 1]} : vector<8x96xf32> to vector<1x32xf32>
    %46 = vector.extract_strided_slice %40 {offsets = [5, 0], sizes = [1, 32], strides = [1, 1]} : vector<8x96xf32> to vector<1x32xf32>
    %47 = vector.extract_strided_slice %40 {offsets = [6, 0], sizes = [1, 32], strides = [1, 1]} : vector<8x96xf32> to vector<1x32xf32>
    %48 = vector.extract_strided_slice %40 {offsets = [7, 0], sizes = [1, 32], strides = [1, 1]} : vector<8x96xf32> to vector<1x32xf32>
    %c0_18 = arith.constant 0 : index
    %c0_19 = arith.constant 0 : index
    %c0_20 = arith.constant 0 : index
    %49 = vector.load %arg6[%c0_18, %c0_19, %c0_20] : memref<2x32x96xf32, #tpu.memory_space<vmem>>, vector<1x32x96xf32>
    %50 = vector.shape_cast %49 : vector<1x32x96xf32> to vector<32x96xf32>
    %cst_21 = arith.constant dense<0.000000e+00> : vector<16x96xf32>
    %51 = tpu.matmul %32, %50, %cst_21 {dimension_numbers = #tpu.dot_dimension_numbers<[1], [0], [0], [1], [0, 0, 1, 1], [], []>} : vector<16x32xf32>, vector<32x96xf32>, vector<16x96xf32> -> vector<16x96xf32>
    %52 = vector.broadcast %41 : vector<1x96xf32> to vector<16x96xf32>
    %53 = arith.addf %51, %52 : vector<16x96xf32>
    %54 = vector.extract_strided_slice %53 {offsets = [0, 0], sizes = [16, 32], strides = [1, 1]} : vector<16x96xf32> to vector<16x32xf32>
    %cst_22 = arith.constant 0.353553385 : f32
    %55 = vector.broadcast %cst_22 : f32 to vector<16x32xf32>
    %56 = arith.mulf %54, %55 : vector<16x32xf32>
    %57 = vector.shape_cast %56 : vector<16x32xf32> to vector<2x8x32xf32>
    %58 = vector.extract_strided_slice %57 {offsets = [0, 0, 0], sizes = [2, 8, 8], strides = [1, 1, 1]} : vector<2x8x32xf32> to vector<2x8x8xf32>
    %59 = vector.extract_strided_slice %57 {offsets = [0, 0, 8], sizes = [2, 8, 8], strides = [1, 1, 1]} : vector<2x8x32xf32> to vector<2x8x8xf32>
    %60 = vector.extract_strided_slice %57 {offsets = [0, 0, 16], sizes = [2, 8, 8], strides = [1, 1, 1]} : vector<2x8x32xf32> to vector<2x8x8xf32>
    %61 = vector.extract_strided_slice %57 {offsets = [0, 0, 24], sizes = [2, 8, 8], strides = [1, 1, 1]} : vector<2x8x32xf32> to vector<2x8x8xf32>
    %62 = tpu.concatenate %58, %59, %60, %61 in 0 : vector<2x8x8xf32>, vector<2x8x8xf32>, vector<2x8x8xf32>, vector<2x8x8xf32> -> vector<8x8x8xf32>
    %63 = vector.extract_strided_slice %53 {offsets = [0, 32], sizes = [16, 32], strides = [1, 1]} : vector<16x96xf32> to vector<16x32xf32>
    %64 = vector.shape_cast %63 : vector<16x32xf32> to vector<2x8x32xf32>
    %65 = vector.extract_strided_slice %64 {offsets = [0, 0, 0], sizes = [2, 8, 8], strides = [1, 1, 1]} : vector<2x8x32xf32> to vector<2x8x8xf32>
    %66 = vector.extract_strided_slice %64 {offsets = [0, 0, 8], sizes = [2, 8, 8], strides = [1, 1, 1]} : vector<2x8x32xf32> to vector<2x8x8xf32>
    %67 = vector.extract_strided_slice %64 {offsets = [0, 0, 16], sizes = [2, 8, 8], strides = [1, 1, 1]} : vector<2x8x32xf32> to vector<2x8x8xf32>
    %68 = vector.extract_strided_slice %64 {offsets = [0, 0, 24], sizes = [2, 8, 8], strides = [1, 1, 1]} : vector<2x8x32xf32> to vector<2x8x8xf32>
    %69 = tpu.concatenate %65, %66, %67, %68 in 0 : vector<2x8x8xf32>, vector<2x8x8xf32>, vector<2x8x8xf32>, vector<2x8x8xf32> -> vector<8x8x8xf32>
    %70 = vector.extract_strided_slice %53 {offsets = [0, 64], sizes = [16, 32], strides = [1, 1]} : vector<16x96xf32> to vector<16x32xf32>
    %71 = vector.shape_cast %70 : vector<16x32xf32> to vector<2x8x32xf32>
    %72 = vector.extract_strided_slice %71 {offsets = [0, 0, 0], sizes = [2, 8, 8], strides = [1, 1, 1]} : vector<2x8x32xf32> to vector<2x8x8xf32>
    %73 = vector.extract_strided_slice %71 {offsets = [0, 0, 8], sizes = [2, 8, 8], strides = [1, 1, 1]} : vector<2x8x32xf32> to vector<2x8x8xf32>
    %74 = vector.extract_strided_slice %71 {offsets = [0, 0, 16], sizes = [2, 8, 8], strides = [1, 1, 1]} : vector<2x8x32xf32> to vector<2x8x8xf32>
    %75 = vector.extract_strided_slice %71 {offsets = [0, 0, 24], sizes = [2, 8, 8], strides = [1, 1, 1]} : vector<2x8x32xf32> to vector<2x8x8xf32>
    %76 = tpu.concatenate %72, %73, %74, %75 in 0 : vector<2x8x8xf32>, vector<2x8x8xf32>, vector<2x8x8xf32>, vector<2x8x8xf32> -> vector<8x8x8xf32>
    "tpu.trace_start"() <{level = 10 : i32, message = "bqd,bkd->bqk"}> : () -> ()
    %cst_23 = arith.constant dense<0.000000e+00> : vector<8x8x8xf32>
    %77 = tpu.matmul %62, %69, %cst_23 {dimension_numbers = #tpu.dot_dimension_numbers<[2], [2], [1], [1], [0, 0, 0, 1, 1, 1], [0], [0]>} : vector<8x8x8xf32>, vector<8x8x8xf32>, vector<8x8x8xf32> -> vector<8x8x8xf32>
    "tpu.trace_stop"() : () -> ()
    %78 = vector.broadcast %38 : vector<8x1x8xf32> to vector<8x8x8xf32>
    %79 = arith.addf %77, %78 : vector<8x8x8xf32>
    %cst_24 = arith.constant dense<0xFF800000> : vector<8x8xf32>
    %80 = vector.multi_reduction <maximumf>, %79, %cst_24 [2] : vector<8x8x8xf32> to vector<8x8xf32>
    %81 = vector.shape_cast %80 : vector<8x8xf32> to vector<8x8x1xf32>
    %82 = vector.broadcast %81 : vector<8x8x1xf32> to vector<8x8x8xf32>
    %83 = arith.subf %79, %82 : vector<8x8x8xf32>
    %84 = math.exp %83 : vector<8x8x8xf32>
    %cst_25 = arith.constant dense<0.000000e+00> : vector<8x8xf32>
    %85 = vector.multi_reduction <add>, %84, %cst_25 [2] : vector<8x8x8xf32> to vector<8x8xf32>
    %86 = vector.shape_cast %85 : vector<8x8xf32> to vector<8x8x1xf32>
    %87 = tpu.reciprocal %86 {approx = true} : vector<8x8x1xf32> -> vector<8x8x1xf32>
    %88 = vector.broadcast %87 : vector<8x8x1xf32> to vector<8x8x8xf32>
    %89 = arith.mulf %84, %88 : vector<8x8x8xf32>
    "tpu.trace_start"() <{level = 10 : i32, message = "bqk,bkd->bqd"}> : () -> ()
    %cst_26 = arith.constant dense<0.000000e+00> : vector<8x8x8xf32>
    %90 = tpu.matmul %89, %76, %cst_26 {dimension_numbers = #tpu.dot_dimension_numbers<[2], [1], [1], [2], [0, 0, 0, 1, 1, 2], [0], [0]>} : vector<8x8x8xf32>, vector<8x8x8xf32>, vector<8x8x8xf32> -> vector<8x8x8xf32>
    "tpu.trace_stop"() : () -> ()
    %91 = vector.extract_strided_slice %90 {offsets = [0, 0, 0], sizes = [2, 8, 8], strides = [1, 1, 1]} : vector<8x8x8xf32> to vector<2x8x8xf32>
    %92 = vector.extract_strided_slice %90 {offsets = [2, 0, 0], sizes = [2, 8, 8], strides = [1, 1, 1]} : vector<8x8x8xf32> to vector<2x8x8xf32>
    %93 = vector.extract_strided_slice %90 {offsets = [4, 0, 0], sizes = [2, 8, 8], strides = [1, 1, 1]} : vector<8x8x8xf32> to vector<2x8x8xf32>
    %94 = vector.extract_strided_slice %90 {offsets = [6, 0, 0], sizes = [2, 8, 8], strides = [1, 1, 1]} : vector<8x8x8xf32> to vector<2x8x8xf32>
    %95 = tpu.concatenate %91, %92, %93, %94 in 2 : vector<2x8x8xf32>, vector<2x8x8xf32>, vector<2x8x8xf32>, vector<2x8x8xf32> -> vector<2x8x32xf32>
    %96 = vector.shape_cast %95 : vector<2x8x32xf32> to vector<16x32xf32>
    %c0_27 = arith.constant 0 : index
    %c0_28 = arith.constant 0 : index
    %c0_29 = arith.constant 0 : index
    %97 = vector.load %arg7[%c0_27, %c0_28, %c0_29] : memref<2x32x32xf32, #tpu.memory_space<vmem>>, vector<1x32x32xf32>
    %98 = vector.shape_cast %97 : vector<1x32x32xf32> to vector<32x32xf32>
    %cst_30 = arith.constant dense<0.000000e+00> : vector<16x32xf32>
    %99 = tpu.matmul %96, %98, %cst_30 {dimension_numbers = #tpu.dot_dimension_numbers<[1], [0], [0], [1], [0, 0, 1, 1], [], []>} : vector<16x32xf32>, vector<32x32xf32>, vector<16x32xf32> -> vector<16x32xf32>
    %100 = vector.broadcast %43 : vector<1x32xf32> to vector<16x32xf32>
    %101 = arith.addf %99, %100 : vector<16x32xf32>
    %102 = arith.addf %101, %32 : vector<16x32xf32>
    %cst_31 = arith.constant dense<0.000000e+00> : vector<16xf32>
    %103 = vector.multi_reduction <add>, %102, %cst_31 [1] : vector<16x32xf32> to vector<16xf32>
    %104 = vector.shape_cast %103 : vector<16xf32> to vector<16x1xf32>
    %cst_32 = arith.constant 3.200000e+01 : f32
    %105 = vector.broadcast %cst_32 : f32 to vector<16x1xf32>
    %106 = arith.divf %104, %105 : vector<16x1xf32>
    %107 = vector.broadcast %106 : vector<16x1xf32> to vector<16x32xf32>
    %108 = arith.subf %102, %107 : vector<16x32xf32>
    %109 = arith.mulf %108, %108 : vector<16x32xf32>
    %cst_33 = arith.constant dense<0.000000e+00> : vector<16xf32>
    %110 = vector.multi_reduction <add>, %109, %cst_33 [1] : vector<16x32xf32> to vector<16xf32>
    %111 = vector.shape_cast %110 : vector<16xf32> to vector<16x1xf32>
    %cst_34 = arith.constant 3.200000e+01 : f32
    %112 = vector.broadcast %cst_34 : f32 to vector<16x1xf32>
    %113 = arith.divf %111, %112 : vector<16x1xf32>
    %114 = vector.broadcast %106 : vector<16x1xf32> to vector<16x32xf32>
    %115 = arith.subf %102, %114 : vector<16x32xf32>
    %cst_35 = arith.constant 9.99999996E-13 : f32
    %116 = vector.broadcast %cst_35 : f32 to vector<16x1xf32>
    %117 = arith.addf %113, %116 : vector<16x1xf32>
    %118 = math.rsqrt %117 : vector<16x1xf32>
    %119 = vector.broadcast %118 : vector<16x1xf32> to vector<16x32xf32>
    %120 = arith.mulf %115, %119 : vector<16x32xf32>
    %121 = vector.broadcast %44 : vector<1x32xf32> to vector<16x32xf32>
    %122 = arith.mulf %120, %121 : vector<16x32xf32>
    %123 = vector.broadcast %45 : vector<1x32xf32> to vector<16x32xf32>
    %124 = arith.addf %122, %123 : vector<16x32xf32>
    %c0_36 = arith.constant 0 : index
    %c0_37 = arith.constant 0 : index
    %c0_38 = arith.constant 0 : index
    %125 = vector.load %arg8[%c0_36, %c0_37, %c0_38] : memref<2x32x64xf32, #tpu.memory_space<vmem>>, vector<1x32x64xf32>
    %126 = vector.shape_cast %125 : vector<1x32x64xf32> to vector<32x64xf32>
    %cst_39 = arith.constant dense<0.000000e+00> : vector<16x64xf32>
    %127 = tpu.matmul %124, %126, %cst_39 {dimension_numbers = #tpu.dot_dimension_numbers<[1], [0], [0], [1], [0, 0, 1, 1], [], []>} : vector<16x32xf32>, vector<32x64xf32>, vector<16x64xf32> -> vector<16x64xf32>
    %128 = vector.broadcast %42 : vector<1x64xf32> to vector<16x64xf32>
    %129 = arith.addf %127, %128 : vector<16x64xf32>
    %cst_40 = arith.constant 5.000000e-01 : f32
    %130 = vector.broadcast %cst_40 : f32 to vector<16x64xf32>
    %131 = arith.mulf %130, %129 : vector<16x64xf32>
    %cst_41 = arith.constant 4.471500e-02 : f32
    %132 = vector.broadcast %cst_41 : f32 to vector<16x64xf32>
    %133 = arith.mulf %132, %129 : vector<16x64xf32>
    %134 = arith.mulf %133, %129 : vector<16x64xf32>
    %135 = arith.mulf %134, %129 : vector<16x64xf32>
    %136 = arith.addf %129, %135 : vector<16x64xf32>
    %cst_42 = arith.constant 0.797884583 : f32
    %137 = vector.broadcast %cst_42 : f32 to vector<16x64xf32>
    %138 = arith.mulf %137, %136 : vector<16x64xf32>
    %139 = math.tanh %138 : vector<16x64xf32>
    %cst_43 = arith.constant 1.000000e+00 : f32
    %140 = vector.broadcast %cst_43 : f32 to vector<16x64xf32>
    %141 = arith.addf %140, %139 : vector<16x64xf32>
    %142 = arith.mulf %131, %141 : vector<16x64xf32>
    %c0_44 = arith.constant 0 : index
    %c0_45 = arith.constant 0 : index
    %c0_46 = arith.constant 0 : index
    %143 = vector.load %arg9[%c0_44, %c0_45, %c0_46] : memref<2x64x32xf32, #tpu.memory_space<vmem>>, vector<1x64x32xf32>
    %144 = vector.shape_cast %143 : vector<1x64x32xf32> to vector<64x32xf32>
    %cst_47 = arith.constant dense<0.000000e+00> : vector<16x32xf32>
    %145 = tpu.matmul %142, %144, %cst_47 {dimension_numbers = #tpu.dot_dimension_numbers<[1], [0], [0], [1], [0, 0, 1, 1], [], []>} : vector<16x64xf32>, vector<64x32xf32>, vector<16x32xf32> -> vector<16x32xf32>
    %146 = vector.broadcast %46 : vector<1x32xf32> to vector<16x32xf32>
    %147 = arith.addf %145, %146 : vector<16x32xf32>
    %148 = arith.addf %147, %124 : vector<16x32xf32>
    %cst_48 = arith.constant dense<0.000000e+00> : vector<16xf32>
    %149 = vector.multi_reduction <add>, %148, %cst_48 [1] : vector<16x32xf32> to vector<16xf32>
    %150 = vector.shape_cast %149 : vector<16xf32> to vector<16x1xf32>
    %cst_49 = arith.constant 3.200000e+01 : f32
    %151 = vector.broadcast %cst_49 : f32 to vector<16x1xf32>
    %152 = arith.divf %150, %151 : vector<16x1xf32>
    %153 = vector.broadcast %152 : vector<16x1xf32> to vector<16x32xf32>
    %154 = arith.subf %148, %153 : vector<16x32xf32>
    %155 = arith.mulf %154, %154 : vector<16x32xf32>
    %cst_50 = arith.constant dense<0.000000e+00> : vector<16xf32>
    %156 = vector.multi_reduction <add>, %155, %cst_50 [1] : vector<16x32xf32> to vector<16xf32>
    %157 = vector.shape_cast %156 : vector<16xf32> to vector<16x1xf32>
    %cst_51 = arith.constant 3.200000e+01 : f32
    %158 = vector.broadcast %cst_51 : f32 to vector<16x1xf32>
    %159 = arith.divf %157, %158 : vector<16x1xf32>
    %160 = vector.broadcast %152 : vector<16x1xf32> to vector<16x32xf32>
    %161 = arith.subf %148, %160 : vector<16x32xf32>
    %cst_52 = arith.constant 9.99999996E-13 : f32
    %162 = vector.broadcast %cst_52 : f32 to vector<16x1xf32>
    %163 = arith.addf %159, %162 : vector<16x1xf32>
    %164 = math.rsqrt %163 : vector<16x1xf32>
    %165 = vector.broadcast %164 : vector<16x1xf32> to vector<16x32xf32>
    %166 = arith.mulf %161, %165 : vector<16x32xf32>
    %167 = vector.broadcast %47 : vector<1x32xf32> to vector<16x32xf32>
    %168 = arith.mulf %166, %167 : vector<16x32xf32>
    %169 = vector.broadcast %48 : vector<1x32xf32> to vector<16x32xf32>
    %170 = arith.addf %168, %169 : vector<16x32xf32>
    %c1 = arith.constant 1 : index
    %c0_53 = arith.constant 0 : index
    %c0_54 = arith.constant 0 : index
    %171 = vector.load %arg10[%c1, %c0_53, %c0_54] : memref<2x8x96xf32, #tpu.memory_space<vmem>>, vector<1x8x96xf32>
    %172 = vector.shape_cast %171 : vector<1x8x96xf32> to vector<8x96xf32>
    %173 = vector.extract_strided_slice %172 {offsets = [0, 0], sizes = [1, 96], strides = [1, 1]} : vector<8x96xf32> to vector<1x96xf32>
    %174 = vector.extract_strided_slice %172 {offsets = [1, 0], sizes = [1, 64], strides = [1, 1]} : vector<8x96xf32> to vector<1x64xf32>
    %175 = vector.extract_strided_slice %172 {offsets = [2, 0], sizes = [1, 32], strides = [1, 1]} : vector<8x96xf32> to vector<1x32xf32>
    %176 = vector.extract_strided_slice %172 {offsets = [3, 0], sizes = [1, 32], strides = [1, 1]} : vector<8x96xf32> to vector<1x32xf32>
    %177 = vector.extract_strided_slice %172 {offsets = [4, 0], sizes = [1, 32], strides = [1, 1]} : vector<8x96xf32> to vector<1x32xf32>
    %178 = vector.extract_strided_slice %172 {offsets = [5, 0], sizes = [1, 32], strides = [1, 1]} : vector<8x96xf32> to vector<1x32xf32>
    %179 = vector.extract_strided_slice %172 {offsets = [6, 0], sizes = [1, 32], strides = [1, 1]} : vector<8x96xf32> to vector<1x32xf32>
    %180 = vector.extract_strided_slice %172 {offsets = [7, 0], sizes = [1, 32], strides = [1, 1]} : vector<8x96xf32> to vector<1x32xf32>
    %c1_55 = arith.constant 1 : index
    %c0_56 = arith.constant 0 : index
    %c0_57 = arith.constant 0 : index
    %181 = vector.load %arg6[%c1_55, %c0_56, %c0_57] : memref<2x32x96xf32, #tpu.memory_space<vmem>>, vector<1x32x96xf32>
    %182 = vector.shape_cast %181 : vector<1x32x96xf32> to vector<32x96xf32>
    %cst_58 = arith.constant dense<0.000000e+00> : vector<16x96xf32>
    %183 = tpu.matmul %170, %182, %cst_58 {dimension_numbers = #tpu.dot_dimension_numbers<[1], [0], [0], [1], [0, 0, 1, 1], [], []>} : vector<16x32xf32>, vector<32x96xf32>, vector<16x96xf32> -> vector<16x96xf32>
    %184 = vector.broadcast %173 : vector<1x96xf32> to vector<16x96xf32>
    %185 = arith.addf %183, %184 : vector<16x96xf32>
    %186 = vector.extract_strided_slice %185 {offsets = [0, 0], sizes = [16, 32], strides = [1, 1]} : vector<16x96xf32> to vector<16x32xf32>
    %cst_59 = arith.constant 0.353553385 : f32
    %187 = vector.broadcast %cst_59 : f32 to vector<16x32xf32>
    %188 = arith.mulf %186, %187 : vector<16x32xf32>
    %189 = vector.shape_cast %188 : vector<16x32xf32> to vector<2x8x32xf32>
    %190 = vector.extract_strided_slice %189 {offsets = [0, 0, 0], sizes = [2, 8, 8], strides = [1, 1, 1]} : vector<2x8x32xf32> to vector<2x8x8xf32>
    %191 = vector.extract_strided_slice %189 {offsets = [0, 0, 8], sizes = [2, 8, 8], strides = [1, 1, 1]} : vector<2x8x32xf32> to vector<2x8x8xf32>
    %192 = vector.extract_strided_slice %189 {offsets = [0, 0, 16], sizes = [2, 8, 8], strides = [1, 1, 1]} : vector<2x8x32xf32> to vector<2x8x8xf32>
    %193 = vector.extract_strided_slice %189 {offsets = [0, 0, 24], sizes = [2, 8, 8], strides = [1, 1, 1]} : vector<2x8x32xf32> to vector<2x8x8xf32>
    %194 = tpu.concatenate %190, %191, %192, %193 in 0 : vector<2x8x8xf32>, vector<2x8x8xf32>, vector<2x8x8xf32>, vector<2x8x8xf32> -> vector<8x8x8xf32>
    %195 = vector.extract_strided_slice %185 {offsets = [0, 32], sizes = [16, 32], strides = [1, 1]} : vector<16x96xf32> to vector<16x32xf32>
    %196 = vector.shape_cast %195 : vector<16x32xf32> to vector<2x8x32xf32>
    %197 = vector.extract_strided_slice %196 {offsets = [0, 0, 0], sizes = [2, 8, 8], strides = [1, 1, 1]} : vector<2x8x32xf32> to vector<2x8x8xf32>
    %198 = vector.extract_strided_slice %196 {offsets = [0, 0, 8], sizes = [2, 8, 8], strides = [1, 1, 1]} : vector<2x8x32xf32> to vector<2x8x8xf32>
    %199 = vector.extract_strided_slice %196 {offsets = [0, 0, 16], sizes = [2, 8, 8], strides = [1, 1, 1]} : vector<2x8x32xf32> to vector<2x8x8xf32>
    %200 = vector.extract_strided_slice %196 {offsets = [0, 0, 24], sizes = [2, 8, 8], strides = [1, 1, 1]} : vector<2x8x32xf32> to vector<2x8x8xf32>
    %201 = tpu.concatenate %197, %198, %199, %200 in 0 : vector<2x8x8xf32>, vector<2x8x8xf32>, vector<2x8x8xf32>, vector<2x8x8xf32> -> vector<8x8x8xf32>
    %202 = vector.extract_strided_slice %185 {offsets = [0, 64], sizes = [16, 32], strides = [1, 1]} : vector<16x96xf32> to vector<16x32xf32>
    %203 = vector.shape_cast %202 : vector<16x32xf32> to vector<2x8x32xf32>
    %204 = vector.extract_strided_slice %203 {offsets = [0, 0, 0], sizes = [2, 8, 8], strides = [1, 1, 1]} : vector<2x8x32xf32> to vector<2x8x8xf32>
    %205 = vector.extract_strided_slice %203 {offsets = [0, 0, 8], sizes = [2, 8, 8], strides = [1, 1, 1]} : vector<2x8x32xf32> to vector<2x8x8xf32>
    %206 = vector.extract_strided_slice %203 {offsets = [0, 0, 16], sizes = [2, 8, 8], strides = [1, 1, 1]} : vector<2x8x32xf32> to vector<2x8x8xf32>
    %207 = vector.extract_strided_slice %203 {offsets = [0, 0, 24], sizes = [2, 8, 8], strides = [1, 1, 1]} : vector<2x8x32xf32> to vector<2x8x8xf32>
    %208 = tpu.concatenate %204, %205, %206, %207 in 0 : vector<2x8x8xf32>, vector<2x8x8xf32>, vector<2x8x8xf32>, vector<2x8x8xf32> -> vector<8x8x8xf32>
    "tpu.trace_start"() <{level = 10 : i32, message = "bqd,bkd->bqk"}> : () -> ()
    %cst_60 = arith.constant dense<0.000000e+00> : vector<8x8x8xf32>
    %209 = tpu.matmul %194, %201, %cst_60 {dimension_numbers = #tpu.dot_dimension_numbers<[2], [2], [1], [1], [0, 0, 0, 1, 1, 1], [0], [0]>} : vector<8x8x8xf32>, vector<8x8x8xf32>, vector<8x8x8xf32> -> vector<8x8x8xf32>
    "tpu.trace_stop"() : () -> ()
    %210 = vector.broadcast %38 : vector<8x1x8xf32> to vector<8x8x8xf32>
    %211 = arith.addf %209, %210 : vector<8x8x8xf32>
    %cst_61 = arith.constant dense<0xFF800000> : vector<8x8xf32>
    %212 = vector.multi_reduction <maximumf>, %211, %cst_61 [2] : vector<8x8x8xf32> to vector<8x8xf32>
    %213 = vector.shape_cast %212 : vector<8x8xf32> to vector<8x8x1xf32>
    %214 = vector.broadcast %213 : vector<8x8x1xf32> to vector<8x8x8xf32>
    %215 = arith.subf %211, %214 : vector<8x8x8xf32>
    %216 = math.exp %215 : vector<8x8x8xf32>
    %cst_62 = arith.constant dense<0.000000e+00> : vector<8x8xf32>
    %217 = vector.multi_reduction <add>, %216, %cst_62 [2] : vector<8x8x8xf32> to vector<8x8xf32>
    %218 = vector.shape_cast %217 : vector<8x8xf32> to vector<8x8x1xf32>
    %219 = tpu.reciprocal %218 {approx = true} : vector<8x8x1xf32> -> vector<8x8x1xf32>
    %220 = vector.broadcast %219 : vector<8x8x1xf32> to vector<8x8x8xf32>
    %221 = arith.mulf %216, %220 : vector<8x8x8xf32>
    "tpu.trace_start"() <{level = 10 : i32, message = "bqk,bkd->bqd"}> : () -> ()
    %cst_63 = arith.constant dense<0.000000e+00> : vector<8x8x8xf32>
    %222 = tpu.matmul %221, %208, %cst_63 {dimension_numbers = #tpu.dot_dimension_numbers<[2], [1], [1], [2], [0, 0, 0, 1, 1, 2], [0], [0]>} : vector<8x8x8xf32>, vector<8x8x8xf32>, vector<8x8x8xf32> -> vector<8x8x8xf32>
    "tpu.trace_stop"() : () -> ()
    %223 = vector.extract_strided_slice %222 {offsets = [0, 0, 0], sizes = [2, 8, 8], strides = [1, 1, 1]} : vector<8x8x8xf32> to vector<2x8x8xf32>
    %224 = vector.extract_strided_slice %222 {offsets = [2, 0, 0], sizes = [2, 8, 8], strides = [1, 1, 1]} : vector<8x8x8xf32> to vector<2x8x8xf32>
    %225 = vector.extract_strided_slice %222 {offsets = [4, 0, 0], sizes = [2, 8, 8], strides = [1, 1, 1]} : vector<8x8x8xf32> to vector<2x8x8xf32>
    %226 = vector.extract_strided_slice %222 {offsets = [6, 0, 0], sizes = [2, 8, 8], strides = [1, 1, 1]} : vector<8x8x8xf32> to vector<2x8x8xf32>
    %227 = tpu.concatenate %223, %224, %225, %226 in 2 : vector<2x8x8xf32>, vector<2x8x8xf32>, vector<2x8x8xf32>, vector<2x8x8xf32> -> vector<2x8x32xf32>
    %228 = vector.shape_cast %227 : vector<2x8x32xf32> to vector<16x32xf32>
    %c1_64 = arith.constant 1 : index
    %c0_65 = arith.constant 0 : index
    %c0_66 = arith.constant 0 : index
    %229 = vector.load %arg7[%c1_64, %c0_65, %c0_66] : memref<2x32x32xf32, #tpu.memory_space<vmem>>, vector<1x32x32xf32>
    %230 = vector.shape_cast %229 : vector<1x32x32xf32> to vector<32x32xf32>
    %cst_67 = arith.constant dense<0.000000e+00> : vector<16x32xf32>
    %231 = tpu.matmul %228, %230, %cst_67 {dimension_numbers = #tpu.dot_dimension_numbers<[1], [0], [0], [1], [0, 0, 1, 1], [], []>} : vector<16x32xf32>, vector<32x32xf32>, vector<16x32xf32> -> vector<16x32xf32>
    %232 = vector.broadcast %175 : vector<1x32xf32> to vector<16x32xf32>
    %233 = arith.addf %231, %232 : vector<16x32xf32>
    %234 = arith.addf %233, %170 : vector<16x32xf32>
    %cst_68 = arith.constant dense<0.000000e+00> : vector<16xf32>
    %235 = vector.multi_reduction <add>, %234, %cst_68 [1] : vector<16x32xf32> to vector<16xf32>
    %236 = vector.shape_cast %235 : vector<16xf32> to vector<16x1xf32>
    %cst_69 = arith.constant 3.200000e+01 : f32
    %237 = vector.broadcast %cst_69 : f32 to vector<16x1xf32>
    %238 = arith.divf %236, %237 : vector<16x1xf32>
    %239 = vector.broadcast %238 : vector<16x1xf32> to vector<16x32xf32>
    %240 = arith.subf %234, %239 : vector<16x32xf32>
    %241 = arith.mulf %240, %240 : vector<16x32xf32>
    %cst_70 = arith.constant dense<0.000000e+00> : vector<16xf32>
    %242 = vector.multi_reduction <add>, %241, %cst_70 [1] : vector<16x32xf32> to vector<16xf32>
    %243 = vector.shape_cast %242 : vector<16xf32> to vector<16x1xf32>
    %cst_71 = arith.constant 3.200000e+01 : f32
    %244 = vector.broadcast %cst_71 : f32 to vector<16x1xf32>
    %245 = arith.divf %243, %244 : vector<16x1xf32>
    %246 = vector.broadcast %238 : vector<16x1xf32> to vector<16x32xf32>
    %247 = arith.subf %234, %246 : vector<16x32xf32>
    %cst_72 = arith.constant 9.99999996E-13 : f32
    %248 = vector.broadcast %cst_72 : f32 to vector<16x1xf32>
    %249 = arith.addf %245, %248 : vector<16x1xf32>
    %250 = math.rsqrt %249 : vector<16x1xf32>
    %251 = vector.broadcast %250 : vector<16x1xf32> to vector<16x32xf32>
    %252 = arith.mulf %247, %251 : vector<16x32xf32>
    %253 = vector.broadcast %176 : vector<1x32xf32> to vector<16x32xf32>
    %254 = arith.mulf %252, %253 : vector<16x32xf32>
    %255 = vector.broadcast %177 : vector<1x32xf32> to vector<16x32xf32>
    %256 = arith.addf %254, %255 : vector<16x32xf32>
    %c1_73 = arith.constant 1 : index
    %c0_74 = arith.constant 0 : index
    %c0_75 = arith.constant 0 : index
    %257 = vector.load %arg8[%c1_73, %c0_74, %c0_75] : memref<2x32x64xf32, #tpu.memory_space<vmem>>, vector<1x32x64xf32>
    %258 = vector.shape_cast %257 : vector<1x32x64xf32> to vector<32x64xf32>
    %cst_76 = arith.constant dense<0.000000e+00> : vector<16x64xf32>
    %259 = tpu.matmul %256, %258, %cst_76 {dimension_numbers = #tpu.dot_dimension_numbers<[1], [0], [0], [1], [0, 0, 1, 1], [], []>} : vector<16x32xf32>, vector<32x64xf32>, vector<16x64xf32> -> vector<16x64xf32>
    %260 = vector.broadcast %174 : vector<1x64xf32> to vector<16x64xf32>
    %261 = arith.addf %259, %260 : vector<16x64xf32>
    %cst_77 = arith.constant 5.000000e-01 : f32
    %262 = vector.broadcast %cst_77 : f32 to vector<16x64xf32>
    %263 = arith.mulf %262, %261 : vector<16x64xf32>
    %cst_78 = arith.constant 4.471500e-02 : f32
    %264 = vector.broadcast %cst_78 : f32 to vector<16x64xf32>
    %265 = arith.mulf %264, %261 : vector<16x64xf32>
    %266 = arith.mulf %265, %261 : vector<16x64xf32>
    %267 = arith.mulf %266, %261 : vector<16x64xf32>
    %268 = arith.addf %261, %267 : vector<16x64xf32>
    %cst_79 = arith.constant 0.797884583 : f32
    %269 = vector.broadcast %cst_79 : f32 to vector<16x64xf32>
    %270 = arith.mulf %269, %268 : vector<16x64xf32>
    %271 = math.tanh %270 : vector<16x64xf32>
    %cst_80 = arith.constant 1.000000e+00 : f32
    %272 = vector.broadcast %cst_80 : f32 to vector<16x64xf32>
    %273 = arith.addf %272, %271 : vector<16x64xf32>
    %274 = arith.mulf %263, %273 : vector<16x64xf32>
    %c1_81 = arith.constant 1 : index
    %c0_82 = arith.constant 0 : index
    %c0_83 = arith.constant 0 : index
    %275 = vector.load %arg9[%c1_81, %c0_82, %c0_83] : memref<2x64x32xf32, #tpu.memory_space<vmem>>, vector<1x64x32xf32>
    %276 = vector.shape_cast %275 : vector<1x64x32xf32> to vector<64x32xf32>
    %cst_84 = arith.constant dense<0.000000e+00> : vector<16x32xf32>
    %277 = tpu.matmul %274, %276, %cst_84 {dimension_numbers = #tpu.dot_dimension_numbers<[1], [0], [0], [1], [0, 0, 1, 1], [], []>} : vector<16x64xf32>, vector<64x32xf32>, vector<16x32xf32> -> vector<16x32xf32>
    %278 = vector.broadcast %178 : vector<1x32xf32> to vector<16x32xf32>
    %279 = arith.addf %277, %278 : vector<16x32xf32>
    %280 = arith.addf %279, %256 : vector<16x32xf32>
    %cst_85 = arith.constant dense<0.000000e+00> : vector<16xf32>
    %281 = vector.multi_reduction <add>, %280, %cst_85 [1] : vector<16x32xf32> to vector<16xf32>
    %282 = vector.shape_cast %281 : vector<16xf32> to vector<16x1xf32>
    %cst_86 = arith.constant 3.200000e+01 : f32
    %283 = vector.broadcast %cst_86 : f32 to vector<16x1xf32>
    %284 = arith.divf %282, %283 : vector<16x1xf32>
    %285 = vector.broadcast %284 : vector<16x1xf32> to vector<16x32xf32>
    %286 = arith.subf %280, %285 : vector<16x32xf32>
    %287 = arith.mulf %286, %286 : vector<16x32xf32>
    %cst_87 = arith.constant dense<0.000000e+00> : vector<16xf32>
    %288 = vector.multi_reduction <add>, %287, %cst_87 [1] : vector<16x32xf32> to vector<16xf32>
    %289 = vector.shape_cast %288 : vector<16xf32> to vector<16x1xf32>
    %cst_88 = arith.constant 3.200000e+01 : f32
    %290 = vector.broadcast %cst_88 : f32 to vector<16x1xf32>
    %291 = arith.divf %289, %290 : vector<16x1xf32>
    %292 = vector.broadcast %284 : vector<16x1xf32> to vector<16x32xf32>
    %293 = arith.subf %280, %292 : vector<16x32xf32>
    %cst_89 = arith.constant 9.99999996E-13 : f32
    %294 = vector.broadcast %cst_89 : f32 to vector<16x1xf32>
    %295 = arith.addf %291, %294 : vector<16x1xf32>
    %296 = math.rsqrt %295 : vector<16x1xf32>
    %297 = vector.broadcast %296 : vector<16x1xf32> to vector<16x32xf32>
    %298 = arith.mulf %293, %297 : vector<16x32xf32>
    %299 = vector.broadcast %179 : vector<1x32xf32> to vector<16x32xf32>
    %300 = arith.mulf %298, %299 : vector<16x32xf32>
    %301 = vector.broadcast %180 : vector<1x32xf32> to vector<16x32xf32>
    %302 = arith.addf %300, %301 : vector<16x32xf32>
    %c0_90 = arith.constant 0 : index
    %c0_91 = arith.constant 0 : index
    %303 = vector.load %arg12[%c0_90, %c0_91] : memref<24x32xf32, #tpu.memory_space<vmem>>, vector<16x32xf32>
    tpu.vector_store %arg12[%c0_90, %c0_91], %302 {strides = array<i32>} : memref<24x32xf32, #tpu.memory_space<vmem>>, vector<16x32xf32>,
    %c0_92 = arith.constant 0 : index
    %c0_93 = arith.constant 0 : index
    %304 = vector.load %arg11[%c0_92, %c0_93] : memref<33x16xf32, #tpu.memory_space<vmem>>, vector<33x16xf32>
    %305 = vector.extract_strided_slice %304 {offsets = [0, 0], sizes = [32, 16], strides = [1, 1]} : vector<33x16xf32> to vector<32x16xf32>
    %306 = vector.extract_strided_slice %304 {offsets = [32, 0], sizes = [1, 16], strides = [1, 1]} : vector<33x16xf32> to vector<1x16xf32>
    %c0_94 = arith.constant 0 : index
    %c0_95 = arith.constant 0 : index
    %c0_96 = arith.constant 0 : index
    %307 = vector.load %arg3[%c0_94, %c0_95, %c0_96] : memref<2x8x1xf32, #tpu.memory_space<vmem>>, vector<2x8x1xf32>
    %308 = vector.shape_cast %302 : vector<16x32xf32> to vector<2x8x32xf32>
    %cst_97 = arith.constant dense<0.000000e+00> : vector<2x1xf32>
    %309 = vector.multi_reduction <add>, %307, %cst_97 [1] : vector<2x8x1xf32> to vector<2x1xf32>
    %310 = tpu.reciprocal %309 {approx = true} : vector<2x1xf32> -> vector<2x1xf32>
    %311 = vector.broadcast %307 : vector<2x8x1xf32> to vector<2x8x32xf32>
    %312 = arith.mulf %308, %311 : vector<2x8x32xf32>
    %cst_98 = arith.constant dense<0.000000e+00> : vector<2x32xf32>
    %313 = vector.multi_reduction <add>, %312, %cst_98 [1] : vector<2x8x32xf32> to vector<2x32xf32>
    %314 = vector.broadcast %310 : vector<2x1xf32> to vector<2x32xf32>
    %315 = arith.mulf %313, %314 : vector<2x32xf32>
    %cst_99 = arith.constant dense<0.000000e+00> : vector<2x16xf32>
    %316 = tpu.matmul %315, %305, %cst_99 {dimension_numbers = #tpu.dot_dimension_numbers<[1], [0], [0], [1], [0, 0, 1, 1], [], []>} : vector<2x32xf32>, vector<32x16xf32>, vector<2x16xf32> -> vector<2x16xf32>
    %317 = vector.broadcast %306 : vector<1x16xf32> to vector<2x16xf32>
    %318 = arith.addf %316, %317 : vector<2x16xf32>
    %319 = vector.extract_strided_slice %318 {offsets = [0, 0], sizes = [2, 8], strides = [1, 1]} : vector<2x16xf32> to vector<2x8xf32>
    %320 = vector.extract_strided_slice %318 {offsets = [0, 8], sizes = [2, 8], strides = [1, 1]} : vector<2x16xf32> to vector<2x8xf32>
    %cst_100 = arith.constant 0.000000e+00 : f32
    %321 = vector.broadcast %cst_100 : f32 to vector<2x8xf32>
    %322 = arith.maximumf %320, %321 : vector<2x8xf32>
    %323 = math.absf %320 : vector<2x8xf32>
    %cst_101 = arith.constant 0.000000e+00 : f32
    %324 = vector.broadcast %cst_101 : f32 to vector<2x8xf32>
    %325 = arith.subf %324, %323 : vector<2x8xf32>
    %326 = math.exp %325 : vector<2x8xf32>
    %327 = math.log1p %326 : vector<2x8xf32>
    %328 = arith.addf %322, %327 : vector<2x8xf32>
    %cst_102 = arith.constant 1.000000e-07 : f32
    %329 = vector.broadcast %cst_102 : f32 to vector<2x8xf32>
    %330 = arith.maximumf %328, %329 : vector<2x8xf32>
    %331 = math.sqrt %330 : vector<2x8xf32>
    %c0_103 = arith.constant 0 : index
    %c0_104 = arith.constant 0 : index
    %332 = vector.load %arg4[%c0_103, %c0_104] : memref<2x8xf32, #tpu.memory_space<vmem>>, vector<2x8xf32>
    %333 = arith.mulf %331, %332 : vector<2x8xf32>
    %334 = arith.addf %319, %333 : vector<2x8xf32>
    %c16 = arith.constant 16 : index
    %c0_105 = arith.constant 0 : index
    %335 = vector.load %arg12[%c16, %c0_105] : memref<24x32xf32, #tpu.memory_space<vmem>>, vector<2x8xf32>
    tpu.vector_store %arg12[%c16, %c0_105], %334 {strides = array<i32>} : memref<24x32xf32, #tpu.memory_space<vmem>>, vector<2x8xf32>,
    return
  }
}

</mosaic_0001>

<llo_original>
// kernel: bert_encoder_forward.1
$region0: #{bert_encoder_forward.1}
  #allocation0 [shape = 'u32[]', space=smem, size = 0x4, offset = 0x4, fixed_abs, tag = 'smem constant byte address 0x4 - core index']
  #allocation1 [shape = 'u32[144,128]{1,0:T(1,128)}', space=vmem, size = 0x12000, scoped, tag = 'internal scratch']
  %s0 = inlined_call_operand.vmem [shape: f32[16,4], index: 0, kind: input, shape index: {}]
  %s1 = inlined_call_operand.vmem [shape: f32[16,32], index: 1, kind: input, shape index: {}]
  %s2 = inlined_call_operand.vmem [shape: f32[2,1,8], index: 2, kind: input, shape index: {}]
  %s3 = inlined_call_operand.vmem [shape: f32[2,8,1], index: 3, kind: input, shape index: {}]
  %s4 = inlined_call_operand.vmem [shape: f32[2,8], index: 4, kind: input, shape index: {}]
  %s5 = inlined_call_operand.vmem [shape: f32[7,32], index: 5, kind: input, shape index: {}]
  %s6 = inlined_call_operand.vmem [shape: f32[2,32,96], index: 6, kind: input, shape index: {}]
  %s7 = inlined_call_operand.vmem [shape: f32[2,32,32], index: 7, kind: input, shape index: {}]
  %s8 = inlined_call_operand.vmem [shape: f32[2,32,64], index: 8, kind: input, shape index: {}]
  %s9 = inlined_call_operand.vmem [shape: f32[2,64,32], index: 9, kind: input, shape index: {}]
  %s10 = inlined_call_operand.vmem [shape: f32[2,8,96], index: 10, kind: input, shape index: {}]
  %s11 = inlined_call_operand.vmem [shape: f32[33,16], index: 11, kind: input, shape index: {}]
  %s12 = inlined_call_operand.vmem [shape: f32[24,32], index: 12, kind: output, shape index: {}]
  %s13 = sld [smem:[#allocation0]]
  $region58: #{bert_encoder_forward.1} parent=0
    _
  %s15 = ssub.s32 1, %s13
  %s16 = scalar_select 0, %s15, %s13
  // Predicated region
  $region2: #{bert_encoder_forward.1} parent=0 // pred_check
    _
  $region3: #{bert_encoder_forward.1} parent=0 // pred_check_branch
    %18 = sbr.rel (0) target = $region5
  $region4: #{bert_encoder_forward.1} parent=0 // pred_region
    _
  $region5: #{bert_encoder_forward.1} parent=0 // pred_fallthru
    _
  // Predicated region
  $region6: #{bert_encoder_forward.1} parent=0 // pred_check
    _
  $region7: #{bert_encoder_forward.1} parent=0 // pred_check_branch
    %20 = sbr.rel (0) target = $region9
  $region8: #{bert_encoder_forward.1} parent=0 // pred_region
    _
  $region9: #{bert_encoder_forward.1} parent=0 // pred_fallthru
    _
  // Predicated region
  $region10: #{bert_encoder_forward.1} parent=0 // pred_check
    _
  $region11: #{bert_encoder_forward.1} parent=0 // pred_check_branch
    %22 = sbr.rel (0) target = $region13
  $region12: #{bert_encoder_forward.1} parent=0 // pred_region
    _
  $region13: #{bert_encoder_forward.1} parent=0 // pred_fallthru
    _
  // Predicated region
  $region14: #{bert_encoder_forward.1} parent=0 // pred_check
    _
  $region15: #{bert_encoder_forward.1} parent=0 // pred_check_branch
    %24 = sbr.rel (0) target = $region17
  $region16: #{bert_encoder_forward.1} parent=0 // pred_region
    _
  $region17: #{bert_encoder_forward.1} parent=0 // pred_fallthru
    _
  // Predicated region
  $region18: #{bert_encoder_forward.1} parent=0 // pred_check
    _
  $region19: #{bert_encoder_forward.1} parent=0 // pred_check_branch
    %26 = sbr.rel (0) target = $region21
  $region20: #{bert_encoder_forward.1} parent=0 // pred_region
    _
  $region21: #{bert_encoder_forward.1} parent=0 // pred_fallthru
    _
  // Predicated region
  $region22: #{bert_encoder_forward.1} parent=0 // pred_check
    _
  $region23: #{bert_encoder_forward.1} parent=0 // pred_check_branch
    %28 = sbr.rel (0) target = $region25
  $region24: #{bert_encoder_forward.1} parent=0 // pred_region
    _
  $region25: #{bert_encoder_forward.1} parent=0 // pred_fallthru
    _
  // Predicated region
  $region26: #{bert_encoder_forward.1} parent=0 // pred_check
    _
  $region27: #{bert_encoder_forward.1} parent=0 // pred_check_branch
    %30 = sbr.rel (0) target = $region29
  $region28: #{bert_encoder_forward.1} parent=0 // pred_region
    _
  $region29: #{bert_encoder_forward.1} parent=0 // pred_fallthru
    _
  // Predicated region
  $region30: #{bert_encoder_forward.1} parent=0 // pred_check
    _
  $region31: #{bert_encoder_forward.1} parent=0 // pred_check_branch
    %32 = sbr.rel (0) target = $region33
  $region32: #{bert_encoder_forward.1} parent=0 // pred_region
    _
  $region33: #{bert_encoder_forward.1} parent=0 // pred_fallthru
    _
  // Predicated region
  $region34: #{bert_encoder_forward.1} parent=0 // pred_check
    _
  $region35: #{bert_encoder_forward.1} parent=0 // pred_check_branch
    %34 = sbr.rel (0) target = $region37
  $region36: #{bert_encoder_forward.1} parent=0 // pred_region
    _
  $region37: #{bert_encoder_forward.1} parent=0 // pred_fallthru
    _
  // Predicated region
  $region38: #{bert_encoder_forward.1} parent=0 // pred_check
    _
  $region39: #{bert_encoder_forward.1} parent=0 // pred_check_branch
    %36 = sbr.rel (0) target = $region41
  $region40: #{bert_encoder_forward.1} parent=0 // pred_region
    _
  $region41: #{bert_encoder_forward.1} parent=0 // pred_fallthru
    _
  // Predicated region
  $region42: #{bert_encoder_forward.1} parent=0 // pred_check
    _
  $region43: #{bert_encoder_forward.1} parent=0 // pred_check_branch
    %38 = sbr.rel (0) target = $region45
  $region44: #{bert_encoder_forward.1} parent=0 // pred_region
    _
  $region45: #{bert_encoder_forward.1} parent=0 // pred_fallthru
    _
  // Predicated region
  $region46: #{bert_encoder_forward.1} parent=0 // pred_check
    _
  $region47: #{bert_encoder_forward.1} parent=0 // pred_check_branch
    %40 = sbr.rel (0) target = $region49
  $region48: #{bert_encoder_forward.1} parent=0 // pred_region
    _
  $region49: #{bert_encoder_forward.1} parent=0 // pred_fallthru
    _
  %v41 = vld [vmem:[%s5] sm:$0x7f]
  %v42 = vld [vmem:[%s0] sm:$0xff]
  %v43 = vld [vmem:[%s0 + $0x8] sm:$0xff]
  %v44 = vlaneseq
  %v45 = vshrl.u32 %v44, 7
  %v46 = vsub.s32 4, %v45
  %v47 = vrot.slane %v41, %v46
  %vm48 = vcmask 31744
  %v50 = vsel %vm48, %v42, 0
  %v53 = vsel %vm48, %v43, 0
  %vm55 = vcmask 1043456
  %v57 = vsel %vm55, %v41, 0
  %59 = vmatprep.subr.mxu0 0.0
  %60 = vmatpush1.msra.mxu0 %v57
  %61 = vmatprep.subr.mxu0 0.0
  %62 = vmatpush1.msra.mxu0 0.0
  %63 = vmatprep.subr.mxu0 0.0
  %64 = vmatpush1.msra.mxu0 0.0
  %65 = vmatprep.subr.mxu0 0.0
  %66 = vmatpush1.msra.mxu0 0.0
  %67 = vmatprep.subr.mxu0 0.0
  %68 = vmatpush1.msra.mxu0 0.0
  %69 = vmatprep.subr.mxu0 0.0
  %70 = vmatpush1.msra.mxu0 0.0
  %71 = vmatprep.subr.mxu0 0.0
  %72 = vmatpush1.msra.mxu0 0.0
  %73 = vmatprep.subr.mxu0 0.0
  %74 = vmatpush1.msra.mxu0 0.0
  %75 = vmatprep.subr.mxu0 0.0
  %76 = vmatpush1.msra.mxu0 0.0
  %77 = vmatprep.subr.mxu0 0.0
  %78 = vmatpush1.msra.mxu0 0.0
  %79 = vmatprep.subr.mxu0 0.0
  %80 = vmatpush1.msra.mxu0 0.0
  %81 = vmatprep.subr.mxu0 0.0
  %82 = vmatpush1.msra.mxu0 0.0
  %83 = vmatprep.subr.mxu0 0.0
  %84 = vmatpush1.msra.mxu0 0.0
  %85 = vmatprep.subr.mxu0 0.0
  %86 = vmatpush1.msra.mxu0 0.0
  %87 = vmatprep.subr.mxu0 0.0
  %88 = vmatpush1.msra.mxu0 0.0
  %89 = vmatprep.subr.mxu0 0.0
  %90 = vmatpush1.msra.mxu0 0.0
  %91 = vmatprep.subr.mxu0 0.0
  %92 = vmatpush1.msra.mxu0 0.0
  %93 = vmatprep.subr.mxu0 0.0
  %94 = vmatpush1.msra.mxu0 0.0
  %95 = vmatprep.subr.mxu0 0.0
  %96 = vmatpush1.msra.mxu0 0.0
  %97 = vmatprep.subr.mxu0 0.0
  %98 = vmatpush1.msra.mxu0 0.0
  %99 = vmatprep.subr.mxu0 0.0
  %100 = vmatpush1.msra.mxu0 0.0
  %101 = vmatprep.subr.mxu0 0.0
  %102 = vmatpush1.msra.mxu0 0.0
  %103 = vmatprep.subr.mxu0 0.0
  %104 = vmatpush1.msra.mxu0 0.0
  %105 = vmatprep.subr.mxu0 0.0
  %106 = vmatpush1.msra.mxu0 0.0
  %107 = vmatprep.subr.mxu0 0.0
  %108 = vmatpush1.msra.mxu0 0.0
  %109 = vmatprep.subr.mxu0 0.0
  %110 = vmatpush1.msra.mxu0 0.0
  %111 = vmatprep.subr.mxu0 0.0
  %112 = vmatpush1.msra.mxu0 0.0
  %113 = vmatprep.subr.mxu0 0.0
  %114 = vmatpush1.msra.mxu0 0.0
  %115 = vmatprep.subr.mxu0 0.0
  %116 = vmatpush1.msra.mxu0 0.0
  %117 = vmatprep.subr.mxu0 0.0
  %118 = vmatpush1.msra.mxu0 0.0
  %119 = vmatprep.subr.mxu0 0.0
  %120 = vmatpush1.msra.mxu0 0.0
  %121 = vmatprep.subr.mxu0 0.0
  %122 = vmatpush1.msra.mxu0 0.0
  %123 = vmatprep.mubr.f32.mxu0 0.0
  %124 = vmatmul.mubr.f32.gmra.mrb[0].mxu0 %v50
  %v125 = vpop.f32.mrb[0].mxu0
  %v126 = vadd.f32 %v47, %v125
  %v127 = vpop.f32.mrb[0].mxu0
  %128 = vmatprep.mubr.f32.mxu0 0.0
  %129 = vmatmul.mubr.f32.gmra.mrb[0].mxu0 %v53
  %v130 = vpop.f32.mrb[0].mxu0
  %v131 = vadd.f32 %v47, %v130
  %v132 = vpop.f32.mrb[0].mxu0
  %133 = vdwg.mxu0
  %v134 = vld [vmem:[%s1] sm:$0xff]
  %v135 = vld [vmem:[%s1 + $0x8] sm:$0xff]
  %v136 = vadd.f32 %v126, %v134
  %v137 = vadd.f32 %v131, %v135
  %vm138 = vcmask 261120
  %v139 = vsel %vm138, %v136, 0.0
  %140 = vadd.xlane.f32.xlu0 %v139
  %v141 = vpop.xlane.xlu0 %140
  %v142 = vsel %vm138, %v137, 0.0
  %143 = vadd.xlane.f32.xlu0 %v142
  %v144 = vpop.xlane.xlu0 %143
  %v145 = vrcp.pop 32.0
  %v146 = vmul.f32 %v141, %v145
  %v147 = vmul.f32 %v144, %v145
  %v148 = vsub.f32 %v136, %v146
  %v149 = vsub.f32 %v137, %v147
  %v150 = vmul.f32 %v148, %v148
  %v151 = vmul.f32 %v149, %v149
  %v152 = vsel %vm138, %v150, 0.0
  %153 = vadd.xlane.f32.xlu0 %v152
  %v154 = vpop.xlane.xlu0 %153
  %v155 = vsel %vm138, %v151, 0.0
  %156 = vadd.xlane.f32.xlu0 %v155
  %v157 = vpop.xlane.xlu0 %156
  %v158 = vmul.f32 %v154, %v145
  %v159 = vmul.f32 %v157, %v145
  %v160 = vadd.f32 %v158, 1e-12
  %v161 = vadd.f32 %v159, 1e-12
  %v162 = vrsqrt.pop %v160
  %v163 = vrsqrt.pop %v161
  %v164 = vmul.f32 %v148, %v162
  %v165 = vmul.f32 %v149, %v163
  %v166 = vlaneseq
  %v167 = vshrl.u32 %v166, 7
  %v168 = vsub.s32 5, %v167
  %v169 = vrot.slane %v41, %v168
  %v170 = vmul.f32 %v164, %v169
  %v171 = vmul.f32 %v165, %v169
  %v172 = vlaneseq
  %v173 = vshrl.u32 %v172, 7
  %v174 = vsub.s32 6, %v173
  %v175 = vrot.slane %v41, %v174
  %v176 = vadd.f32 %v170, %v175
  %v177 = vadd.f32 %v171, %v175
  %v178 = vld [vmem:[%s2] sm:$0x1]
  %v179 = vld [vmem:[%s2 + $0x1] sm:$0x1]
  %v180 = vsub.f32 1.0, %v178
  %v181 = vsub.f32 1.0, %v179
  %v182 = vmul.f32 %v180, -10000.0
  %v183 = vmul.f32 %v181, -10000.0
  %v184 = vld [vmem:[%s10] sm:$0xff]
  %v185 = vld [vmem:[%s6] sm:$0xff]
  %v186 = vld [vmem:[%s6 + $0x8] sm:$0xff]
  %v187 = vld [vmem:[%s6 + $0x10] sm:$0xff]
  %v188 = vld [vmem:[%s6 + $0x18] sm:$0xff]
  %v189 = vlaneseq
  %v190 = vshrl.u32 %v189, 7
  %v191 = vsub.s32 0, %v190
  %v192 = vrot.slane %v184, %v191
  %v194 = vsel %vm138, %v176, 0
  %v197 = vsel %vm138, %v177, 0
  %199 = vmatprep.subr.mxu0 0.0
  %200 = vmatpush1.msra.mxu0 %v185
  %201 = vmatprep.subr.mxu0 0.0
  %202 = vmatpush1.msra.mxu0 %v186
  %203 = vmatprep.subr.mxu0 0.0
  %204 = vmatpush1.msra.mxu0 %v187
  %205 = vmatprep.subr.mxu0 0.0
  %206 = vmatpush1.msra.mxu0 %v188
  %207 = vmatprep.subr.mxu0 0.0
  %208 = vmatpush1.msra.mxu0 0.0
  %209 = vmatprep.subr.mxu0 0.0
  %210 = vmatpush1.msra.mxu0 0.0
  %211 = vmatprep.subr.mxu0 0.0
  %212 = vmatpush1.msra.mxu0 0.0
  %213 = vmatprep.subr.mxu0 0.0
  %214 = vmatpush1.msra.mxu0 0.0
  %215 = vmatprep.subr.mxu0 0.0
  %216 = vmatpush1.msra.mxu0 0.0
  %217 = vmatprep.subr.mxu0 0.0
  %218 = vmatpush1.msra.mxu0 0.0
  %219 = vmatprep.subr.mxu0 0.0
  %220 = vmatpush1.msra.mxu0 0.0
  %221 = vmatprep.subr.mxu0 0.0
  %222 = vmatpush1.msra.mxu0 0.0
  %223 = vmatprep.subr.mxu0 0.0
  %224 = vmatpush1.msra.mxu0 0.0
  %225 = vmatprep.subr.mxu0 0.0
  %226 = vmatpush1.msra.mxu0 0.0
  %227 = vmatprep.subr.mxu0 0.0
  %228 = vmatpush1.msra.mxu0 0.0
  %229 = vmatprep.subr.mxu0 0.0
  %230 = vmatpush1.msra.mxu0 0.0
  %231 = vmatprep.subr.mxu0 0.0
  %232 = vmatpush1.msra.mxu0 0.0
  %233 = vmatprep.subr.mxu0 0.0
  %234 = vmatpush1.msra.mxu0 0.0
  %235 = vmatprep.subr.mxu0 0.0
  %236 = vmatpush1.msra.mxu0 0.0
  %237 = vmatprep.subr.mxu0 0.0
  %238 = vmatpush1.msra.mxu0 0.0
  %239 = vmatprep.subr.mxu0 0.0
  %240 = vmatpush1.msra.mxu0 0.0
  %241 = vmatprep.subr.mxu0 0.0
  %242 = vmatpush1.msra.mxu0 0.0
  %243 = vmatprep.subr.mxu0 0.0
  %244 = vmatpush1.msra.mxu0 0.0
  %245 = vmatprep.subr.mxu0 0.0
  %246 = vmatpush1.msra.mxu0 0.0
  %247 = vmatprep.subr.mxu0 0.0
  %248 = vmatpush1.msra.mxu0 0.0
  %249 = vmatprep.subr.mxu0 0.0
  %250 = vmatpush1.msra.mxu0 0.0
  %251 = vmatprep.subr.mxu0 0.0
  %252 = vmatpush1.msra.mxu0 0.0
  %253 = vmatprep.subr.mxu0 0.0
  %254 = vmatpush1.msra.mxu0 0.0
  %255 = vmatprep.subr.mxu0 0.0
  %256 = vmatpush1.msra.mxu0 0.0
  %257 = vmatprep.subr.mxu0 0.0
  %258 = vmatpush1.msra.mxu0 0.0
  %259 = vmatprep.subr.mxu0 0.0
  %260 = vmatpush1.msra.mxu0 0.0
  %261 = vmatprep.subr.mxu0 0.0
  %262 = vmatpush1.msra.mxu0 0.0
  %263 = vmatprep.mubr.f32.mxu0 0.0
  %264 = vmatmul.mubr.f32.gmra.mrb[0].mxu0 %v194
  %v265 = vpop.f32.mrb[0].mxu0
  %v266 = vadd.f32 %v192, %v265
  %v267 = vpop.f32.mrb[0].mxu0
  %268 = vmatprep.mubr.f32.mxu0 0.0
  %269 = vmatmul.mubr.f32.gmra.mrb[0].mxu0 %v197
  %v270 = vpop.f32.mrb[0].mxu0
  %v271 = vadd.f32 %v192, %v270
  %v272 = vpop.f32.mrb[0].mxu0
  %273 = vdwg.mxu0
  %v274 = vmul.f32 %v266, 0.35355338
  %v275 = vmul.f32 %v271, 0.35355338
  %278 = vrot.lane.b32.xlu0 %v274, 120
  %v279 = vpop.permute.xlu0 %278
  %280 = vrot.lane.b32.xlu0 %v275, 120
  %v281 = vpop.permute.xlu0 %280
  %282 = vrot.lane.b32.xlu0 %v274, 112
  %v283 = vpop.permute.xlu0 %282
  %284 = vrot.lane.b32.xlu0 %v275, 112
  %v285 = vpop.permute.xlu0 %284
  %286 = vrot.lane.b32.xlu0 %v274, 104
  %v287 = vpop.permute.xlu0 %286
  %288 = vrot.lane.b32.xlu0 %v275, 104
  %v289 = vpop.permute.xlu0 %288
  %292 = vrot.lane.b32.xlu0 %v266, 120
  %v293 = vpop.permute.xlu0 %292
  %294 = vrot.lane.b32.xlu0 %v271, 120
  %v295 = vpop.permute.xlu0 %294
  %296 = vrot.lane.b32.xlu0 %v266, 112
  %v297 = vpop.permute.xlu0 %296
  %298 = vrot.lane.b32.xlu0 %v271, 112
  %v299 = vpop.permute.xlu0 %298
  %300 = vrot.lane.b32.xlu0 %v266, 104
  %v301 = vpop.permute.xlu0 %300
  %302 = vrot.lane.b32.xlu0 %v271, 104
  %v303 = vpop.permute.xlu0 %302
  %v306 = vlaneseq
  %v307 = vshrl.u32 %v306, 7
  %v308 = vsub.s32 0, %v307
  %v309 = vrot.slane %v182, %v308
  %v310 = vlaneseq
  %v311 = vshrl.u32 %v310, 7
  %v312 = vsub.s32 0, %v311
  %v313 = vrot.slane %v183, %v312
  %316 = vrot.lane.b32.xlu0 %v266, 96
  %v317 = vpop.permute.xlu0 %316
  %vm318 = vcmask 64512
  %v319 = vsel %vm318, %v274, 0
  %v321 = vsel %vm318, %v317, 0
  %323 = vmatprep.subr.mxu0 0.0
  %324 = vmatpush1.xpose.msra.mxu0 %v321
  %325 = vmatprep.subr.mxu0 0.0
  %326 = vmatpush1.xpose.msra.mxu0 0.0
  %327 = vmatprep.subr.mxu0 0.0
  %328 = vmatpush1.xpose.msra.mxu0 0.0
  %329 = vmatprep.subr.mxu0 0.0
  %330 = vmatpush1.xpose.msra.mxu0 0.0
  %331 = vmatprep.subr.mxu0 0.0
  %332 = vmatpush1.xpose.msra.mxu0 0.0
  %333 = vmatprep.subr.mxu0 0.0
  %334 = vmatpush1.xpose.msra.mxu0 0.0
  %335 = vmatprep.subr.mxu0 0.0
  %336 = vmatpush1.xpose.msra.mxu0 0.0
  %337 = vmatprep.subr.mxu0 0.0
  %338 = vmatpush1.xpose.msra.mxu0 0.0
  %339 = vmatprep.subr.mxu0 0.0
  %340 = vmatpush1.xpose.msra.mxu0 0.0
  %341 = vmatprep.subr.mxu0 0.0
  %342 = vmatpush1.xpose.msra.mxu0 0.0
  %343 = vmatprep.subr.mxu0 0.0
  %344 = vmatpush1.xpose.msra.mxu0 0.0
  %345 = vmatprep.subr.mxu0 0.0
  %346 = vmatpush1.xpose.msra.mxu0 0.0
  %347 = vmatprep.subr.mxu0 0.0
  %348 = vmatpush1.xpose.msra.mxu0 0.0
  %349 = vmatprep.subr.mxu0 0.0
  %350 = vmatpush1.xpose.msra.mxu0 0.0
  %351 = vmatprep.subr.mxu0 0.0
  %352 = vmatpush1.xpose.msra.mxu0 0.0
  %353 = vmatprep.subr.mxu0 0.0
  %354 = vmatpush1.xpose.msra.mxu0 0.0
  %355 = vmatprep.subr.mxu0 0.0
  %356 = vmatpush1.xpose.msra.mxu0 0.0
  %357 = vmatprep.subr.mxu0 0.0
  %358 = vmatpush1.xpose.msra.mxu0 0.0
  %359 = vmatprep.subr.mxu0 0.0
  %360 = vmatpush1.xpose.msra.mxu0 0.0
  %361 = vmatprep.subr.mxu0 0.0
  %362 = vmatpush1.xpose.msra.mxu0 0.0
  %363 = vmatprep.subr.mxu0 0.0
  %364 = vmatpush1.xpose.msra.mxu0 0.0
  %365 = vmatprep.subr.mxu0 0.0
  %366 = vmatpush1.xpose.msra.mxu0 0.0
  %367 = vmatprep.subr.mxu0 0.0
  %368 = vmatpush1.xpose.msra.mxu0 0.0
  %369 = vmatprep.subr.mxu0 0.0
  %370 = vmatpush1.xpose.msra.mxu0 0.0
  %371 = vmatprep.subr.mxu0 0.0
  %372 = vmatpush1.xpose.msra.mxu0 0.0
  %373 = vmatprep.subr.mxu0 0.0
  %374 = vmatpush1.xpose.msra.mxu0 0.0
  %375 = vmatprep.subr.mxu0 0.0
  %376 = vmatpush1.xpose.msra.mxu0 0.0
  %377 = vmatprep.subr.mxu0 0.0
  %378 = vmatpush1.xpose.msra.mxu0 0.0
  %379 = vmatprep.subr.mxu0 0.0
  %380 = vmatpush1.xpose.msra.mxu0 0.0
  %381 = vmatprep.subr.mxu0 0.0
  %382 = vmatpush1.xpose.msra.mxu0 0.0
  %383 = vmatprep.subr.mxu0 0.0
  %384 = vmatpush1.xpose.msra.mxu0 0.0
  %385 = vmatprep.subr.mxu0 0.0
  %386 = vmatpush1.xpose.msra.mxu0 0.0
  %387 = vmatprep.mubr.f32.mxu0 0.0
  %388 = vmatmul.mubr.f32.gmra.mrb[0].mxu0 %v319
  %v389 = vpop.f32.mrb[0].mxu0
  %v390 = vadd.f32 %v309, %v389
  %v391 = vpop.f32.mrb[0].mxu0
  %392 = vdwg.mxu0
  %393 = vrot.lane.b32.xlu0 %v271, 96
  %v394 = vpop.permute.xlu0 %393
  %v395 = vsel %vm318, %v275, 0
  %v397 = vsel %vm318, %v394, 0
  %399 = vmatprep.subr.mxu0 0.0
  %400 = vmatpush1.xpose.msra.mxu0 %v397
  %401 = vmatprep.subr.mxu0 0.0
  %402 = vmatpush1.xpose.msra.mxu0 0.0
  %403 = vmatprep.subr.mxu0 0.0
  %404 = vmatpush1.xpose.msra.mxu0 0.0
  %405 = vmatprep.subr.mxu0 0.0
  %406 = vmatpush1.xpose.msra.mxu0 0.0
  %407 = vmatprep.subr.mxu0 0.0
  %408 = vmatpush1.xpose.msra.mxu0 0.0
  %409 = vmatprep.subr.mxu0 0.0
  %410 = vmatpush1.xpose.msra.mxu0 0.0
  %411 = vmatprep.subr.mxu0 0.0
  %412 = vmatpush1.xpose.msra.mxu0 0.0
  %413 = vmatprep.subr.mxu0 0.0
  %414 = vmatpush1.xpose.msra.mxu0 0.0
  %415 = vmatprep.subr.mxu0 0.0
  %416 = vmatpush1.xpose.msra.mxu0 0.0
  %417 = vmatprep.subr.mxu0 0.0
  %418 = vmatpush1.xpose.msra.mxu0 0.0
  %419 = vmatprep.subr.mxu0 0.0
  %420 = vmatpush1.xpose.msra.mxu0 0.0
  %421 = vmatprep.subr.mxu0 0.0
  %422 = vmatpush1.xpose.msra.mxu0 0.0
  %423 = vmatprep.subr.mxu0 0.0
  %424 = vmatpush1.xpose.msra.mxu0 0.0
  %425 = vmatprep.subr.mxu0 0.0
  %426 = vmatpush1.xpose.msra.mxu0 0.0
  %427 = vmatprep.subr.mxu0 0.0
  %428 = vmatpush1.xpose.msra.mxu0 0.0
  %429 = vmatprep.subr.mxu0 0.0
  %430 = vmatpush1.xpose.msra.mxu0 0.0
  %431 = vmatprep.subr.mxu0 0.0
  %432 = vmatpush1.xpose.msra.mxu0 0.0
  %433 = vmatprep.subr.mxu0 0.0
  %434 = vmatpush1.xpose.msra.mxu0 0.0
  %435 = vmatprep.subr.mxu0 0.0
  %436 = vmatpush1.xpose.msra.mxu0 0.0
  %437 = vmatprep.subr.mxu0 0.0
  %438 = vmatpush1.xpose.msra.mxu0 0.0
  %439 = vmatprep.subr.mxu0 0.0
  %440 = vmatpush1.xpose.msra.mxu0 0.0
  %441 = vmatprep.subr.mxu0 0.0
  %442 = vmatpush1.xpose.msra.mxu0 0.0
  %443 = vmatprep.subr.mxu0 0.0
  %444 = vmatpush1.xpose.msra.mxu0 0.0
  %445 = vmatprep.subr.mxu0 0.0
  %446 = vmatpush1.xpose.msra.mxu0 0.0
  %447 = vmatprep.subr.mxu0 0.0
  %448 = vmatpush1.xpose.msra.mxu0 0.0
  %449 = vmatprep.subr.mxu0 0.0
  %450 = vmatpush1.xpose.msra.mxu0 0.0
  %451 = vmatprep.subr.mxu0 0.0
  %452 = vmatpush1.xpose.msra.mxu0 0.0
  %453 = vmatprep.subr.mxu0 0.0
  %454 = vmatpush1.xpose.msra.mxu0 0.0
  %455 = vmatprep.subr.mxu0 0.0
  %456 = vmatpush1.xpose.msra.mxu0 0.0
  %457 = vmatprep.subr.mxu0 0.0
  %458 = vmatpush1.xpose.msra.mxu0 0.0
  %459 = vmatprep.subr.mxu0 0.0
  %460 = vmatpush1.xpose.msra.mxu0 0.0
  %461 = vmatprep.subr.mxu0 0.0
  %462 = vmatpush1.xpose.msra.mxu0 0.0
  %463 = vmatprep.mubr.f32.mxu0 0.0
  %464 = vmatmul.mubr.f32.gmra.mrb[0].mxu0 %v395
  %v465 = vpop.f32.mrb[0].mxu0
  %v466 = vadd.f32 %v313, %v465
  %v467 = vpop.f32.mrb[0].mxu0
  %468 = vdwg.mxu0
  %469 = vrot.lane.b32.xlu0 %v293, 96
  %v470 = vpop.permute.xlu0 %469
  %v471 = vsel %vm318, %v279, 0
  %v473 = vsel %vm318, %v470, 0
  %475 = vmatprep.subr.mxu0 0.0
  %476 = vmatpush1.xpose.msra.mxu0 %v473
  %477 = vmatprep.subr.mxu0 0.0
  %478 = vmatpush1.xpose.msra.mxu0 0.0
  %479 = vmatprep.subr.mxu0 0.0
  %480 = vmatpush1.xpose.msra.mxu0 0.0
  %481 = vmatprep.subr.mxu0 0.0
  %482 = vmatpush1.xpose.msra.mxu0 0.0
  %483 = vmatprep.subr.mxu0 0.0
  %484 = vmatpush1.xpose.msra.mxu0 0.0
  %485 = vmatprep.subr.mxu0 0.0
  %486 = vmatpush1.xpose.msra.mxu0 0.0
  %487 = vmatprep.subr.mxu0 0.0
  %488 = vmatpush1.xpose.msra.mxu0 0.0
  %489 = vmatprep.subr.mxu0 0.0
  %490 = vmatpush1.xpose.msra.mxu0 0.0
  %491 = vmatprep.subr.mxu0 0.0
  %492 = vmatpush1.xpose.msra.mxu0 0.0
  %493 = vmatprep.subr.mxu0 0.0
  %494 = vmatpush1.xpose.msra.mxu0 0.0
  %495 = vmatprep.subr.mxu0 0.0
  %496 = vmatpush1.xpose.msra.mxu0 0.0
  %497 = vmatprep.subr.mxu0 0.0
  %498 = vmatpush1.xpose.msra.mxu0 0.0
  %499 = vmatprep.subr.mxu0 0.0
  %500 = vmatpush1.xpose.msra.mxu0 0.0
  %501 = vmatprep.subr.mxu0 0.0
  %502 = vmatpush1.xpose.msra.mxu0 0.0
  %503 = vmatprep.subr.mxu0 0.0
  %504 = vmatpush1.xpose.msra.mxu0 0.0
  %505 = vmatprep.subr.mxu0 0.0
  %506 = vmatpush1.xpose.msra.mxu0 0.0
  %507 = vmatprep.subr.mxu0 0.0
  %508 = vmatpush1.xpose.msra.mxu0 0.0
  %509 = vmatprep.subr.mxu0 0.0
  %510 = vmatpush1.xpose.msra.mxu0 0.0
  %511 = vmatprep.subr.mxu0 0.0
  %512 = vmatpush1.xpose.msra.mxu0 0.0
  %513 = vmatprep.subr.mxu0 0.0
  %514 = vmatpush1.xpose.msra.mxu0 0.0
  %515 = vmatprep.subr.mxu0 0.0
  %516 = vmatpush1.xpose.msra.mxu0 0.0
  %517 = vmatprep.subr.mxu0 0.0
  %518 = vmatpush1.xpose.msra.mxu0 0.0
  %519 = vmatprep.subr.mxu0 0.0
  %520 = vmatpush1.xpose.msra.mxu0 0.0
  %521 = vmatprep.subr.mxu0 0.0
  %522 = vmatpush1.xpose.msra.mxu0 0.0
  %523 = vmatprep.subr.mxu0 0.0
  %524 = vmatpush1.xpose.msra.mxu0 0.0
  %525 = vmatprep.subr.mxu0 0.0
  %526 = vmatpush1.xpose.msra.mxu0 0.0
  %527 = vmatprep.subr.mxu0 0.0
  %528 = vmatpush1.xpose.msra.mxu0 0.0
  %529 = vmatprep.subr.mxu0 0.0
  %530 = vmatpush1.xpose.msra.mxu0 0.0
  %531 = vmatprep.subr.mxu0 0.0
  %532 = vmatpush1.xpose.msra.mxu0 0.0
  %533 = vmatprep.subr.mxu0 0.0
  %534 = vmatpush1.xpose.msra.mxu0 0.0
  %535 = vmatprep.subr.mxu0 0.0
  %536 = vmatpush1.xpose.msra.mxu0 0.0
  %537 = vmatprep.subr.mxu0 0.0
  %538 = vmatpush1.xpose.msra.mxu0 0.0
  %539 = vmatprep.mubr.f32.mxu0 0.0
  %540 = vmatmul.mubr.f32.gmra.mrb[0].mxu0 %v471
  %v541 = vpop.f32.mrb[0].mxu0
  %v542 = vadd.f32 %v309, %v541
  %v543 = vpop.f32.mrb[0].mxu0
  %544 = vdwg.mxu0
  %545 = vrot.lane.b32.xlu0 %v295, 96
  %v546 = vpop.permute.xlu0 %545
  %v547 = vsel %vm318, %v281, 0
  %v549 = vsel %vm318, %v546, 0
  %551 = vmatprep.subr.mxu0 0.0
  %552 = vmatpush1.xpose.msra.mxu0 %v549
  %553 = vmatprep.subr.mxu0 0.0
  %554 = vmatpush1.xpose.msra.mxu0 0.0
  %555 = vmatprep.subr.mxu0 0.0
  %556 = vmatpush1.xpose.msra.mxu0 0.0
  %557 = vmatprep.subr.mxu0 0.0
  %558 = vmatpush1.xpose.msra.mxu0 0.0
  %559 = vmatprep.subr.mxu0 0.0
  %560 = vmatpush1.xpose.msra.mxu0 0.0
  %561 = vmatprep.subr.mxu0 0.0
  %562 = vmatpush1.xpose.msra.mxu0 0.0
  %563 = vmatprep.subr.mxu0 0.0
  %564 = vmatpush1.xpose.msra.mxu0 0.0
  %565 = vmatprep.subr.mxu0 0.0
  %566 = vmatpush1.xpose.msra.mxu0 0.0
  %567 = vmatprep.subr.mxu0 0.0
  %568 = vmatpush1.xpose.msra.mxu0 0.0
  %569 = vmatprep.subr.mxu0 0.0
  %570 = vmatpush1.xpose.msra.mxu0 0.0
  %571 = vmatprep.subr.mxu0 0.0
  %572 = vmatpush1.xpose.msra.mxu0 0.0
  %573 = vmatprep.subr.mxu0 0.0
  %574 = vmatpush1.xpose.msra.mxu0 0.0
  %575 = vmatprep.subr.mxu0 0.0
  %576 = vmatpush1.xpose.msra.mxu0 0.0
  %577 = vmatprep.subr.mxu0 0.0
  %578 = vmatpush1.xpose.msra.mxu0 0.0
  %579 = vmatprep.subr.mxu0 0.0
  %580 = vmatpush1.xpose.msra.mxu0 0.0
  %581 = vmatprep.subr.mxu0 0.0
  %582 = vmatpush1.xpose.msra.mxu0 0.0
  %583 = vmatprep.subr.mxu0 0.0
  %584 = vmatpush1.xpose.msra.mxu0 0.0
  %585 = vmatprep.subr.mxu0 0.0
  %586 = vmatpush1.xpose.msra.mxu0 0.0
  %587 = vmatprep.subr.mxu0 0.0
  %588 = vmatpush1.xpose.msra.mxu0 0.0
  %589 = vmatprep.subr.mxu0 0.0
  %590 = vmatpush1.xpose.msra.mxu0 0.0
  %591 = vmatprep.subr.mxu0 0.0
  %592 = vmatpush1.xpose.msra.mxu0 0.0
  %593 = vmatprep.subr.mxu0 0.0
  %594 = vmatpush1.xpose.msra.mxu0 0.0
  %595 = vmatprep.subr.mxu0 0.0
  %596 = vmatpush1.xpose.msra.mxu0 0.0
  %597 = vmatprep.subr.mxu0 0.0
  %598 = vmatpush1.xpose.msra.mxu0 0.0
  %599 = vmatprep.subr.mxu0 0.0
  %600 = vmatpush1.xpose.msra.mxu0 0.0
  %601 = vmatprep.subr.mxu0 0.0
  %602 = vmatpush1.xpose.msra.mxu0 0.0
  %603 = vmatprep.subr.mxu0 0.0
  %604 = vmatpush1.xpose.msra.mxu0 0.0
  %605 = vmatprep.subr.mxu0 0.0
  %606 = vmatpush1.xpose.msra.mxu0 0.0
  %607 = vmatprep.subr.mxu0 0.0
  %608 = vmatpush1.xpose.msra.mxu0 0.0
  %609 = vmatprep.subr.mxu0 0.0
  %610 = vmatpush1.xpose.msra.mxu0 0.0
  %611 = vmatprep.subr.mxu0 0.0
  %612 = vmatpush1.xpose.msra.mxu0 0.0
  %613 = vmatprep.subr.mxu0 0.0
  %614 = vmatpush1.xpose.msra.mxu0 0.0
  %615 = vmatprep.mubr.f32.mxu0 0.0
  %616 = vmatmul.mubr.f32.gmra.mrb[0].mxu0 %v547
  %v617 = vpop.f32.mrb[0].mxu0
  %v618 = vadd.f32 %v313, %v617
  %v619 = vpop.f32.mrb[0].mxu0
  %620 = vdwg.mxu0
  %621 = vrot.lane.b32.xlu0 %v297, 96
  %v622 = vpop.permute.xlu0 %621
  %v623 = vsel %vm318, %v283, 0
  %v625 = vsel %vm318, %v622, 0
  %627 = vmatprep.subr.mxu0 0.0
  %628 = vmatpush1.xpose.msra.mxu0 %v625
  %629 = vmatprep.subr.mxu0 0.0
  %630 = vmatpush1.xpose.msra.mxu0 0.0
  %631 = vmatprep.subr.mxu0 0.0
  %632 = vmatpush1.xpose.msra.mxu0 0.0
  %633 = vmatprep.subr.mxu0 0.0
  %634 = vmatpush1.xpose.msra.mxu0 0.0
  %635 = vmatprep.subr.mxu0 0.0
  %636 = vmatpush1.xpose.msra.mxu0 0.0
  %637 = vmatprep.subr.mxu0 0.0
  %638 = vmatpush1.xpose.msra.mxu0 0.0
  %639 = vmatprep.subr.mxu0 0.0
  %640 = vmatpush1.xpose.msra.mxu0 0.0
  %641 = vmatprep.subr.mxu0 0.0
  %642 = vmatpush1.xpose.msra.mxu0 0.0
  %643 = vmatprep.subr.mxu0 0.0
  %644 = vmatpush1.xpose.msra.mxu0 0.0
  %645 = vmatprep.subr.mxu0 0.0
  %646 = vmatpush1.xpose.msra.mxu0 0.0
  %647 = vmatprep.subr.mxu0 0.0
  %648 = vmatpush1.xpose.msra.mxu0 0.0
  %649 = vmatprep.subr.mxu0 0.0
  %650 = vmatpush1.xpose.msra.mxu0 0.0
  %651 = vmatprep.subr.mxu0 0.0
  %652 = vmatpush1.xpose.msra.mxu0 0.0
  %653 = vmatprep.subr.mxu0 0.0
  %654 = vmatpush1.xpose.msra.mxu0 0.0
  %655 = vmatprep.subr.mxu0 0.0
  %656 = vmatpush1.xpose.msra.mxu0 0.0
  %657 = vmatprep.subr.mxu0 0.0
  %658 = vmatpush1.xpose.msra.mxu0 0.0
  %659 = vmatprep.subr.mxu0 0.0
  %660 = vmatpush1.xpose.msra.mxu0 0.0
  %661 = vmatprep.subr.mxu0 0.0
  %662 = vmatpush1.xpose.msra.mxu0 0.0
  %663 = vmatprep.subr.mxu0 0.0
  %664 = vmatpush1.xpose.msra.mxu0 0.0
  %665 = vmatprep.subr.mxu0 0.0
  %666 = vmatpush1.xpose.msra.mxu0 0.0
  %667 = vmatprep.subr.mxu0 0.0
  %668 = vmatpush1.xpose.msra.mxu0 0.0
  %669 = vmatprep.subr.mxu0 0.0
  %670 = vmatpush1.xpose.msra.mxu0 0.0
  %671 = vmatprep.subr.mxu0 0.0
  %672 = vmatpush1.xpose.msra.mxu0 0.0
  %673 = vmatprep.subr.mxu0 0.0
  %674 = vmatpush1.xpose.msra.mxu0 0.0
  %675 = vmatprep.subr.mxu0 0.0
  %676 = vmatpush1.xpose.msra.mxu0 0.0
  %677 = vmatprep.subr.mxu0 0.0
  %678 = vmatpush1.xpose.msra.mxu0 0.0
  %679 = vmatprep.subr.mxu0 0.0
  %680 = vmatpush1.xpose.msra.mxu0 0.0
  %681 = vmatprep.subr.mxu0 0.0
  %682 = vmatpush1.xpose.msra.mxu0 0.0
  %683 = vmatprep.subr.mxu0 0.0
  %684 = vmatpush1.xpose.msra.mxu0 0.0
  %685 = vmatprep.subr.mxu0 0.0
  %686 = vmatpush1.xpose.msra.mxu0 0.0
  %687 = vmatprep.subr.mxu0 0.0
  %688 = vmatpush1.xpose.msra.mxu0 0.0
  %689 = vmatprep.subr.mxu0 0.0
  %690 = vmatpush1.xpose.msra.mxu0 0.0
  %691 = vmatprep.mubr.f32.mxu0 0.0
  %692 = vmatmul.mubr.f32.gmra.mrb[0].mxu0 %v623
  %v693 = vpop.f32.mrb[0].mxu0
  %v694 = vadd.f32 %v309, %v693
  %v695 = vpop.f32.mrb[0].mxu0
  %696 = vdwg.mxu0
  %697 = vrot.lane.b32.xlu0 %v299, 96
  %v698 = vpop.permute.xlu0 %697
  %v699 = vsel %vm318, %v285, 0
  %v701 = vsel %vm318, %v698, 0
  %703 = vmatprep.subr.mxu0 0.0
  %704 = vmatpush1.xpose.msra.mxu0 %v701
  %705 = vmatprep.subr.mxu0 0.0
  %706 = vmatpush1.xpose.msra.mxu0 0.0
  %707 = vmatprep.subr.mxu0 0.0
  %708 = vmatpush1.xpose.msra.mxu0 0.0
  %709 = vmatprep.subr.mxu0 0.0
  %710 = vmatpush1.xpose.msra.mxu0 0.0
  %711 = vmatprep.subr.mxu0 0.0
  %712 = vmatpush1.xpose.msra.mxu0 0.0
  %713 = vmatprep.subr.mxu0 0.0
  %714 = vmatpush1.xpose.msra.mxu0 0.0
  %715 = vmatprep.subr.mxu0 0.0
  %716 = vmatpush1.xpose.msra.mxu0 0.0
  %717 = vmatprep.subr.mxu0 0.0
  %718 = vmatpush1.xpose.msra.mxu0 0.0
  %719 = vmatprep.subr.mxu0 0.0
  %720 = vmatpush1.xpose.msra.mxu0 0.0
  %721 = vmatprep.subr.mxu0 0.0
  %722 = vmatpush1.xpose.msra.mxu0 0.0
  %723 = vmatprep.subr.mxu0 0.0
  %724 = vmatpush1.xpose.msra.mxu0 0.0
  %725 = vmatprep.subr.mxu0 0.0
  %726 = vmatpush1.xpose.msra.mxu0 0.0
  %727 = vmatprep.subr.mxu0 0.0
  %728 = vmatpush1.xpose.msra.mxu0 0.0
  %729 = vmatprep.subr.mxu0 0.0
  %730 = vmatpush1.xpose.msra.mxu0 0.0
  %731 = vmatprep.subr.mxu0 0.0
  %732 = vmatpush1.xpose.msra.mxu0 0.0
  %733 = vmatprep.subr.mxu0 0.0
  %734 = vmatpush1.xpose.msra.mxu0 0.0
  %735 = vmatprep.subr.mxu0 0.0
  %736 = vmatpush1.xpose.msra.mxu0 0.0
  %737 = vmatprep.subr.mxu0 0.0
  %738 = vmatpush1.xpose.msra.mxu0 0.0
  %739 = vmatprep.subr.mxu0 0.0
  %740 = vmatpush1.xpose.msra.mxu0 0.0
  %741 = vmatprep.subr.mxu0 0.0
  %742 = vmatpush1.xpose.msra.mxu0 0.0
  %743 = vmatprep.subr.mxu0 0.0
  %744 = vmatpush1.xpose.msra.mxu0 0.0
  %745 = vmatprep.subr.mxu0 0.0
  %746 = vmatpush1.xpose.msra.mxu0 0.0
  %747 = vmatprep.subr.mxu0 0.0
  %748 = vmatpush1.xpose.msra.mxu0 0.0
  %749 = vmatprep.subr.mxu0 0.0
  %750 = vmatpush1.xpose.msra.mxu0 0.0
  %751 = vmatprep.subr.mxu0 0.0
  %752 = vmatpush1.xpose.msra.mxu0 0.0
  %753 = vmatprep.subr.mxu0 0.0
  %754 = vmatpush1.xpose.msra.mxu0 0.0
  %755 = vmatprep.subr.mxu0 0.0
  %756 = vmatpush1.xpose.msra.mxu0 0.0
  %757 = vmatprep.subr.mxu0 0.0
  %758 = vmatpush1.xpose.msra.mxu0 0.0
  %759 = vmatprep.subr.mxu0 0.0
  %760 = vmatpush1.xpose.msra.mxu0 0.0
  %761 = vmatprep.subr.mxu0 0.0
  %762 = vmatpush1.xpose.msra.mxu0 0.0
  %763 = vmatprep.subr.mxu0 0.0
  %764 = vmatpush1.xpose.msra.mxu0 0.0
  %765 = vmatprep.subr.mxu0 0.0
  %766 = vmatpush1.xpose.msra.mxu0 0.0
  %767 = vmatprep.mubr.f32.mxu0 0.0
  %768 = vmatmul.mubr.f32.gmra.mrb[0].mxu0 %v699
  %v769 = vpop.f32.mrb[0].mxu0
  %v770 = vadd.f32 %v313, %v769
  %v771 = vpop.f32.mrb[0].mxu0
  %772 = vdwg.mxu0
  %773 = vrot.lane.b32.xlu0 %v301, 96
  %v774 = vpop.permute.xlu0 %773
  %v775 = vsel %vm318, %v287, 0
  %v777 = vsel %vm318, %v774, 0
  %779 = vmatprep.subr.mxu0 0.0
  %780 = vmatpush1.xpose.msra.mxu0 %v777
  %781 = vmatprep.subr.mxu0 0.0
  %782 = vmatpush1.xpose.msra.mxu0 0.0
  %783 = vmatprep.subr.mxu0 0.0
  %784 = vmatpush1.xpose.msra.mxu0 0.0
  %785 = vmatprep.subr.mxu0 0.0
  %786 = vmatpush1.xpose.msra.mxu0 0.0
  %787 = vmatprep.subr.mxu0 0.0
  %788 = vmatpush1.xpose.msra.mxu0 0.0
  %789 = vmatprep.subr.mxu0 0.0
  %790 = vmatpush1.xpose.msra.mxu0 0.0
  %791 = vmatprep.subr.mxu0 0.0
  %792 = vmatpush1.xpose.msra.mxu0 0.0
  %793 = vmatprep.subr.mxu0 0.0
  %794 = vmatpush1.xpose.msra.mxu0 0.0
  %795 = vmatprep.subr.mxu0 0.0
  %796 = vmatpush1.xpose.msra.mxu0 0.0
  %797 = vmatprep.subr.mxu0 0.0
  %798 = vmatpush1.xpose.msra.mxu0 0.0
  %799 = vmatprep.subr.mxu0 0.0
  %800 = vmatpush1.xpose.msra.mxu0 0.0
  %801 = vmatprep.subr.mxu0 0.0
  %802 = vmatpush1.xpose.msra.mxu0 0.0
  %803 = vmatprep.subr.mxu0 0.0
  %804 = vmatpush1.xpose.msra.mxu0 0.0
  %805 = vmatprep.subr.mxu0 0.0
  %806 = vmatpush1.xpose.msra.mxu0 0.0
  %807 = vmatprep.subr.mxu0 0.0
  %808 = vmatpush1.xpose.msra.mxu0 0.0
  %809 = vmatprep.subr.mxu0 0.0
  %810 = vmatpush1.xpose.msra.mxu0 0.0
  %811 = vmatprep.subr.mxu0 0.0
  %812 = vmatpush1.xpose.msra.mxu0 0.0
  %813 = vmatprep.subr.mxu0 0.0
  %814 = vmatpush1.xpose.msra.mxu0 0.0
  %815 = vmatprep.subr.mxu0 0.0
  %816 = vmatpush1.xpose.msra.mxu0 0.0
  %817 = vmatprep.subr.mxu0 0.0
  %818 = vmatpush1.xpose.msra.mxu0 0.0
  %819 = vmatprep.subr.mxu0 0.0
  %820 = vmatpush1.xpose.msra.mxu0 0.0
  %821 = vmatprep.subr.mxu0 0.0
  %822 = vmatpush1.xpose.msra.mxu0 0.0
  %823 = vmatprep.subr.mxu0 0.0
  %824 = vmatpush1.xpose.msra.mxu0 0.0
  %825 = vmatprep.subr.mxu0 0.0
  %826 = vmatpush1.xpose.msra.mxu0 0.0
  %827 = vmatprep.subr.mxu0 0.0
  %828 = vmatpush1.xpose.msra.mxu0 0.0
  %829 = vmatprep.subr.mxu0 0.0
  %830 = vmatpush1.xpose.msra.mxu0 0.0
  %831 = vmatprep.subr.mxu0 0.0
  %832 = vmatpush1.xpose.msra.mxu0 0.0
  %833 = vmatprep.subr.mxu0 0.0
  %834 = vmatpush1.xpose.msra.mxu0 0.0
  %835 = vmatprep.subr.mxu0 0.0
  %836 = vmatpush1.xpose.msra.mxu0 0.0
  %837 = vmatprep.subr.mxu0 0.0
  %838 = vmatpush1.xpose.msra.mxu0 0.0
  %839 = vmatprep.subr.mxu0 0.0
  %840 = vmatpush1.xpose.msra.mxu0 0.0
  %841 = vmatprep.subr.mxu0 0.0
  %842 = vmatpush1.xpose.msra.mxu0 0.0
  %843 = vmatprep.mubr.f32.mxu0 0.0
  %844 = vmatmul.mubr.f32.gmra.mrb[0].mxu0 %v775
  %v845 = vpop.f32.mrb[0].mxu0
  %v846 = vadd.f32 %v309, %v845
  %v847 = vpop.f32.mrb[0].mxu0
  %848 = vdwg.mxu0
  %849 = vrot.lane.b32.xlu0 %v303, 96
  %v850 = vpop.permute.xlu0 %849
  %v851 = vsel %vm318, %v289, 0
  %v853 = vsel %vm318, %v850, 0
  %855 = vmatprep.subr.mxu0 0.0
  %856 = vmatpush1.xpose.msra.mxu0 %v853
  %857 = vmatprep.subr.mxu0 0.0
  %858 = vmatpush1.xpose.msra.mxu0 0.0
  %859 = vmatprep.subr.mxu0 0.0
  %860 = vmatpush1.xpose.msra.mxu0 0.0
  %861 = vmatprep.subr.mxu0 0.0
  %862 = vmatpush1.xpose.msra.mxu0 0.0
  %863 = vmatprep.subr.mxu0 0.0
  %864 = vmatpush1.xpose.msra.mxu0 0.0
  %865 = vmatprep.subr.mxu0 0.0
  %866 = vmatpush1.xpose.msra.mxu0 0.0
  %867 = vmatprep.subr.mxu0 0.0
  %868 = vmatpush1.xpose.msra.mxu0 0.0
  %869 = vmatprep.subr.mxu0 0.0
  %870 = vmatpush1.xpose.msra.mxu0 0.0
  %871 = vmatprep.subr.mxu0 0.0
  %872 = vmatpush1.xpose.msra.mxu0 0.0
  %873 = vmatprep.subr.mxu0 0.0
  %874 = vmatpush1.xpose.msra.mxu0 0.0
  %875 = vmatprep.subr.mxu0 0.0
  %876 = vmatpush1.xpose.msra.mxu0 0.0
  %877 = vmatprep.subr.mxu0 0.0
  %878 = vmatpush1.xpose.msra.mxu0 0.0
  %879 = vmatprep.subr.mxu0 0.0
  %880 = vmatpush1.xpose.msra.mxu0 0.0
  %881 = vmatprep.subr.mxu0 0.0
  %882 = vmatpush1.xpose.msra.mxu0 0.0
  %883 = vmatprep.subr.mxu0 0.0
  %884 = vmatpush1.xpose.msra.mxu0 0.0
  %885 = vmatprep.subr.mxu0 0.0
  %886 = vmatpush1.xpose.msra.mxu0 0.0
  %887 = vmatprep.subr.mxu0 0.0
  %888 = vmatpush1.xpose.msra.mxu0 0.0
  %889 = vmatprep.subr.mxu0 0.0
  %890 = vmatpush1.xpose.msra.mxu0 0.0
  %891 = vmatprep.subr.mxu0 0.0
  %892 = vmatpush1.xpose.msra.mxu0 0.0
  %893 = vmatprep.subr.mxu0 0.0
  %894 = vmatpush1.xpose.msra.mxu0 0.0
  %895 = vmatprep.subr.mxu0 0.0
  %896 = vmatpush1.xpose.msra.mxu0 0.0
  %897 = vmatprep.subr.mxu0 0.0
  %898 = vmatpush1.xpose.msra.mxu0 0.0
  %899 = vmatprep.subr.mxu0 0.0
  %900 = vmatpush1.xpose.msra.mxu0 0.0
  %901 = vmatprep.subr.mxu0 0.0
  %902 = vmatpush1.xpose.msra.mxu0 0.0
  %903 = vmatprep.subr.mxu0 0.0
  %904 = vmatpush1.xpose.msra.mxu0 0.0
  %905 = vmatprep.subr.mxu0 0.0
  %906 = vmatpush1.xpose.msra.mxu0 0.0
  %907 = vmatprep.subr.mxu0 0.0
  %908 = vmatpush1.xpose.msra.mxu0 0.0
  %909 = vmatprep.subr.mxu0 0.0
  %910 = vmatpush1.xpose.msra.mxu0 0.0
  %911 = vmatprep.subr.mxu0 0.0
  %912 = vmatpush1.xpose.msra.mxu0 0.0
  %913 = vmatprep.subr.mxu0 0.0
  %914 = vmatpush1.xpose.msra.mxu0 0.0
  %915 = vmatprep.subr.mxu0 0.0
  %916 = vmatpush1.xpose.msra.mxu0 0.0
  %917 = vmatprep.subr.mxu0 0.0
  %918 = vmatpush1.xpose.msra.mxu0 0.0
  %919 = vmatprep.mubr.f32.mxu0 0.0
  %920 = vmatmul.mubr.f32.gmra.mrb[0].mxu0 %v851
  %v921 = vpop.f32.mrb[0].mxu0
  %v922 = vadd.f32 %v313, %v921
  %v923 = vpop.f32.mrb[0].mxu0
  %924 = vdwg.mxu0
  %v925 = vsel %vm318, %v390, -inf
  %926 = vmax.xlane.f32.xlu0 %v925
  %v927 = vpop.xlane.xlu0 %926
  %v928 = vsel %vm318, %v466, -inf
  %929 = vmax.xlane.f32.xlu0 %v928
  %v930 = vpop.xlane.xlu0 %929
  %v931 = vsel %vm318, %v542, -inf
  %932 = vmax.xlane.f32.xlu0 %v931
  %v933 = vpop.xlane.xlu0 %932
  %v934 = vsel %vm318, %v618, -inf
  %935 = vmax.xlane.f32.xlu0 %v934
  %v936 = vpop.xlane.xlu0 %935
  %v937 = vsel %vm318, %v694, -inf
  %938 = vmax.xlane.f32.xlu0 %v937
  %v939 = vpop.xlane.xlu0 %938
  %v940 = vsel %vm318, %v770, -inf
  %941 = vmax.xlane.f32.xlu0 %v940
  %v942 = vpop.xlane.xlu0 %941
  %v943 = vsel %vm318, %v846, -inf
  %944 = vmax.xlane.f32.xlu0 %v943
  %v945 = vpop.xlane.xlu0 %944
  %v946 = vsel %vm318, %v922, -inf
  %947 = vmax.xlane.f32.xlu0 %v946
  %v948 = vpop.xlane.xlu0 %947
  %v949 = vsub.f32 %v390, %v927
  %v950 = vsub.f32 %v466, %v930
  %v951 = vsub.f32 %v542, %v933
  %v952 = vsub.f32 %v618, %v936
  %v953 = vsub.f32 %v694, %v939
  %v954 = vsub.f32 %v770, %v942
  %v955 = vsub.f32 %v846, %v945
  %v956 = vsub.f32 %v922, %v948
  %v957 = vmul.f32 %v949, 1.442695
  %v958 = vpow.pop %v957
  %v959 = vmul.f32 %v950, 1.442695
  %v960 = vpow.pop %v959
  %v961 = vmul.f32 %v951, 1.442695
  %v962 = vpow.pop %v961
  %v963 = vmul.f32 %v952, 1.442695
  %v964 = vpow.pop %v963
  %v965 = vmul.f32 %v953, 1.442695
  %v966 = vpow.pop %v965
  %v967 = vmul.f32 %v954, 1.442695
  %v968 = vpow.pop %v967
  %v969 = vmul.f32 %v955, 1.442695
  %v970 = vpow.pop %v969
  %v971 = vmul.f32 %v956, 1.442695
  %v972 = vpow.pop %v971
  %v973 = vsel %vm318, %v958, 0.0
  %974 = vadd.xlane.f32.xlu0 %v973
  %v975 = vpop.xlane.xlu0 %974
  %v976 = vsel %vm318, %v960, 0.0
  %977 = vadd.xlane.f32.xlu0 %v976
  %v978 = vpop.xlane.xlu0 %977
  %v979 = vsel %vm318, %v962, 0.0
  %980 = vadd.xlane.f32.xlu0 %v979
  %v981 = vpop.xlane.xlu0 %980
  %v982 = vsel %vm318, %v964, 0.0
  %983 = vadd.xlane.f32.xlu0 %v982
  %v984 = vpop.xlane.xlu0 %983
  %v985 = vsel %vm318, %v966, 0.0
  %986 = vadd.xlane.f32.xlu0 %v985
  %v987 = vpop.xlane.xlu0 %986
  %v988 = vsel %vm318, %v968, 0.0
  %989 = vadd.xlane.f32.xlu0 %v988
  %v990 = vpop.xlane.xlu0 %989
  %v991 = vsel %vm318, %v970, 0.0
  %992 = vadd.xlane.f32.xlu0 %v991
  %v993 = vpop.xlane.xlu0 %992
  %v994 = vsel %vm318, %v972, 0.0
  %995 = vadd.xlane.f32.xlu0 %v994
  %v996 = vpop.xlane.xlu0 %995
  %v997 = vrcp.pop %v975
  %v998 = vrcp.pop %v978
  %v999 = vrcp.pop %v981
  %v1000 = vrcp.pop %v984
  %v1001 = vrcp.pop %v987
  %v1002 = vrcp.pop %v990
  %v1003 = vrcp.pop %v993
  %v1004 = vrcp.pop %v996
  %v1005 = vmul.f32 %v958, %v997
  %v1006 = vmul.f32 %v960, %v998
  %v1007 = vmul.f32 %v962, %v999
  %v1008 = vmul.f32 %v964, %v1000
  %v1009 = vmul.f32 %v966, %v1001
  %v1010 = vmul.f32 %v968, %v1002
  %v1011 = vmul.f32 %v970, %v1003
  %v1012 = vmul.f32 %v972, %v1004
  %1013 = vrot.lane.b32.xlu0 %v266, 64
  %v1014 = vpop.permute.xlu0 %1013
  %v1017 = vsel %vm318, %v1005, 0
  %1019 = vmatprep.subr.mxu0 0.0
  %1020 = vmatpush1.msra.mxu0 %v1014
  %1021 = vmatprep.subr.mxu0 0.0
  %1022 = vmatpush1.msra.mxu0 0.0
  %1023 = vmatprep.subr.mxu0 0.0
  %1024 = vmatpush1.msra.mxu0 0.0
  %1025 = vmatprep.subr.mxu0 0.0
  %1026 = vmatpush1.msra.mxu0 0.0
  %1027 = vmatprep.subr.mxu0 0.0
  %1028 = vmatpush1.msra.mxu0 0.0
  %1029 = vmatprep.subr.mxu0 0.0
  %1030 = vmatpush1.msra.mxu0 0.0
  %1031 = vmatprep.subr.mxu0 0.0
  %1032 = vmatpush1.msra.mxu0 0.0
  %1033 = vmatprep.subr.mxu0 0.0
  %1034 = vmatpush1.msra.mxu0 0.0
  %1035 = vmatprep.subr.mxu0 0.0
  %1036 = vmatpush1.msra.mxu0 0.0
  %1037 = vmatprep.subr.mxu0 0.0
  %1038 = vmatpush1.msra.mxu0 0.0
  %1039 = vmatprep.subr.mxu0 0.0
  %1040 = vmatpush1.msra.mxu0 0.0
  %1041 = vmatprep.subr.mxu0 0.0
  %1042 = vmatpush1.msra.mxu0 0.0
  %1043 = vmatprep.subr.mxu0 0.0
  %1044 = vmatpush1.msra.mxu0 0.0
  %1045 = vmatprep.subr.mxu0 0.0
  %1046 = vmatpush1.msra.mxu0 0.0
  %1047 = vmatprep.subr.mxu0 0.0
  %1048 = vmatpush1.msra.mxu0 0.0
  %1049 = vmatprep.subr.mxu0 0.0
  %1050 = vmatpush1.msra.mxu0 0.0
  %1051 = vmatprep.subr.mxu0 0.0
  %1052 = vmatpush1.msra.mxu0 0.0
  %1053 = vmatprep.subr.mxu0 0.0
  %1054 = vmatpush1.msra.mxu0 0.0
  %1055 = vmatprep.subr.mxu0 0.0
  %1056 = vmatpush1.msra.mxu0 0.0
  %1057 = vmatprep.subr.mxu0 0.0
  %1058 = vmatpush1.msra.mxu0 0.0
  %1059 = vmatprep.subr.mxu0 0.0
  %1060 = vmatpush1.msra.mxu0 0.0
  %1061 = vmatprep.subr.mxu0 0.0
  %1062 = vmatpush1.msra.mxu0 0.0
  %1063 = vmatprep.subr.mxu0 0.0
  %1064 = vmatpush1.msra.mxu0 0.0
  %1065 = vmatprep.subr.mxu0 0.0
  %1066 = vmatpush1.msra.mxu0 0.0
  %1067 = vmatprep.subr.mxu0 0.0
  %1068 = vmatpush1.msra.mxu0 0.0
  %1069 = vmatprep.subr.mxu0 0.0
  %1070 = vmatpush1.msra.mxu0 0.0
  %1071 = vmatprep.subr.mxu0 0.0
  %1072 = vmatpush1.msra.mxu0 0.0
  %1073 = vmatprep.subr.mxu0 0.0
  %1074 = vmatpush1.msra.mxu0 0.0
  %1075 = vmatprep.subr.mxu0 0.0
  %1076 = vmatpush1.msra.mxu0 0.0
  %1077 = vmatprep.subr.mxu0 0.0
  %1078 = vmatpush1.msra.mxu0 0.0
  %1079 = vmatprep.subr.mxu0 0.0
  %1080 = vmatpush1.msra.mxu0 0.0
  %1081 = vmatprep.subr.mxu0 0.0
  %1082 = vmatpush1.msra.mxu0 0.0
  %1083 = vmatprep.mubr.f32.mxu0 0.0
  %1084 = vmatmul.mubr.f32.gmra.mrb[0].mxu0 %v1017
  %v1085 = vpop.f32.mrb[0].mxu0
  %v1086 = vadd.f32 0.0, %v1085
  %v1087 = vpop.f32.mrb[0].mxu0
  %1088 = vdwg.mxu0
  %1089 = vrot.lane.b32.xlu0 %v271, 64
  %v1090 = vpop.permute.xlu0 %1089
  %v1093 = vsel %vm318, %v1006, 0
  %1095 = vmatprep.subr.mxu0 0.0
  %1096 = vmatpush1.msra.mxu0 %v1090
  %1097 = vmatprep.subr.mxu0 0.0
  %1098 = vmatpush1.msra.mxu0 0.0
  %1099 = vmatprep.subr.mxu0 0.0
  %1100 = vmatpush1.msra.mxu0 0.0
  %1101 = vmatprep.subr.mxu0 0.0
  %1102 = vmatpush1.msra.mxu0 0.0
  %1103 = vmatprep.subr.mxu0 0.0
  %1104 = vmatpush1.msra.mxu0 0.0
  %1105 = vmatprep.subr.mxu0 0.0
  %1106 = vmatpush1.msra.mxu0 0.0
  %1107 = vmatprep.subr.mxu0 0.0
  %1108 = vmatpush1.msra.mxu0 0.0
  %1109 = vmatprep.subr.mxu0 0.0
  %1110 = vmatpush1.msra.mxu0 0.0
  %1111 = vmatprep.subr.mxu0 0.0
  %1112 = vmatpush1.msra.mxu0 0.0
  %1113 = vmatprep.subr.mxu0 0.0
  %1114 = vmatpush1.msra.mxu0 0.0
  %1115 = vmatprep.subr.mxu0 0.0
  %1116 = vmatpush1.msra.mxu0 0.0
  %1117 = vmatprep.subr.mxu0 0.0
  %1118 = vmatpush1.msra.mxu0 0.0
  %1119 = vmatprep.subr.mxu0 0.0
  %1120 = vmatpush1.msra.mxu0 0.0
  %1121 = vmatprep.subr.mxu0 0.0
  %1122 = vmatpush1.msra.mxu0 0.0
  %1123 = vmatprep.subr.mxu0 0.0
  %1124 = vmatpush1.msra.mxu0 0.0
  %1125 = vmatprep.subr.mxu0 0.0
  %1126 = vmatpush1.msra.mxu0 0.0
  %1127 = vmatprep.subr.mxu0 0.0
  %1128 = vmatpush1.msra.mxu0 0.0
  %1129 = vmatprep.subr.mxu0 0.0
  %1130 = vmatpush1.msra.mxu0 0.0
  %1131 = vmatprep.subr.mxu0 0.0
  %1132 = vmatpush1.msra.mxu0 0.0
  %1133 = vmatprep.subr.mxu0 0.0
  %1134 = vmatpush1.msra.mxu0 0.0
  %1135 = vmatprep.subr.mxu0 0.0
  %1136 = vmatpush1.msra.mxu0 0.0
  %1137 = vmatprep.subr.mxu0 0.0
  %1138 = vmatpush1.msra.mxu0 0.0
  %1139 = vmatprep.subr.mxu0 0.0
  %1140 = vmatpush1.msra.mxu0 0.0
  %1141 = vmatprep.subr.mxu0 0.0
  %1142 = vmatpush1.msra.mxu0 0.0
  %1143 = vmatprep.subr.mxu0 0.0
  %1144 = vmatpush1.msra.mxu0 0.0
  %1145 = vmatprep.subr.mxu0 0.0
  %1146 = vmatpush1.msra.mxu0 0.0
  %1147 = vmatprep.subr.mxu0 0.0
  %1148 = vmatpush1.msra.mxu0 0.0
  %1149 = vmatprep.subr.mxu0 0.0
  %1150 = vmatpush1.msra.mxu0 0.0
  %1151 = vmatprep.subr.mxu0 0.0
  %1152 = vmatpush1.msra.mxu0 0.0
  %1153 = vmatprep.subr.mxu0 0.0
  %1154 = vmatpush1.msra.mxu0 0.0
  %1155 = vmatprep.subr.mxu0 0.0
  %1156 = vmatpush1.msra.mxu0 0.0
  %1157 = vmatprep.subr.mxu0 0.0
  %1158 = vmatpush1.msra.mxu0 0.0
  %1159 = vmatprep.mubr.f32.mxu0 0.0
  %1160 = vmatmul.mubr.f32.gmra.mrb[0].mxu0 %v1093
  %v1161 = vpop.f32.mrb[0].mxu0
  %v1162 = vadd.f32 0.0, %v1161
  %v1163 = vpop.f32.mrb[0].mxu0
  %1164 = vdwg.mxu0
  %1165 = vrot.lane.b32.xlu0 %v293, 64
  %v1166 = vpop.permute.xlu0 %1165
  %v1169 = vsel %vm318, %v1007, 0
  %1171 = vmatprep.subr.mxu0 0.0
  %1172 = vmatpush1.msra.mxu0 %v1166
  %1173 = vmatprep.subr.mxu0 0.0
  %1174 = vmatpush1.msra.mxu0 0.0
  %1175 = vmatprep.subr.mxu0 0.0
  %1176 = vmatpush1.msra.mxu0 0.0
  %1177 = vmatprep.subr.mxu0 0.0
  %1178 = vmatpush1.msra.mxu0 0.0
  %1179 = vmatprep.subr.mxu0 0.0
  %1180 = vmatpush1.msra.mxu0 0.0
  %1181 = vmatprep.subr.mxu0 0.0
  %1182 = vmatpush1.msra.mxu0 0.0
  %1183 = vmatprep.subr.mxu0 0.0
  %1184 = vmatpush1.msra.mxu0 0.0
  %1185 = vmatprep.subr.mxu0 0.0
  %1186 = vmatpush1.msra.mxu0 0.0
  %1187 = vmatprep.subr.mxu0 0.0
  %1188 = vmatpush1.msra.mxu0 0.0
  %1189 = vmatprep.subr.mxu0 0.0
  %1190 = vmatpush1.msra.mxu0 0.0
  %1191 = vmatprep.subr.mxu0 0.0
  %1192 = vmatpush1.msra.mxu0 0.0
  %1193 = vmatprep.subr.mxu0 0.0
  %1194 = vmatpush1.msra.mxu0 0.0
  %1195 = vmatprep.subr.mxu0 0.0
  %1196 = vmatpush1.msra.mxu0 0.0
  %1197 = vmatprep.subr.mxu0 0.0
  %1198 = vmatpush1.msra.mxu0 0.0
  %1199 = vmatprep.subr.mxu0 0.0
  %1200 = vmatpush1.msra.mxu0 0.0
  %1201 = vmatprep.subr.mxu0 0.0
  %1202 = vmatpush1.msra.mxu0 0.0
  %1203 = vmatprep.subr.mxu0 0.0
  %1204 = vmatpush1.msra.mxu0 0.0
  %1205 = vmatprep.subr.mxu0 0.0
  %1206 = vmatpush1.msra.mxu0 0.0
  %1207 = vmatprep.subr.mxu0 0.0
  %1208 = vmatpush1.msra.mxu0 0.0
  %1209 = vmatprep.subr.mxu0 0.0
  %1210 = vmatpush1.msra.mxu0 0.0
  %1211 = vmatprep.subr.mxu0 0.0
  %1212 = vmatpush1.msra.mxu0 0.0
  %1213 = vmatprep.subr.mxu0 0.0
  %1214 = vmatpush1.msra.mxu0 0.0
  %1215 = vmatprep.subr.mxu0 0.0
  %1216 = vmatpush1.msra.mxu0 0.0
  %1217 = vmatprep.subr.mxu0 0.0
  %1218 = vmatpush1.msra.mxu0 0.0
  %1219 = vmatprep.subr.mxu0 0.0
  %1220 = vmatpush1.msra.mxu0 0.0
  %1221 = vmatprep.subr.mxu0 0.0
  %1222 = vmatpush1.msra.mxu0 0.0
  %1223 = vmatprep.subr.mxu0 0.0
  %1224 = vmatpush1.msra.mxu0 0.0
  %1225 = vmatprep.subr.mxu0 0.0
  %1226 = vmatpush1.msra.mxu0 0.0
  %1227 = vmatprep.subr.mxu0 0.0
  %1228 = vmatpush1.msra.mxu0 0.0
  %1229 = vmatprep.subr.mxu0 0.0
  %1230 = vmatpush1.msra.mxu0 0.0
  %1231 = vmatprep.subr.mxu0 0.0
  %1232 = vmatpush1.msra.mxu0 0.0
  %1233 = vmatprep.subr.mxu0 0.0
  %1234 = vmatpush1.msra.mxu0 0.0
  %1235 = vmatprep.mubr.f32.mxu0 0.0
  %1236 = vmatmul.mubr.f32.gmra.mrb[0].mxu0 %v1169
  %v1237 = vpop.f32.mrb[0].mxu0
  %v1238 = vadd.f32 0.0, %v1237
  %v1239 = vpop.f32.mrb[0].mxu0
  %1240 = vdwg.mxu0
  %1241 = vrot.lane.b32.xlu0 %v295, 64
  %v1242 = vpop.permute.xlu0 %1241
  %v1245 = vsel %vm318, %v1008, 0
  %1247 = vmatprep.subr.mxu0 0.0
  %1248 = vmatpush1.msra.mxu0 %v1242
  %1249 = vmatprep.subr.mxu0 0.0
  %1250 = vmatpush1.msra.mxu0 0.0
  %1251 = vmatprep.subr.mxu0 0.0
  %1252 = vmatpush1.msra.mxu0 0.0
  %1253 = vmatprep.subr.mxu0 0.0
  %1254 = vmatpush1.msra.mxu0 0.0
  %1255 = vmatprep.subr.mxu0 0.0
  %1256 = vmatpush1.msra.mxu0 0.0
  %1257 = vmatprep.subr.mxu0 0.0
  %1258 = vmatpush1.msra.mxu0 0.0
  %1259 = vmatprep.subr.mxu0 0.0
  %1260 = vmatpush1.msra.mxu0 0.0
  %1261 = vmatprep.subr.mxu0 0.0
  %1262 = vmatpush1.msra.mxu0 0.0
  %1263 = vmatprep.subr.mxu0 0.0
  %1264 = vmatpush1.msra.mxu0 0.0
  %1265 = vmatprep.subr.mxu0 0.0
  %1266 = vmatpush1.msra.mxu0 0.0
  %1267 = vmatprep.subr.mxu0 0.0
  %1268 = vmatpush1.msra.mxu0 0.0
  %1269 = vmatprep.subr.mxu0 0.0
  %1270 = vmatpush1.msra.mxu0 0.0
  %1271 = vmatprep.subr.mxu0 0.0
  %1272 = vmatpush1.msra.mxu0 0.0
  %1273 = vmatprep.subr.mxu0 0.0
  %1274 = vmatpush1.msra.mxu0 0.0
  %1275 = vmatprep.subr.mxu0 0.0
  %1276 = vmatpush1.msra.mxu0 0.0
  %1277 = vmatprep.subr.mxu0 0.0
  %1278 = vmatpush1.msra.mxu0 0.0
  %1279 = vmatprep.subr.mxu0 0.0
  %1280 = vmatpush1.msra.mxu0 0.0
  %1281 = vmatprep.subr.mxu0 0.0
  %1282 = vmatpush1.msra.mxu0 0.0
  %1283 = vmatprep.subr.mxu0 0.0
  %1284 = vmatpush1.msra.mxu0 0.0
  %1285 = vmatprep.subr.mxu0 0.0
  %1286 = vmatpush1.msra.mxu0 0.0
  %1287 = vmatprep.subr.mxu0 0.0
  %1288 = vmatpush1.msra.mxu0 0.0
  %1289 = vmatprep.subr.mxu0 0.0
  %1290 = vmatpush1.msra.mxu0 0.0
  %1291 = vmatprep.subr.mxu0 0.0
  %1292 = vmatpush1.msra.mxu0 0.0
  %1293 = vmatprep.subr.mxu0 0.0
  %1294 = vmatpush1.msra.mxu0 0.0
  %1295 = vmatprep.subr.mxu0 0.0
  %1296 = vmatpush1.msra.mxu0 0.0
  %1297 = vmatprep.subr.mxu0 0.0
  %1298 = vmatpush1.msra.mxu0 0.0
  %1299 = vmatprep.subr.mxu0 0.0
  %1300 = vmatpush1.msra.mxu0 0.0
  %1301 = vmatprep.subr.mxu0 0.0
  %1302 = vmatpush1.msra.mxu0 0.0
  %1303 = vmatprep.subr.mxu0 0.0
  %1304 = vmatpush1.msra.mxu0 0.0
  %1305 = vmatprep.subr.mxu0 0.0
  %1306 = vmatpush1.msra.mxu0 0.0
  %1307 = vmatprep.subr.mxu0 0.0
  %1308 = vmatpush1.msra.mxu0 0.0
  %1309 = vmatprep.subr.mxu0 0.0
  %1310 = vmatpush1.msra.mxu0 0.0
  %1311 = vmatprep.mubr.f32.mxu0 0.0
  %1312 = vmatmul.mubr.f32.gmra.mrb[0].mxu0 %v1245
  %v1313 = vpop.f32.mrb[0].mxu0
  %v1314 = vadd.f32 0.0, %v1313
  %v1315 = vpop.f32.mrb[0].mxu0
  %1316 = vdwg.mxu0
  %1317 = vrot.lane.b32.xlu0 %v297, 64
  %v1318 = vpop.permute.xlu0 %1317
  %v1321 = vsel %vm318, %v1009, 0
  %1323 = vmatprep.subr.mxu0 0.0
  %1324 = vmatpush1.msra.mxu0 %v1318
  %1325 = vmatprep.subr.mxu0 0.0
  %1326 = vmatpush1.msra.mxu0 0.0
  %1327 = vmatprep.subr.mxu0 0.0
  %1328 = vmatpush1.msra.mxu0 0.0
  %1329 = vmatprep.subr.mxu0 0.0
  %1330 = vmatpush1.msra.mxu0 0.0
  %1331 = vmatprep.subr.mxu0 0.0
  %1332 = vmatpush1.msra.mxu0 0.0
  %1333 = vmatprep.subr.mxu0 0.0
  %1334 = vmatpush1.msra.mxu0 0.0
  %1335 = vmatprep.subr.mxu0 0.0
  %1336 = vmatpush1.msra.mxu0 0.0
  %1337 = vmatprep.subr.mxu0 0.0
  %1338 = vmatpush1.msra.mxu0 0.0
  %1339 = vmatprep.subr.mxu0 0.0
  %1340 = vmatpush1.msra.mxu0 0.0
  %1341 = vmatprep.subr.mxu0 0.0
  %1342 = vmatpush1.msra.mxu0 0.0
  %1343 = vmatprep.subr.mxu0 0.0
  %1344 = vmatpush1.msra.mxu0 0.0
  %1345 = vmatprep.subr.mxu0 0.0
  %1346 = vmatpush1.msra.mxu0 0.0
  %1347 = vmatprep.subr.mxu0 0.0
  %1348 = vmatpush1.msra.mxu0 0.0
  %1349 = vmatprep.subr.mxu0 0.0
  %1350 = vmatpush1.msra.mxu0 0.0
  %1351 = vmatprep.subr.mxu0 0.0
  %1352 = vmatpush1.msra.mxu0 0.0
  %1353 = vmatprep.subr.mxu0 0.0
  %1354 = vmatpush1.msra.mxu0 0.0
  %1355 = vmatprep.subr.mxu0 0.0
  %1356 = vmatpush1.msra.mxu0 0.0
  %1357 = vmatprep.subr.mxu0 0.0
  %1358 = vmatpush1.msra.mxu0 0.0
  %1359 = vmatprep.subr.mxu0 0.0
  %1360 = vmatpush1.msra.mxu0 0.0
  %1361 = vmatprep.subr.mxu0 0.0
  %1362 = vmatpush1.msra.mxu0 0.0
  %1363 = vmatprep.subr.mxu0 0.0
  %1364 = vmatpush1.msra.mxu0 0.0
  %1365 = vmatprep.subr.mxu0 0.0
  %1366 = vmatpush1.msra.mxu0 0.0
  %1367 = vmatprep.subr.mxu0 0.0
  %1368 = vmatpush1.msra.mxu0 0.0
  %1369 = vmatprep.subr.mxu0 0.0
  %1370 = vmatpush1.msra.mxu0 0.0
  %1371 = vmatprep.subr.mxu0 0.0
  %1372 = vmatpush1.msra.mxu0 0.0
  %1373 = vmatprep.subr.mxu0 0.0
  %1374 = vmatpush1.msra.mxu0 0.0
  %1375 = vmatprep.subr.mxu0 0.0
  %1376 = vmatpush1.msra.mxu0 0.0
  %1377 = vmatprep.subr.mxu0 0.0
  %1378 = vmatpush1.msra.mxu0 0.0
  %1379 = vmatprep.subr.mxu0 0.0
  %1380 = vmatpush1.msra.mxu0 0.0
  %1381 = vmatprep.subr.mxu0 0.0
  %1382 = vmatpush1.msra.mxu0 0.0
  %1383 = vmatprep.subr.mxu0 0.0
  %1384 = vmatpush1.msra.mxu0 0.0
  %1385 = vmatprep.subr.mxu0 0.0
  %1386 = vmatpush1.msra.mxu0 0.0
  %1387 = vmatprep.mubr.f32.mxu0 0.0
  %1388 = vmatmul.mubr.f32.gmra.mrb[0].mxu0 %v1321
  %v1389 = vpop.f32.mrb[0].mxu0
  %v1390 = vadd.f32 0.0, %v1389
  %v1391 = vpop.f32.mrb[0].mxu0
  %1392 = vdwg.mxu0
  %1393 = vrot.lane.b32.xlu0 %v299, 64
  %v1394 = vpop.permute.xlu0 %1393
  %v1397 = vsel %vm318, %v1010, 0
  %1399 = vmatprep.subr.mxu0 0.0
  %1400 = vmatpush1.msra.mxu0 %v1394
  %1401 = vmatprep.subr.mxu0 0.0
  %1402 = vmatpush1.msra.mxu0 0.0
  %1403 = vmatprep.subr.mxu0 0.0
  %1404 = vmatpush1.msra.mxu0 0.0
  %1405 = vmatprep.subr.mxu0 0.0
  %1406 = vmatpush1.msra.mxu0 0.0
  %1407 = vmatprep.subr.mxu0 0.0
  %1408 = vmatpush1.msra.mxu0 0.0
  %1409 = vmatprep.subr.mxu0 0.0
  %1410 = vmatpush1.msra.mxu0 0.0
  %1411 = vmatprep.subr.mxu0 0.0
  %1412 = vmatpush1.msra.mxu0 0.0
  %1413 = vmatprep.subr.mxu0 0.0
  %1414 = vmatpush1.msra.mxu0 0.0
  %1415 = vmatprep.subr.mxu0 0.0
  %1416 = vmatpush1.msra.mxu0 0.0
  %1417 = vmatprep.subr.mxu0 0.0
  %1418 = vmatpush1.msra.mxu0 0.0
  %1419 = vmatprep.subr.mxu0 0.0
  %1420 = vmatpush1.msra.mxu0 0.0
  %1421 = vmatprep.subr.mxu0 0.0
  %1422 = vmatpush1.msra.mxu0 0.0
  %1423 = vmatprep.subr.mxu0 0.0
  %1424 = vmatpush1.msra.mxu0 0.0
  %1425 = vmatprep.subr.mxu0 0.0
  %1426 = vmatpush1.msra.mxu0 0.0
  %1427 = vmatprep.subr.mxu0 0.0
  %1428 = vmatpush1.msra.mxu0 0.0
  %1429 = vmatprep.subr.mxu0 0.0
  %1430 = vmatpush1.msra.mxu0 0.0
  %1431 = vmatprep.subr.mxu0 0.0
  %1432 = vmatpush1.msra.mxu0 0.0
  %1433 = vmatprep.subr.mxu0 0.0
  %1434 = vmatpush1.msra.mxu0 0.0
  %1435 = vmatprep.subr.mxu0 0.0
  %1436 = vmatpush1.msra.mxu0 0.0
  %1437 = vmatprep.subr.mxu0 0.0
  %1438 = vmatpush1.msra.mxu0 0.0
  %1439 = vmatprep.subr.mxu0 0.0
  %1440 = vmatpush1.msra.mxu0 0.0
  %1441 = vmatprep.subr.mxu0 0.0
  %1442 = vmatpush1.msra.mxu0 0.0
  %1443 = vmatprep.subr.mxu0 0.0
  %1444 = vmatpush1.msra.mxu0 0.0
  %1445 = vmatprep.subr.mxu0 0.0
  %1446 = vmatpush1.msra.mxu0 0.0
  %1447 = vmatprep.subr.mxu0 0.0
  %1448 = vmatpush1.msra.mxu0 0.0
  %1449 = vmatprep.subr.mxu0 0.0
  %1450 = vmatpush1.msra.mxu0 0.0
  %1451 = vmatprep.subr.mxu0 0.0
  %1452 = vmatpush1.msra.mxu0 0.0
  %1453 = vmatprep.subr.mxu0 0.0
  %1454 = vmatpush1.msra.mxu0 0.0
  %1455 = vmatprep.subr.mxu0 0.0
  %1456 = vmatpush1.msra.mxu0 0.0
  %1457 = vmatprep.subr.mxu0 0.0
  %1458 = vmatpush1.msra.mxu0 0.0
  %1459 = vmatprep.subr.mxu0 0.0
  %1460 = vmatpush1.msra.mxu0 0.0
  %1461 = vmatprep.subr.mxu0 0.0
  %1462 = vmatpush1.msra.mxu0 0.0
  %1463 = vmatprep.mubr.f32.mxu0 0.0
  %1464 = vmatmul.mubr.f32.gmra.mrb[0].mxu0 %v1397
  %v1465 = vpop.f32.mrb[0].mxu0
  %v1466 = vadd.f32 0.0, %v1465
  %v1467 = vpop.f32.mrb[0].mxu0
  %1468 = vdwg.mxu0
  %1469 = vrot.lane.b32.xlu0 %v301, 64
  %v1470 = vpop.permute.xlu0 %1469
  %v1473 = vsel %vm318, %v1011, 0
  %1475 = vmatprep.subr.mxu0 0.0
  %1476 = vmatpush1.msra.mxu0 %v1470
  %1477 = vmatprep.subr.mxu0 0.0
  %1478 = vmatpush1.msra.mxu0 0.0
  %1479 = vmatprep.subr.mxu0 0.0
  %1480 = vmatpush1.msra.mxu0 0.0
  %1481 = vmatprep.subr.mxu0 0.0
  %1482 = vmatpush1.msra.mxu0 0.0
  %1483 = vmatprep.subr.mxu0 0.0
  %1484 = vmatpush1.msra.mxu0 0.0
  %1485 = vmatprep.subr.mxu0 0.0
  %1486 = vmatpush1.msra.mxu0 0.0
  %1487 = vmatprep.subr.mxu0 0.0
  %1488 = vmatpush1.msra.mxu0 0.0
  %1489 = vmatprep.subr.mxu0 0.0
  %1490 = vmatpush1.msra.mxu0 0.0
  %1491 = vmatprep.subr.mxu0 0.0
  %1492 = vmatpush1.msra.mxu0 0.0
  %1493 = vmatprep.subr.mxu0 0.0
  %1494 = vmatpush1.msra.mxu0 0.0
  %1495 = vmatprep.subr.mxu0 0.0
  %1496 = vmatpush1.msra.mxu0 0.0
  %1497 = vmatprep.subr.mxu0 0.0
  %1498 = vmatpush1.msra.mxu0 0.0
  %1499 = vmatprep.subr.mxu0 0.0
  %1500 = vmatpush1.msra.mxu0 0.0
  %1501 = vmatprep.subr.mxu0 0.0
  %1502 = vmatpush1.msra.mxu0 0.0
  %1503 = vmatprep.subr.mxu0 0.0
  %1504 = vmatpush1.msra.mxu0 0.0
  %1505 = vmatprep.subr.mxu0 0.0
  %1506 = vmatpush1.msra.mxu0 0.0
  %1507 = vmatprep.subr.mxu0 0.0
  %1508 = vmatpush1.msra.mxu0 0.0
  %1509 = vmatprep.subr.mxu0 0.0
  %1510 = vmatpush1.msra.mxu0 0.0
  %1511 = vmatprep.subr.mxu0 0.0
  %1512 = vmatpush1.msra.mxu0 0.0
  %1513 = vmatprep.subr.mxu0 0.0
  %1514 = vmatpush1.msra.mxu0 0.0
  %1515 = vmatprep.subr.mxu0 0.0
  %1516 = vmatpush1.msra.mxu0 0.0
  %1517 = vmatprep.subr.mxu0 0.0
  %1518 = vmatpush1.msra.mxu0 0.0
  %1519 = vmatprep.subr.mxu0 0.0
  %1520 = vmatpush1.msra.mxu0 0.0
  %1521 = vmatprep.subr.mxu0 0.0
  %1522 = vmatpush1.msra.mxu0 0.0
  %1523 = vmatprep.subr.mxu0 0.0
  %1524 = vmatpush1.msra.mxu0 0.0
  %1525 = vmatprep.subr.mxu0 0.0
  %1526 = vmatpush1.msra.mxu0 0.0
  %1527 = vmatprep.subr.mxu0 0.0
  %1528 = vmatpush1.msra.mxu0 0.0
  %1529 = vmatprep.subr.mxu0 0.0
  %1530 = vmatpush1.msra.mxu0 0.0
  %1531 = vmatprep.subr.mxu0 0.0
  %1532 = vmatpush1.msra.mxu0 0.0
  %1533 = vmatprep.subr.mxu0 0.0
  %1534 = vmatpush1.msra.mxu0 0.0
  %1535 = vmatprep.subr.mxu0 0.0
  %1536 = vmatpush1.msra.mxu0 0.0
  %1537 = vmatprep.subr.mxu0 0.0
  %1538 = vmatpush1.msra.mxu0 0.0
  %1539 = vmatprep.mubr.f32.mxu0 0.0
  %1540 = vmatmul.mubr.f32.gmra.mrb[0].mxu0 %v1473
  %v1541 = vpop.f32.mrb[0].mxu0
  %v1542 = vadd.f32 0.0, %v1541
  %v1543 = vpop.f32.mrb[0].mxu0
  %1544 = vdwg.mxu0
  %1545 = vrot.lane.b32.xlu0 %v303, 64
  %v1546 = vpop.permute.xlu0 %1545
  %v1549 = vsel %vm318, %v1012, 0
  %1551 = vmatprep.subr.mxu0 0.0
  %1552 = vmatpush1.msra.mxu0 %v1546
  %1553 = vmatprep.subr.mxu0 0.0
  %1554 = vmatpush1.msra.mxu0 0.0
  %1555 = vmatprep.subr.mxu0 0.0
  %1556 = vmatpush1.msra.mxu0 0.0
  %1557 = vmatprep.subr.mxu0 0.0
  %1558 = vmatpush1.msra.mxu0 0.0
  %1559 = vmatprep.subr.mxu0 0.0
  %1560 = vmatpush1.msra.mxu0 0.0
  %1561 = vmatprep.subr.mxu0 0.0
  %1562 = vmatpush1.msra.mxu0 0.0
  %1563 = vmatprep.subr.mxu0 0.0
  %1564 = vmatpush1.msra.mxu0 0.0
  %1565 = vmatprep.subr.mxu0 0.0
  %1566 = vmatpush1.msra.mxu0 0.0
  %1567 = vmatprep.subr.mxu0 0.0
  %1568 = vmatpush1.msra.mxu0 0.0
  %1569 = vmatprep.subr.mxu0 0.0
  %1570 = vmatpush1.msra.mxu0 0.0
  %1571 = vmatprep.subr.mxu0 0.0
  %1572 = vmatpush1.msra.mxu0 0.0
  %1573 = vmatprep.subr.mxu0 0.0
  %1574 = vmatpush1.msra.mxu0 0.0
  %1575 = vmatprep.subr.mxu0 0.0
  %1576 = vmatpush1.msra.mxu0 0.0
  %1577 = vmatprep.subr.mxu0 0.0
  %1578 = vmatpush1.msra.mxu0 0.0
  %1579 = vmatprep.subr.mxu0 0.0
  %1580 = vmatpush1.msra.mxu0 0.0
  %1581 = vmatprep.subr.mxu0 0.0
  %1582 = vmatpush1.msra.mxu0 0.0
  %1583 = vmatprep.subr.mxu0 0.0
  %1584 = vmatpush1.msra.mxu0 0.0
  %1585 = vmatprep.subr.mxu0 0.0
  %1586 = vmatpush1.msra.mxu0 0.0
  %1587 = vmatprep.subr.mxu0 0.0
  %1588 = vmatpush1.msra.mxu0 0.0
  %1589 = vmatprep.subr.mxu0 0.0
  %1590 = vmatpush1.msra.mxu0 0.0
  %1591 = vmatprep.subr.mxu0 0.0
  %1592 = vmatpush1.msra.mxu0 0.0
  %1593 = vmatprep.subr.mxu0 0.0
  %1594 = vmatpush1.msra.mxu0 0.0
  %1595 = vmatprep.subr.mxu0 0.0
  %1596 = vmatpush1.msra.mxu0 0.0
  %1597 = vmatprep.subr.mxu0 0.0
  %1598 = vmatpush1.msra.mxu0 0.0
  %1599 = vmatprep.subr.mxu0 0.0
  %1600 = vmatpush1.msra.mxu0 0.0
  %1601 = vmatprep.subr.mxu0 0.0
  %1602 = vmatpush1.msra.mxu0 0.0
  %1603 = vmatprep.subr.mxu0 0.0
  %1604 = vmatpush1.msra.mxu0 0.0
  %1605 = vmatprep.subr.mxu0 0.0
  %1606 = vmatpush1.msra.mxu0 0.0
  %1607 = vmatprep.subr.mxu0 0.0
  %1608 = vmatpush1.msra.mxu0 0.0
  %1609 = vmatprep.subr.mxu0 0.0
  %1610 = vmatpush1.msra.mxu0 0.0
  %1611 = vmatprep.subr.mxu0 0.0
  %1612 = vmatpush1.msra.mxu0 0.0
  %1613 = vmatprep.subr.mxu0 0.0
  %1614 = vmatpush1.msra.mxu0 0.0
  %1615 = vmatprep.mubr.f32.mxu0 0.0
  %1616 = vmatmul.mubr.f32.gmra.mrb[0].mxu0 %v1549
  %v1617 = vpop.f32.mrb[0].mxu0
  %v1618 = vadd.f32 0.0, %v1617
  %v1619 = vpop.f32.mrb[0].mxu0
  %1620 = vdwg.mxu0
  %1623 = vrot.lane.b32.xlu0 %v1238, 8
  %v1624 = vpop.permute.xlu0 %1623
  %1625 = vrot.lane.b32.xlu0 %v1314, 8
  %v1626 = vpop.permute.xlu0 %1625
  %1631 = vrot.lane.b32.xlu0 %v1390, 16
  %v1632 = vpop.permute.xlu0 %1631
  %1633 = vrot.lane.b32.xlu0 %v1466, 16
  %v1634 = vpop.permute.xlu0 %1633
  %1639 = vrot.lane.b32.xlu0 %v1542, 24
  %v1640 = vpop.permute.xlu0 %1639
  %1641 = vrot.lane.b32.xlu0 %v1618, 24
  %v1642 = vpop.permute.xlu0 %1641
  %v1645 = vsel %vm318, %v1086, %v1624
  %v1646 = vsel %vm318, %v1162, %v1626
  %vm1647 = vcmask 130048
  %v1648 = vsel %vm1647, %v1645, %v1632
  %v1649 = vsel %vm1647, %v1646, %v1634
  %vm1650 = vcmask 195584
  %v1651 = vsel %vm1650, %v1648, %v1640
  %v1652 = vsel %vm1650, %v1649, %v1642
  %v1653 = vld [vmem:[%s7] sm:$0xff]
  %v1654 = vld [vmem:[%s7 + $0x8] sm:$0xff]
  %v1655 = vld [vmem:[%s7 + $0x10] sm:$0xff]
  %v1656 = vld [vmem:[%s7 + $0x18] sm:$0xff]
  %v1657 = vlaneseq
  %v1658 = vshrl.u32 %v1657, 7
  %v1659 = vsub.s32 2, %v1658
  %v1660 = vrot.slane %v184, %v1659
  %v1662 = vsel %vm138, %v1651, 0
  %v1665 = vsel %vm138, %v1652, 0
  %1667 = vmatprep.subr.mxu0 0.0
  %1668 = vmatpush1.msra.mxu0 %v1653
  %1669 = vmatprep.subr.mxu0 0.0
  %1670 = vmatpush1.msra.mxu0 %v1654
  %1671 = vmatprep.subr.mxu0 0.0
  %1672 = vmatpush1.msra.mxu0 %v1655
  %1673 = vmatprep.subr.mxu0 0.0
  %1674 = vmatpush1.msra.mxu0 %v1656
  %1675 = vmatprep.subr.mxu0 0.0
  %1676 = vmatpush1.msra.mxu0 0.0
  %1677 = vmatprep.subr.mxu0 0.0
  %1678 = vmatpush1.msra.mxu0 0.0
  %1679 = vmatprep.subr.mxu0 0.0
  %1680 = vmatpush1.msra.mxu0 0.0
  %1681 = vmatprep.subr.mxu0 0.0
  %1682 = vmatpush1.msra.mxu0 0.0
  %1683 = vmatprep.subr.mxu0 0.0
  %1684 = vmatpush1.msra.mxu0 0.0
  %1685 = vmatprep.subr.mxu0 0.0
  %1686 = vmatpush1.msra.mxu0 0.0
  %1687 = vmatprep.subr.mxu0 0.0
  %1688 = vmatpush1.msra.mxu0 0.0
  %1689 = vmatprep.subr.mxu0 0.0
  %1690 = vmatpush1.msra.mxu0 0.0
  %1691 = vmatprep.subr.mxu0 0.0
  %1692 = vmatpush1.msra.mxu0 0.0
  %1693 = vmatprep.subr.mxu0 0.0
  %1694 = vmatpush1.msra.mxu0 0.0
  %1695 = vmatprep.subr.mxu0 0.0
  %1696 = vmatpush1.msra.mxu0 0.0
  %1697 = vmatprep.subr.mxu0 0.0
  %1698 = vmatpush1.msra.mxu0 0.0
  %1699 = vmatprep.subr.mxu0 0.0
  %1700 = vmatpush1.msra.mxu0 0.0
  %1701 = vmatprep.subr.mxu0 0.0
  %1702 = vmatpush1.msra.mxu0 0.0
  %1703 = vmatprep.subr.mxu0 0.0
  %1704 = vmatpush1.msra.mxu0 0.0
  %1705 = vmatprep.subr.mxu0 0.0
  %1706 = vmatpush1.msra.mxu0 0.0
  %1707 = vmatprep.subr.mxu0 0.0
  %1708 = vmatpush1.msra.mxu0 0.0
  %1709 = vmatprep.subr.mxu0 0.0
  %1710 = vmatpush1.msra.mxu0 0.0
  %1711 = vmatprep.subr.mxu0 0.0
  %1712 = vmatpush1.msra.mxu0 0.0
  %1713 = vmatprep.subr.mxu0 0.0
  %1714 = vmatpush1.msra.mxu0 0.0
  %1715 = vmatprep.subr.mxu0 0.0
  %1716 = vmatpush1.msra.mxu0 0.0
  %1717 = vmatprep.subr.mxu0 0.0
  %1718 = vmatpush1.msra.mxu0 0.0
  %1719 = vmatprep.subr.mxu0 0.0
  %1720 = vmatpush1.msra.mxu0 0.0
  %1721 = vmatprep.subr.mxu0 0.0
  %1722 = vmatpush1.msra.mxu0 0.0
  %1723 = vmatprep.subr.mxu0 0.0
  %1724 = vmatpush1.msra.mxu0 0.0
  %1725 = vmatprep.subr.mxu0 0.0
  %1726 = vmatpush1.msra.mxu0 0.0
  %1727 = vmatprep.subr.mxu0 0.0
  %1728 = vmatpush1.msra.mxu0 0.0
  %1729 = vmatprep.subr.mxu0 0.0
  %1730 = vmatpush1.msra.mxu0 0.0
  %1731 = vmatprep.mubr.f32.mxu0 0.0
  %1732 = vmatmul.mubr.f32.gmra.mrb[0].mxu0 %v1662
  %v1733 = vpop.f32.mrb[0].mxu0
  %v1734 = vadd.f32 %v1660, %v1733
  %v1735 = vpop.f32.mrb[0].mxu0
  %1736 = vmatprep.mubr.f32.mxu0 0.0
  %1737 = vmatmul.mubr.f32.gmra.mrb[0].mxu0 %v1665
  %v1738 = vpop.f32.mrb[0].mxu0
  %v1739 = vadd.f32 %v1660, %v1738
  %v1740 = vpop.f32.mrb[0].mxu0
  %1741 = vdwg.mxu0
  %v1742 = vadd.f32 %v1734, %v176
  %v1743 = vadd.f32 %v1739, %v177
  %v1744 = vsel %vm138, %v1742, 0.0
  %1745 = vadd.xlane.f32.xlu0 %v1744
  %v1746 = vpop.xlane.xlu0 %1745
  %v1747 = vsel %vm138, %v1743, 0.0
  %1748 = vadd.xlane.f32.xlu0 %v1747
  %v1749 = vpop.xlane.xlu0 %1748
  %v1750 = vmul.f32 %v1746, %v145
  %v1751 = vmul.f32 %v1749, %v145
  %v1752 = vsub.f32 %v1742, %v1750
  %v1753 = vsub.f32 %v1743, %v1751
  %v1754 = vmul.f32 %v1752, %v1752
  %v1755 = vmul.f32 %v1753, %v1753
  %v1756 = vsel %vm138, %v1754, 0.0
  %1757 = vadd.xlane.f32.xlu0 %v1756
  %v1758 = vpop.xlane.xlu0 %1757
  %v1759 = vsel %vm138, %v1755, 0.0
  %1760 = vadd.xlane.f32.xlu0 %v1759
  %v1761 = vpop.xlane.xlu0 %1760
  %v1762 = vmul.f32 %v1758, %v145
  %v1763 = vmul.f32 %v1761, %v145
  %v1764 = vadd.f32 %v1762, 1e-12
  %v1765 = vadd.f32 %v1763, 1e-12
  %v1766 = vrsqrt.pop %v1764
  %v1767 = vrsqrt.pop %v1765
  %v1768 = vmul.f32 %v1752, %v1766
  %v1769 = vmul.f32 %v1753, %v1767
  %v1770 = vlaneseq
  %v1771 = vshrl.u32 %v1770, 7
  %v1772 = vsub.s32 3, %v1771
  %v1773 = vrot.slane %v184, %v1772
  %v1774 = vmul.f32 %v1768, %v1773
  %v1775 = vmul.f32 %v1769, %v1773
  %v1776 = vlaneseq
  %v1777 = vshrl.u32 %v1776, 7
  %v1778 = vsub.s32 4, %v1777
  %v1779 = vrot.slane %v184, %v1778
  %v1780 = vadd.f32 %v1774, %v1779
  %v1781 = vadd.f32 %v1775, %v1779
  %v1782 = vld [vmem:[%s8] sm:$0xff]
  %v1783 = vld [vmem:[%s8 + $0x8] sm:$0xff]
  %v1784 = vld [vmem:[%s8 + $0x10] sm:$0xff]
  %v1785 = vld [vmem:[%s8 + $0x18] sm:$0xff]
  %v1786 = vlaneseq
  %v1787 = vshrl.u32 %v1786, 7
  %v1788 = vsub.s32 1, %v1787
  %v1789 = vrot.slane %v184, %v1788
  %v1791 = vsel %vm138, %v1780, 0
  %v1794 = vsel %vm138, %v1781, 0
  %1796 = vmatprep.subr.mxu0 0.0
  %1797 = vmatpush1.msra.mxu0 %v1782
  %1798 = vmatprep.subr.mxu0 0.0
  %1799 = vmatpush1.msra.mxu0 %v1783
  %1800 = vmatprep.subr.mxu0 0.0
  %1801 = vmatpush1.msra.mxu0 %v1784
  %1802 = vmatprep.subr.mxu0 0.0
  %1803 = vmatpush1.msra.mxu0 %v1785
  %1804 = vmatprep.subr.mxu0 0.0
  %1805 = vmatpush1.msra.mxu0 0.0
  %1806 = vmatprep.subr.mxu0 0.0
  %1807 = vmatpush1.msra.mxu0 0.0
  %1808 = vmatprep.subr.mxu0 0.0
  %1809 = vmatpush1.msra.mxu0 0.0
  %1810 = vmatprep.subr.mxu0 0.0
  %1811 = vmatpush1.msra.mxu0 0.0
  %1812 = vmatprep.subr.mxu0 0.0
  %1813 = vmatpush1.msra.mxu0 0.0
  %1814 = vmatprep.subr.mxu0 0.0
  %1815 = vmatpush1.msra.mxu0 0.0
  %1816 = vmatprep.subr.mxu0 0.0
  %1817 = vmatpush1.msra.mxu0 0.0
  %1818 = vmatprep.subr.mxu0 0.0
  %1819 = vmatpush1.msra.mxu0 0.0
  %1820 = vmatprep.subr.mxu0 0.0
  %1821 = vmatpush1.msra.mxu0 0.0
  %1822 = vmatprep.subr.mxu0 0.0
  %1823 = vmatpush1.msra.mxu0 0.0
  %1824 = vmatprep.subr.mxu0 0.0
  %1825 = vmatpush1.msra.mxu0 0.0
  %1826 = vmatprep.subr.mxu0 0.0
  %1827 = vmatpush1.msra.mxu0 0.0
  %1828 = vmatprep.subr.mxu0 0.0
  %1829 = vmatpush1.msra.mxu0 0.0
  %1830 = vmatprep.subr.mxu0 0.0
  %1831 = vmatpush1.msra.mxu0 0.0
  %1832 = vmatprep.subr.mxu0 0.0
  %1833 = vmatpush1.msra.mxu0 0.0
  %1834 = vmatprep.subr.mxu0 0.0
  %1835 = vmatpush1.msra.mxu0 0.0
  %1836 = vmatprep.subr.mxu0 0.0
  %1837 = vmatpush1.msra.mxu0 0.0
  %1838 = vmatprep.subr.mxu0 0.0
  %1839 = vmatpush1.msra.mxu0 0.0
  %1840 = vmatprep.subr.mxu0 0.0
  %1841 = vmatpush1.msra.mxu0 0.0
  %1842 = vmatprep.subr.mxu0 0.0
  %1843 = vmatpush1.msra.mxu0 0.0
  %1844 = vmatprep.subr.mxu0 0.0
  %1845 = vmatpush1.msra.mxu0 0.0
  %1846 = vmatprep.subr.mxu0 0.0
  %1847 = vmatpush1.msra.mxu0 0.0
  %1848 = vmatprep.subr.mxu0 0.0
  %1849 = vmatpush1.msra.mxu0 0.0
  %1850 = vmatprep.subr.mxu0 0.0
  %1851 = vmatpush1.msra.mxu0 0.0
  %1852 = vmatprep.subr.mxu0 0.0
  %1853 = vmatpush1.msra.mxu0 0.0
  %1854 = vmatprep.subr.mxu0 0.0
  %1855 = vmatpush1.msra.mxu0 0.0
  %1856 = vmatprep.subr.mxu0 0.0
  %1857 = vmatpush1.msra.mxu0 0.0
  %1858 = vmatprep.subr.mxu0 0.0
  %1859 = vmatpush1.msra.mxu0 0.0
  %1860 = vmatprep.mubr.f32.mxu0 0.0
  %1861 = vmatmul.mubr.f32.gmra.mrb[0].mxu0 %v1791
  %v1862 = vpop.f32.mrb[0].mxu0
  %v1863 = vadd.f32 %v1789, %v1862
  %v1864 = vpop.f32.mrb[0].mxu0
  %1865 = vmatprep.mubr.f32.mxu0 0.0
  %1866 = vmatmul.mubr.f32.gmra.mrb[0].mxu0 %v1794
  %v1867 = vpop.f32.mrb[0].mxu0
  %v1868 = vadd.f32 %v1789, %v1867
  %v1869 = vpop.f32.mrb[0].mxu0
  %1870 = vdwg.mxu0
  %v1871 = vmul.f32 %v1863, 0.5
  %v1872 = vmul.f32 %v1868, 0.5
  %v1873 = vmul.f32 %v1863, 0.044715
  %v1874 = vmul.f32 %v1868, 0.044715
  %v1875 = vmul.f32 %v1873, %v1863
  %v1876 = vmul.f32 %v1874, %v1868
  %v1877 = vmul.f32 %v1875, %v1863
  %v1878 = vmul.f32 %v1876, %v1868
  %v1879 = vadd.f32 %v1863, %v1877
  %v1880 = vadd.f32 %v1868, %v1878
  %v1881 = vmul.f32 %v1879, 0.7978846
  %v1882 = vmul.f32 %v1880, 0.7978846
  %v1883 = vtanh.pop %v1881
  %v1884 = vtanh.pop %v1882
  %v1885 = vadd.f32 %v1883, 1.0
  %v1886 = vadd.f32 %v1884, 1.0
  %v1887 = vmul.f32 %v1871, %v1885
  %v1888 = vmul.f32 %v1872, %v1886
  %v1889 = vld [vmem:[%s9] sm:$0xff]
  %v1890 = vld [vmem:[%s9 + $0x8] sm:$0xff]
  %v1891 = vld [vmem:[%s9 + $0x10] sm:$0xff]
  %v1892 = vld [vmem:[%s9 + $0x18] sm:$0xff]
  %v1893 = vld [vmem:[%s9 + $0x20] sm:$0xff]
  %v1894 = vld [vmem:[%s9 + $0x28] sm:$0xff]
  %v1895 = vld [vmem:[%s9 + $0x30] sm:$0xff]
  %v1896 = vld [vmem:[%s9 + $0x38] sm:$0xff]
  %v1897 = vlaneseq
  %v1898 = vshrl.u32 %v1897, 7
  %v1899 = vsub.s32 5, %v1898
  %v1900 = vrot.slane %v184, %v1899
  %vm1901 = vcmask 523264
  %v1903 = vsel %vm1901, %v1887, 0
  %v1906 = vsel %vm1901, %v1888, 0
  %1908 = vmatprep.subr.mxu0 0.0
  %1909 = vmatpush1.msra.mxu0 %v1889
  %1910 = vmatprep.subr.mxu0 0.0
  %1911 = vmatpush1.msra.mxu0 %v1890
  %1912 = vmatprep.subr.mxu0 0.0
  %1913 = vmatpush1.msra.mxu0 %v1891
  %1914 = vmatprep.subr.mxu0 0.0
  %1915 = vmatpush1.msra.mxu0 %v1892
  %1916 = vmatprep.subr.mxu0 0.0
  %1917 = vmatpush1.msra.mxu0 %v1893
  %1918 = vmatprep.subr.mxu0 0.0
  %1919 = vmatpush1.msra.mxu0 %v1894
  %1920 = vmatprep.subr.mxu0 0.0
  %1921 = vmatpush1.msra.mxu0 %v1895
  %1922 = vmatprep.subr.mxu0 0.0
  %1923 = vmatpush1.msra.mxu0 %v1896
  %1924 = vmatprep.subr.mxu0 0.0
  %1925 = vmatpush1.msra.mxu0 0.0
  %1926 = vmatprep.subr.mxu0 0.0
  %1927 = vmatpush1.msra.mxu0 0.0
  %1928 = vmatprep.subr.mxu0 0.0
  %1929 = vmatpush1.msra.mxu0 0.0
  %1930 = vmatprep.subr.mxu0 0.0
  %1931 = vmatpush1.msra.mxu0 0.0
  %1932 = vmatprep.subr.mxu0 0.0
  %1933 = vmatpush1.msra.mxu0 0.0
  %1934 = vmatprep.subr.mxu0 0.0
  %1935 = vmatpush1.msra.mxu0 0.0
  %1936 = vmatprep.subr.mxu0 0.0
  %1937 = vmatpush1.msra.mxu0 0.0
  %1938 = vmatprep.subr.mxu0 0.0
  %1939 = vmatpush1.msra.mxu0 0.0
  %1940 = vmatprep.subr.mxu0 0.0
  %1941 = vmatpush1.msra.mxu0 0.0
  %1942 = vmatprep.subr.mxu0 0.0
  %1943 = vmatpush1.msra.mxu0 0.0
  %1944 = vmatprep.subr.mxu0 0.0
  %1945 = vmatpush1.msra.mxu0 0.0
  %1946 = vmatprep.subr.mxu0 0.0
  %1947 = vmatpush1.msra.mxu0 0.0
  %1948 = vmatprep.subr.mxu0 0.0
  %1949 = vmatpush1.msra.mxu0 0.0
  %1950 = vmatprep.subr.mxu0 0.0
  %1951 = vmatpush1.msra.mxu0 0.0
  %1952 = vmatprep.subr.mxu0 0.0
  %1953 = vmatpush1.msra.mxu0 0.0
  %1954 = vmatprep.subr.mxu0 0.0
  %1955 = vmatpush1.msra.mxu0 0.0
  %1956 = vmatprep.subr.mxu0 0.0
  %1957 = vmatpush1.msra.mxu0 0.0
  %1958 = vmatprep.subr.mxu0 0.0
  %1959 = vmatpush1.msra.mxu0 0.0
  %1960 = vmatprep.subr.mxu0 0.0
  %1961 = vmatpush1.msra.mxu0 0.0
  %1962 = vmatprep.subr.mxu0 0.0
  %1963 = vmatpush1.msra.mxu0 0.0
  %1964 = vmatprep.subr.mxu0 0.0
  %1965 = vmatpush1.msra.mxu0 0.0
  %1966 = vmatprep.subr.mxu0 0.0
  %1967 = vmatpush1.msra.mxu0 0.0
  %1968 = vmatprep.subr.mxu0 0.0
  %1969 = vmatpush1.msra.mxu0 0.0
  %1970 = vmatprep.subr.mxu0 0.0
  %1971 = vmatpush1.msra.mxu0 0.0
  %1972 = vmatprep.mubr.f32.mxu0 0.0
  %1973 = vmatmul.mubr.f32.gmra.mrb[0].mxu0 %v1903
  %v1974 = vpop.f32.mrb[0].mxu0
  %v1975 = vadd.f32 %v1900, %v1974
  %v1976 = vpop.f32.mrb[0].mxu0
  %1977 = vmatprep.mubr.f32.mxu0 0.0
  %1978 = vmatmul.mubr.f32.gmra.mrb[0].mxu0 %v1906
  %v1979 = vpop.f32.mrb[0].mxu0
  %v1980 = vadd.f32 %v1900, %v1979
  %v1981 = vpop.f32.mrb[0].mxu0
  %1982 = vdwg.mxu0
  %v1983 = vadd.f32 %v1975, %v1780
  %v1984 = vadd.f32 %v1980, %v1781
  %v1985 = vsel %vm138, %v1983, 0.0
  %1986 = vadd.xlane.f32.xlu0 %v1985
  %v1987 = vpop.xlane.xlu0 %1986
  %v1988 = vsel %vm138, %v1984, 0.0
  %1989 = vadd.xlane.f32.xlu0 %v1988
  %v1990 = vpop.xlane.xlu0 %1989
  %v1991 = vmul.f32 %v1987, %v145
  %v1992 = vmul.f32 %v1990, %v145
  %v1993 = vsub.f32 %v1983, %v1991
  %v1994 = vsub.f32 %v1984, %v1992
  %v1995 = vmul.f32 %v1993, %v1993
  %v1996 = vmul.f32 %v1994, %v1994
  %v1997 = vsel %vm138, %v1995, 0.0
  %1998 = vadd.xlane.f32.xlu0 %v1997
  %v1999 = vpop.xlane.xlu0 %1998
  %v2000 = vsel %vm138, %v1996, 0.0
  %2001 = vadd.xlane.f32.xlu0 %v2000
  %v2002 = vpop.xlane.xlu0 %2001
  %v2003 = vmul.f32 %v1999, %v145
  %v2004 = vmul.f32 %v2002, %v145
  %v2005 = vadd.f32 %v2003, 1e-12
  %v2006 = vadd.f32 %v2004, 1e-12
  %v2007 = vrsqrt.pop %v2005
  %v2008 = vrsqrt.pop %v2006
  %v2009 = vmul.f32 %v1993, %v2007
  %v2010 = vmul.f32 %v1994, %v2008
  %v2011 = vlaneseq
  %v2012 = vshrl.u32 %v2011, 7
  %v2013 = vsub.s32 6, %v2012
  %v2014 = vrot.slane %v184, %v2013
  %v2015 = vmul.f32 %v2009, %v2014
  %v2016 = vmul.f32 %v2010, %v2014
  %v2017 = vlaneseq
  %v2018 = vshrl.u32 %v2017, 7
  %v2019 = vsub.s32 7, %v2018
  %v2020 = vrot.slane %v184, %v2019
  %v2021 = vadd.f32 %v2015, %v2020
  %v2022 = vadd.f32 %v2016, %v2020
  %s2023 = scalar_lea.vmem %s10, 8
  %v2024 = vld [vmem:[%s2023] sm:$0xff]
  %s2025 = scalar_lea.vmem %s6, 32
  %v2026 = vld [vmem:[%s2025] sm:$0xff]
  %v2027 = vld [vmem:[%s2025 + $0x8] sm:$0xff]
  %v2028 = vld [vmem:[%s2025 + $0x10] sm:$0xff]
  %v2029 = vld [vmem:[%s2025 + $0x18] sm:$0xff]
  %v2030 = vlaneseq
  %v2031 = vshrl.u32 %v2030, 7
  %v2032 = vsub.s32 0, %v2031
  %v2033 = vrot.slane %v2024, %v2032
  %v2035 = vsel %vm138, %v2021, 0
  %v2038 = vsel %vm138, %v2022, 0
  %2040 = vmatprep.subr.mxu0 0.0
  %2041 = vmatpush1.msra.mxu0 %v2026
  %2042 = vmatprep.subr.mxu0 0.0
  %2043 = vmatpush1.msra.mxu0 %v2027
  %2044 = vmatprep.subr.mxu0 0.0
  %2045 = vmatpush1.msra.mxu0 %v2028
  %2046 = vmatprep.subr.mxu0 0.0
  %2047 = vmatpush1.msra.mxu0 %v2029
  %2048 = vmatprep.subr.mxu0 0.0
  %2049 = vmatpush1.msra.mxu0 0.0
  %2050 = vmatprep.subr.mxu0 0.0
  %2051 = vmatpush1.msra.mxu0 0.0
  %2052 = vmatprep.subr.mxu0 0.0
  %2053 = vmatpush1.msra.mxu0 0.0
  %2054 = vmatprep.subr.mxu0 0.0
  %2055 = vmatpush1.msra.mxu0 0.0
  %2056 = vmatprep.subr.mxu0 0.0
  %2057 = vmatpush1.msra.mxu0 0.0
  %2058 = vmatprep.subr.mxu0 0.0
  %2059 = vmatpush1.msra.mxu0 0.0
  %2060 = vmatprep.subr.mxu0 0.0
  %2061 = vmatpush1.msra.mxu0 0.0
  %2062 = vmatprep.subr.mxu0 0.0
  %2063 = vmatpush1.msra.mxu0 0.0
  %2064 = vmatprep.subr.mxu0 0.0
  %2065 = vmatpush1.msra.mxu0 0.0
  %2066 = vmatprep.subr.mxu0 0.0
  %2067 = vmatpush1.msra.mxu0 0.0
  %2068 = vmatprep.subr.mxu0 0.0
  %2069 = vmatpush1.msra.mxu0 0.0
  %2070 = vmatprep.subr.mxu0 0.0
  %2071 = vmatpush1.msra.mxu0 0.0
  %2072 = vmatprep.subr.mxu0 0.0
  %2073 = vmatpush1.msra.mxu0 0.0
  %2074 = vmatprep.subr.mxu0 0.0
  %2075 = vmatpush1.msra.mxu0 0.0
  %2076 = vmatprep.subr.mxu0 0.0
  %2077 = vmatpush1.msra.mxu0 0.0
  %2078 = vmatprep.subr.mxu0 0.0
  %2079 = vmatpush1.msra.mxu0 0.0
  %2080 = vmatprep.subr.mxu0 0.0
  %2081 = vmatpush1.msra.mxu0 0.0
  %2082 = vmatprep.subr.mxu0 0.0
  %2083 = vmatpush1.msra.mxu0 0.0
  %2084 = vmatprep.subr.mxu0 0.0
  %2085 = vmatpush1.msra.mxu0 0.0
  %2086 = vmatprep.subr.mxu0 0.0
  %2087 = vmatpush1.msra.mxu0 0.0
  %2088 = vmatprep.subr.mxu0 0.0
  %2089 = vmatpush1.msra.mxu0 0.0
  %2090 = vmatprep.subr.mxu0 0.0
  %2091 = vmatpush1.msra.mxu0 0.0
  %2092 = vmatprep.subr.mxu0 0.0
  %2093 = vmatpush1.msra.mxu0 0.0
  %2094 = vmatprep.subr.mxu0 0.0
  %2095 = vmatpush1.msra.mxu0 0.0
  %2096 = vmatprep.subr.mxu0 0.0
  %2097 = vmatpush1.msra.mxu0 0.0
  %2098 = vmatprep.subr.mxu0 0.0
  %2099 = vmatpush1.msra.mxu0 0.0
  %2100 = vmatprep.subr.mxu0 0.0
  %2101 = vmatpush1.msra.mxu0 0.0
  %2102 = vmatprep.subr.mxu0 0.0
  %2103 = vmatpush1.msra.mxu0 0.0
  %2104 = vmatprep.mubr.f32.mxu0 0.0
  %2105 = vmatmul.mubr.f32.gmra.mrb[0].mxu0 %v2035
  %v2106 = vpop.f32.mrb[0].mxu0
  %v2107 = vadd.f32 %v2033, %v2106
  %v2108 = vpop.f32.mrb[0].mxu0
  %2109 = vmatprep.mubr.f32.mxu0 0.0
  %2110 = vmatmul.mubr.f32.gmra.mrb[0].mxu0 %v2038
  %v2111 = vpop.f32.mrb[0].mxu0
  %v2112 = vadd.f32 %v2033, %v2111
  %v2113 = vpop.f32.mrb[0].mxu0
  %2114 = vdwg.mxu0
  %v2115 = vmul.f32 %v2107, 0.35355338
  %v2116 = vmul.f32 %v2112, 0.35355338
  %2119 = vrot.lane.b32.xlu0 %v2115, 120
  %v2120 = vpop.permute.xlu0 %2119
  %2121 = vrot.lane.b32.xlu0 %v2116, 120
  %v2122 = vpop.permute.xlu0 %2121
  %2123 = vrot.lane.b32.xlu0 %v2115, 112
  %v2124 = vpop.permute.xlu0 %2123
  %2125 = vrot.lane.b32.xlu0 %v2116, 112
  %v2126 = vpop.permute.xlu0 %2125
  %2127 = vrot.lane.b32.xlu0 %v2115, 104
  %v2128 = vpop.permute.xlu0 %2127
  %2129 = vrot.lane.b32.xlu0 %v2116, 104
  %v2130 = vpop.permute.xlu0 %2129
  %2133 = vrot.lane.b32.xlu0 %v2107, 120
  %v2134 = vpop.permute.xlu0 %2133
  %2135 = vrot.lane.b32.xlu0 %v2112, 120
  %v2136 = vpop.permute.xlu0 %2135
  %2137 = vrot.lane.b32.xlu0 %v2107, 112
  %v2138 = vpop.permute.xlu0 %2137
  %2139 = vrot.lane.b32.xlu0 %v2112, 112
  %v2140 = vpop.permute.xlu0 %2139
  %2141 = vrot.lane.b32.xlu0 %v2107, 104
  %v2142 = vpop.permute.xlu0 %2141
  %2143 = vrot.lane.b32.xlu0 %v2112, 104
  %v2144 = vpop.permute.xlu0 %2143
  %2145 = vrot.lane.b32.xlu0 %v2107, 96
  %v2146 = vpop.permute.xlu0 %2145
  %v2147 = vsel %vm318, %v2115, 0
  %v2149 = vsel %vm318, %v2146, 0
  %2151 = vmatprep.subr.mxu0 0.0
  %2152 = vmatpush1.xpose.msra.mxu0 %v2149
  %2153 = vmatprep.subr.mxu0 0.0
  %2154 = vmatpush1.xpose.msra.mxu0 0.0
  %2155 = vmatprep.subr.mxu0 0.0
  %2156 = vmatpush1.xpose.msra.mxu0 0.0
  %2157 = vmatprep.subr.mxu0 0.0
  %2158 = vmatpush1.xpose.msra.mxu0 0.0
  %2159 = vmatprep.subr.mxu0 0.0
  %2160 = vmatpush1.xpose.msra.mxu0 0.0
  %2161 = vmatprep.subr.mxu0 0.0
  %2162 = vmatpush1.xpose.msra.mxu0 0.0
  %2163 = vmatprep.subr.mxu0 0.0
  %2164 = vmatpush1.xpose.msra.mxu0 0.0
  %2165 = vmatprep.subr.mxu0 0.0
  %2166 = vmatpush1.xpose.msra.mxu0 0.0
  %2167 = vmatprep.subr.mxu0 0.0
  %2168 = vmatpush1.xpose.msra.mxu0 0.0
  %2169 = vmatprep.subr.mxu0 0.0
  %2170 = vmatpush1.xpose.msra.mxu0 0.0
  %2171 = vmatprep.subr.mxu0 0.0
  %2172 = vmatpush1.xpose.msra.mxu0 0.0
  %2173 = vmatprep.subr.mxu0 0.0
  %2174 = vmatpush1.xpose.msra.mxu0 0.0
  %2175 = vmatprep.subr.mxu0 0.0
  %2176 = vmatpush1.xpose.msra.mxu0 0.0
  %2177 = vmatprep.subr.mxu0 0.0
  %2178 = vmatpush1.xpose.msra.mxu0 0.0
  %2179 = vmatprep.subr.mxu0 0.0
  %2180 = vmatpush1.xpose.msra.mxu0 0.0
  %2181 = vmatprep.subr.mxu0 0.0
  %2182 = vmatpush1.xpose.msra.mxu0 0.0
  %2183 = vmatprep.subr.mxu0 0.0
  %2184 = vmatpush1.xpose.msra.mxu0 0.0
  %2185 = vmatprep.subr.mxu0 0.0
  %2186 = vmatpush1.xpose.msra.mxu0 0.0
  %2187 = vmatprep.subr.mxu0 0.0
  %2188 = vmatpush1.xpose.msra.mxu0 0.0
  %2189 = vmatprep.subr.mxu0 0.0
  %2190 = vmatpush1.xpose.msra.mxu0 0.0
  %2191 = vmatprep.subr.mxu0 0.0
  %2192 = vmatpush1.xpose.msra.mxu0 0.0
  %2193 = vmatprep.subr.mxu0 0.0
  %2194 = vmatpush1.xpose.msra.mxu0 0.0
  %2195 = vmatprep.subr.mxu0 0.0
  %2196 = vmatpush1.xpose.msra.mxu0 0.0
  %2197 = vmatprep.subr.mxu0 0.0
  %2198 = vmatpush1.xpose.msra.mxu0 0.0
  %2199 = vmatprep.subr.mxu0 0.0
  %2200 = vmatpush1.xpose.msra.mxu0 0.0
  %2201 = vmatprep.subr.mxu0 0.0
  %2202 = vmatpush1.xpose.msra.mxu0 0.0
  %2203 = vmatprep.subr.mxu0 0.0
  %2204 = vmatpush1.xpose.msra.mxu0 0.0
  %2205 = vmatprep.subr.mxu0 0.0
  %2206 = vmatpush1.xpose.msra.mxu0 0.0
  %2207 = vmatprep.subr.mxu0 0.0
  %2208 = vmatpush1.xpose.msra.mxu0 0.0
  %2209 = vmatprep.subr.mxu0 0.0
  %2210 = vmatpush1.xpose.msra.mxu0 0.0
  %2211 = vmatprep.subr.mxu0 0.0
  %2212 = vmatpush1.xpose.msra.mxu0 0.0
  %2213 = vmatprep.subr.mxu0 0.0
  %2214 = vmatpush1.xpose.msra.mxu0 0.0
  %2215 = vmatprep.mubr.f32.mxu0 0.0
  %2216 = vmatmul.mubr.f32.gmra.mrb[0].mxu0 %v2147
  %v2217 = vpop.f32.mrb[0].mxu0
  %v2218 = vadd.f32 %v309, %v2217
  %v2219 = vpop.f32.mrb[0].mxu0
  %2220 = vdwg.mxu0
  %2221 = vrot.lane.b32.xlu0 %v2112, 96
  %v2222 = vpop.permute.xlu0 %2221
  %v2223 = vsel %vm318, %v2116, 0
  %v2225 = vsel %vm318, %v2222, 0
  %2227 = vmatprep.subr.mxu0 0.0
  %2228 = vmatpush1.xpose.msra.mxu0 %v2225
  %2229 = vmatprep.subr.mxu0 0.0
  %2230 = vmatpush1.xpose.msra.mxu0 0.0
  %2231 = vmatprep.subr.mxu0 0.0
  %2232 = vmatpush1.xpose.msra.mxu0 0.0
  %2233 = vmatprep.subr.mxu0 0.0
  %2234 = vmatpush1.xpose.msra.mxu0 0.0
  %2235 = vmatprep.subr.mxu0 0.0
  %2236 = vmatpush1.xpose.msra.mxu0 0.0
  %2237 = vmatprep.subr.mxu0 0.0
  %2238 = vmatpush1.xpose.msra.mxu0 0.0
  %2239 = vmatprep.subr.mxu0 0.0
  %2240 = vmatpush1.xpose.msra.mxu0 0.0
  %2241 = vmatprep.subr.mxu0 0.0
  %2242 = vmatpush1.xpose.msra.mxu0 0.0
  %2243 = vmatprep.subr.mxu0 0.0
  %2244 = vmatpush1.xpose.msra.mxu0 0.0
  %2245 = vmatprep.subr.mxu0 0.0
  %2246 = vmatpush1.xpose.msra.mxu0 0.0
  %2247 = vmatprep.subr.mxu0 0.0
  %2248 = vmatpush1.xpose.msra.mxu0 0.0
  %2249 = vmatprep.subr.mxu0 0.0
  %2250 = vmatpush1.xpose.msra.mxu0 0.0
  %2251 = vmatprep.subr.mxu0 0.0
  %2252 = vmatpush1.xpose.msra.mxu0 0.0
  %2253 = vmatprep.subr.mxu0 0.0
  %2254 = vmatpush1.xpose.msra.mxu0 0.0
  %2255 = vmatprep.subr.mxu0 0.0
  %2256 = vmatpush1.xpose.msra.mxu0 0.0
  %2257 = vmatprep.subr.mxu0 0.0
  %2258 = vmatpush1.xpose.msra.mxu0 0.0
  %2259 = vmatprep.subr.mxu0 0.0
  %2260 = vmatpush1.xpose.msra.mxu0 0.0
  %2261 = vmatprep.subr.mxu0 0.0
  %2262 = vmatpush1.xpose.msra.mxu0 0.0
  %2263 = vmatprep.subr.mxu0 0.0
  %2264 = vmatpush1.xpose.msra.mxu0 0.0
  %2265 = vmatprep.subr.mxu0 0.0
  %2266 = vmatpush1.xpose.msra.mxu0 0.0
  %2267 = vmatprep.subr.mxu0 0.0
  %2268 = vmatpush1.xpose.msra.mxu0 0.0
  %2269 = vmatprep.subr.mxu0 0.0
  %2270 = vmatpush1.xpose.msra.mxu0 0.0
  %2271 = vmatprep.subr.mxu0 0.0
  %2272 = vmatpush1.xpose.msra.mxu0 0.0
  %2273 = vmatprep.subr.mxu0 0.0
  %2274 = vmatpush1.xpose.msra.mxu0 0.0
  %2275 = vmatprep.subr.mxu0 0.0
  %2276 = vmatpush1.xpose.msra.mxu0 0.0
  %2277 = vmatprep.subr.mxu0 0.0
  %2278 = vmatpush1.xpose.msra.mxu0 0.0
  %2279 = vmatprep.subr.mxu0 0.0
  %2280 = vmatpush1.xpose.msra.mxu0 0.0
  %2281 = vmatprep.subr.mxu0 0.0
  %2282 = vmatpush1.xpose.msra.mxu0 0.0
  %2283 = vmatprep.subr.mxu0 0.0
  %2284 = vmatpush1.xpose.msra.mxu0 0.0
  %2285 = vmatprep.subr.mxu0 0.0
  %2286 = vmatpush1.xpose.msra.mxu0 0.0
  %2287 = vmatprep.subr.mxu0 0.0
  %2288 = vmatpush1.xpose.msra.mxu0 0.0
  %2289 = vmatprep.subr.mxu0 0.0
  %2290 = vmatpush1.xpose.msra.mxu0 0.0
  %2291 = vmatprep.mubr.f32.mxu0 0.0
  %2292 = vmatmul.mubr.f32.gmra.mrb[0].mxu0 %v2223
  %v2293 = vpop.f32.mrb[0].mxu0
  %v2294 = vadd.f32 %v313, %v2293
  %v2295 = vpop.f32.mrb[0].mxu0
  %2296 = vdwg.mxu0
  %2297 = vrot.lane.b32.xlu0 %v2134, 96
  %v2298 = vpop.permute.xlu0 %2297
  %v2299 = vsel %vm318, %v2120, 0
  %v2301 = vsel %vm318, %v2298, 0
  %2303 = vmatprep.subr.mxu0 0.0
  %2304 = vmatpush1.xpose.msra.mxu0 %v2301
  %2305 = vmatprep.subr.mxu0 0.0
  %2306 = vmatpush1.xpose.msra.mxu0 0.0
  %2307 = vmatprep.subr.mxu0 0.0
  %2308 = vmatpush1.xpose.msra.mxu0 0.0
  %2309 = vmatprep.subr.mxu0 0.0
  %2310 = vmatpush1.xpose.msra.mxu0 0.0
  %2311 = vmatprep.subr.mxu0 0.0
  %2312 = vmatpush1.xpose.msra.mxu0 0.0
  %2313 = vmatprep.subr.mxu0 0.0
  %2314 = vmatpush1.xpose.msra.mxu0 0.0
  %2315 = vmatprep.subr.mxu0 0.0
  %2316 = vmatpush1.xpose.msra.mxu0 0.0
  %2317 = vmatprep.subr.mxu0 0.0
  %2318 = vmatpush1.xpose.msra.mxu0 0.0
  %2319 = vmatprep.subr.mxu0 0.0
  %2320 = vmatpush1.xpose.msra.mxu0 0.0
  %2321 = vmatprep.subr.mxu0 0.0
  %2322 = vmatpush1.xpose.msra.mxu0 0.0
  %2323 = vmatprep.subr.mxu0 0.0
  %2324 = vmatpush1.xpose.msra.mxu0 0.0
  %2325 = vmatprep.subr.mxu0 0.0
  %2326 = vmatpush1.xpose.msra.mxu0 0.0
  %2327 = vmatprep.subr.mxu0 0.0
  %2328 = vmatpush1.xpose.msra.mxu0 0.0
  %2329 = vmatprep.subr.mxu0 0.0
  %2330 = vmatpush1.xpose.msra.mxu0 0.0
  %2331 = vmatprep.subr.mxu0 0.0
  %2332 = vmatpush1.xpose.msra.mxu0 0.0
  %2333 = vmatprep.subr.mxu0 0.0
  %2334 = vmatpush1.xpose.msra.mxu0 0.0
  %2335 = vmatprep.subr.mxu0 0.0
  %2336 = vmatpush1.xpose.msra.mxu0 0.0
  %2337 = vmatprep.subr.mxu0 0.0
  %2338 = vmatpush1.xpose.msra.mxu0 0.0
  %2339 = vmatprep.subr.mxu0 0.0
  %2340 = vmatpush1.xpose.msra.mxu0 0.0
  %2341 = vmatprep.subr.mxu0 0.0
  %2342 = vmatpush1.xpose.msra.mxu0 0.0
  %2343 = vmatprep.subr.mxu0 0.0
  %2344 = vmatpush1.xpose.msra.mxu0 0.0
  %2345 = vmatprep.subr.mxu0 0.0
  %2346 = vmatpush1.xpose.msra.mxu0 0.0
  %2347 = vmatprep.subr.mxu0 0.0
  %2348 = vmatpush1.xpose.msra.mxu0 0.0
  %2349 = vmatprep.subr.mxu0 0.0
  %2350 = vmatpush1.xpose.msra.mxu0 0.0
  %2351 = vmatprep.subr.mxu0 0.0
  %2352 = vmatpush1.xpose.msra.mxu0 0.0
  %2353 = vmatprep.subr.mxu0 0.0
  %2354 = vmatpush1.xpose.msra.mxu0 0.0
  %2355 = vmatprep.subr.mxu0 0.0
  %2356 = vmatpush1.xpose.msra.mxu0 0.0
  %2357 = vmatprep.subr.mxu0 0.0
  %2358 = vmatpush1.xpose.msra.mxu0 0.0
  %2359 = vmatprep.subr.mxu0 0.0
  %2360 = vmatpush1.xpose.msra.mxu0 0.0
  %2361 = vmatprep.subr.mxu0 0.0
  %2362 = vmatpush1.xpose.msra.mxu0 0.0
  %2363 = vmatprep.subr.mxu0 0.0
  %2364 = vmatpush1.xpose.msra.mxu0 0.0
  %2365 = vmatprep.subr.mxu0 0.0
  %2366 = vmatpush1.xpose.msra.mxu0 0.0
  %2367 = vmatprep.mubr.f32.mxu0 0.0
  %2368 = vmatmul.mubr.f32.gmra.mrb[0].mxu0 %v2299
  %v2369 = vpop.f32.mrb[0].mxu0
  %v2370 = vadd.f32 %v309, %v2369
  %v2371 = vpop.f32.mrb[0].mxu0
  %2372 = vdwg.mxu0
  %2373 = vrot.lane.b32.xlu0 %v2136, 96
  %v2374 = vpop.permute.xlu0 %2373
  %v2375 = vsel %vm318, %v2122, 0
  %v2377 = vsel %vm318, %v2374, 0
  %2379 = vmatprep.subr.mxu0 0.0
  %2380 = vmatpush1.xpose.msra.mxu0 %v2377
  %2381 = vmatprep.subr.mxu0 0.0
  %2382 = vmatpush1.xpose.msra.mxu0 0.0
  %2383 = vmatprep.subr.mxu0 0.0
  %2384 = vmatpush1.xpose.msra.mxu0 0.0
  %2385 = vmatprep.subr.mxu0 0.0
  %2386 = vmatpush1.xpose.msra.mxu0 0.0
  %2387 = vmatprep.subr.mxu0 0.0
  %2388 = vmatpush1.xpose.msra.mxu0 0.0
  %2389 = vmatprep.subr.mxu0 0.0
  %2390 = vmatpush1.xpose.msra.mxu0 0.0
  %2391 = vmatprep.subr.mxu0 0.0
  %2392 = vmatpush1.xpose.msra.mxu0 0.0
  %2393 = vmatprep.subr.mxu0 0.0
  %2394 = vmatpush1.xpose.msra.mxu0 0.0
  %2395 = vmatprep.subr.mxu0 0.0
  %2396 = vmatpush1.xpose.msra.mxu0 0.0
  %2397 = vmatprep.subr.mxu0 0.0
  %2398 = vmatpush1.xpose.msra.mxu0 0.0
  %2399 = vmatprep.subr.mxu0 0.0
  %2400 = vmatpush1.xpose.msra.mxu0 0.0
  %2401 = vmatprep.subr.mxu0 0.0
  %2402 = vmatpush1.xpose.msra.mxu0 0.0
  %2403 = vmatprep.subr.mxu0 0.0
  %2404 = vmatpush1.xpose.msra.mxu0 0.0
  %2405 = vmatprep.subr.mxu0 0.0
  %2406 = vmatpush1.xpose.msra.mxu0 0.0
  %2407 = vmatprep.subr.mxu0 0.0
  %2408 = vmatpush1.xpose.msra.mxu0 0.0
  %2409 = vmatprep.subr.mxu0 0.0
  %2410 = vmatpush1.xpose.msra.mxu0 0.0
  %2411 = vmatprep.subr.mxu0 0.0
  %2412 = vmatpush1.xpose.msra.mxu0 0.0
  %2413 = vmatprep.subr.mxu0 0.0
  %2414 = vmatpush1.xpose.msra.mxu0 0.0
  %2415 = vmatprep.subr.mxu0 0.0
  %2416 = vmatpush1.xpose.msra.mxu0 0.0
  %2417 = vmatprep.subr.mxu0 0.0
  %2418 = vmatpush1.xpose.msra.mxu0 0.0
  %2419 = vmatprep.subr.mxu0 0.0
  %2420 = vmatpush1.xpose.msra.mxu0 0.0
  %2421 = vmatprep.subr.mxu0 0.0
  %2422 = vmatpush1.xpose.msra.mxu0 0.0
  %2423 = vmatprep.subr.mxu0 0.0
  %2424 = vmatpush1.xpose.msra.mxu0 0.0
  %2425 = vmatprep.subr.mxu0 0.0
  %2426 = vmatpush1.xpose.msra.mxu0 0.0
  %2427 = vmatprep.subr.mxu0 0.0
  %2428 = vmatpush1.xpose.msra.mxu0 0.0
  %2429 = vmatprep.subr.mxu0 0.0
  %2430 = vmatpush1.xpose.msra.mxu0 0.0
  %2431 = vmatprep.subr.mxu0 0.0
  %2432 = vmatpush1.xpose.msra.mxu0 0.0
  %2433 = vmatprep.subr.mxu0 0.0
  %2434 = vmatpush1.xpose.msra.mxu0 0.0
  %2435 = vmatprep.subr.mxu0 0.0
  %2436 = vmatpush1.xpose.msra.mxu0 0.0
  %2437 = vmatprep.subr.mxu0 0.0
  %2438 = vmatpush1.xpose.msra.mxu0 0.0
  %2439 = vmatprep.subr.mxu0 0.0
  %2440 = vmatpush1.xpose.msra.mxu0 0.0
  %2441 = vmatprep.subr.mxu0 0.0
  %2442 = vmatpush1.xpose.msra.mxu0 0.0
  %2443 = vmatprep.mubr.f32.mxu0 0.0
  %2444 = vmatmul.mubr.f32.gmra.mrb[0].mxu0 %v2375
  %v2445 = vpop.f32.mrb[0].mxu0
  %v2446 = vadd.f32 %v313, %v2445
  %v2447 = vpop.f32.mrb[0].mxu0
  %2448 = vdwg.mxu0
  %2449 = vrot.lane.b32.xlu0 %v2138, 96
  %v2450 = vpop.permute.xlu0 %2449
  %v2451 = vsel %vm318, %v2124, 0
  %v2453 = vsel %vm318, %v2450, 0
  %2455 = vmatprep.subr.mxu0 0.0
  %2456 = vmatpush1.xpose.msra.mxu0 %v2453
  %2457 = vmatprep.subr.mxu0 0.0
  %2458 = vmatpush1.xpose.msra.mxu0 0.0
  %2459 = vmatprep.subr.mxu0 0.0
  %2460 = vmatpush1.xpose.msra.mxu0 0.0
  %2461 = vmatprep.subr.mxu0 0.0
  %2462 = vmatpush1.xpose.msra.mxu0 0.0
  %2463 = vmatprep.subr.mxu0 0.0
  %2464 = vmatpush1.xpose.msra.mxu0 0.0
  %2465 = vmatprep.subr.mxu0 0.0
  %2466 = vmatpush1.xpose.msra.mxu0 0.0
  %2467 = vmatprep.subr.mxu0 0.0
  %2468 = vmatpush1.xpose.msra.mxu0 0.0
  %2469 = vmatprep.subr.mxu0 0.0
  %2470 = vmatpush1.xpose.msra.mxu0 0.0
  %2471 = vmatprep.subr.mxu0 0.0
  %2472 = vmatpush1.xpose.msra.mxu0 0.0
  %2473 = vmatprep.subr.mxu0 0.0
  %2474 = vmatpush1.xpose.msra.mxu0 0.0
  %2475 = vmatprep.subr.mxu0 0.0
  %2476 = vmatpush1.xpose.msra.mxu0 0.0
  %2477 = vmatprep.subr.mxu0 0.0
  %2478 = vmatpush1.xpose.msra.mxu0 0.0
  %2479 = vmatprep.subr.mxu0 0.0
  %2480 = vmatpush1.xpose.msra.mxu0 0.0
  %2481 = vmatprep.subr.mxu0 0.0
  %2482 = vmatpush1.xpose.msra.mxu0 0.0
  %2483 = vmatprep.subr.mxu0 0.0
  %2484 = vmatpush1.xpose.msra.mxu0 0.0
  %2485 = vmatprep.subr.mxu0 0.0
  %2486 = vmatpush1.xpose.msra.mxu0 0.0
  %2487 = vmatprep.subr.mxu0 0.0
  %2488 = vmatpush1.xpose.msra.mxu0 0.0
  %2489 = vmatprep.subr.mxu0 0.0
  %2490 = vmatpush1.xpose.msra.mxu0 0.0
  %2491 = vmatprep.subr.mxu0 0.0
  %2492 = vmatpush1.xpose.msra.mxu0 0.0
  %2493 = vmatprep.subr.mxu0 0.0
  %2494 = vmatpush1.xpose.msra.mxu0 0.0
  %2495 = vmatprep.subr.mxu0 0.0
  %2496 = vmatpush1.xpose.msra.mxu0 0.0
  %2497 = vmatprep.subr.mxu0 0.0
  %2498 = vmatpush1.xpose.msra.mxu0 0.0
  %2499 = vmatprep.subr.mxu0 0.0
  %2500 = vmatpush1.xpose.msra.mxu0 0.0
  %2501 = vmatprep.subr.mxu0 0.0
  %2502 = vmatpush1.xpose.msra.mxu0 0.0
  %2503 = vmatprep.subr.mxu0 0.0
  %2504 = vmatpush1.xpose.msra.mxu0 0.0
  %2505 = vmatprep.subr.mxu0 0.0
  %2506 = vmatpush1.xpose.msra.mxu0 0.0
  %2507 = vmatprep.subr.mxu0 0.0
  %2508 = vmatpush1.xpose.msra.mxu0 0.0
  %2509 = vmatprep.subr.mxu0 0.0
  %2510 = vmatpush1.xpose.msra.mxu0 0.0
  %2511 = vmatprep.subr.mxu0 0.0
  %2512 = vmatpush1.xpose.msra.mxu0 0.0
  %2513 = vmatprep.subr.mxu0 0.0
  %2514 = vmatpush1.xpose.msra.mxu0 0.0
  %2515 = vmatprep.subr.mxu0 0.0
  %2516 = vmatpush1.xpose.msra.mxu0 0.0
  %2517 = vmatprep.subr.mxu0 0.0
  %2518 = vmatpush1.xpose.msra.mxu0 0.0
  %2519 = vmatprep.mubr.f32.mxu0 0.0
  %2520 = vmatmul.mubr.f32.gmra.mrb[0].mxu0 %v2451
  %v2521 = vpop.f32.mrb[0].mxu0
  %v2522 = vadd.f32 %v309, %v2521
  %v2523 = vpop.f32.mrb[0].mxu0
  %2524 = vdwg.mxu0
  %2525 = vrot.lane.b32.xlu0 %v2140, 96
  %v2526 = vpop.permute.xlu0 %2525
  %v2527 = vsel %vm318, %v2126, 0
  %v2529 = vsel %vm318, %v2526, 0
  %2531 = vmatprep.subr.mxu0 0.0
  %2532 = vmatpush1.xpose.msra.mxu0 %v2529
  %2533 = vmatprep.subr.mxu0 0.0
  %2534 = vmatpush1.xpose.msra.mxu0 0.0
  %2535 = vmatprep.subr.mxu0 0.0
  %2536 = vmatpush1.xpose.msra.mxu0 0.0
  %2537 = vmatprep.subr.mxu0 0.0
  %2538 = vmatpush1.xpose.msra.mxu0 0.0
  %2539 = vmatprep.subr.mxu0 0.0
  %2540 = vmatpush1.xpose.msra.mxu0 0.0
  %2541 = vmatprep.subr.mxu0 0.0
  %2542 = vmatpush1.xpose.msra.mxu0 0.0
  %2543 = vmatprep.subr.mxu0 0.0
  %2544 = vmatpush1.xpose.msra.mxu0 0.0
  %2545 = vmatprep.subr.mxu0 0.0
  %2546 = vmatpush1.xpose.msra.mxu0 0.0
  %2547 = vmatprep.subr.mxu0 0.0
  %2548 = vmatpush1.xpose.msra.mxu0 0.0
  %2549 = vmatprep.subr.mxu0 0.0
  %2550 = vmatpush1.xpose.msra.mxu0 0.0
  %2551 = vmatprep.subr.mxu0 0.0
  %2552 = vmatpush1.xpose.msra.mxu0 0.0
  %2553 = vmatprep.subr.mxu0 0.0
  %2554 = vmatpush1.xpose.msra.mxu0 0.0
  %2555 = vmatprep.subr.mxu0 0.0
  %2556 = vmatpush1.xpose.msra.mxu0 0.0
  %2557 = vmatprep.subr.mxu0 0.0
  %2558 = vmatpush1.xpose.msra.mxu0 0.0
  %2559 = vmatprep.subr.mxu0 0.0
  %2560 = vmatpush1.xpose.msra.mxu0 0.0
  %2561 = vmatprep.subr.mxu0 0.0
  %2562 = vmatpush1.xpose.msra.mxu0 0.0
  %2563 = vmatprep.subr.mxu0 0.0
  %2564 = vmatpush1.xpose.msra.mxu0 0.0
  %2565 = vmatprep.subr.mxu0 0.0
  %2566 = vmatpush1.xpose.msra.mxu0 0.0
  %2567 = vmatprep.subr.mxu0 0.0
  %2568 = vmatpush1.xpose.msra.mxu0 0.0
  %2569 = vmatprep.subr.mxu0 0.0
  %2570 = vmatpush1.xpose.msra.mxu0 0.0
  %2571 = vmatprep.subr.mxu0 0.0
  %2572 = vmatpush1.xpose.msra.mxu0 0.0
  %2573 = vmatprep.subr.mxu0 0.0
  %2574 = vmatpush1.xpose.msra.mxu0 0.0
  %2575 = vmatprep.subr.mxu0 0.0
  %2576 = vmatpush1.xpose.msra.mxu0 0.0
  %2577 = vmatprep.subr.mxu0 0.0
  %2578 = vmatpush1.xpose.msra.mxu0 0.0
  %2579 = vmatprep.subr.mxu0 0.0
  %2580 = vmatpush1.xpose.msra.mxu0 0.0
  %2581 = vmatprep.subr.mxu0 0.0
  %2582 = vmatpush1.xpose.msra.mxu0 0.0
  %2583 = vmatprep.subr.mxu0 0.0
  %2584 = vmatpush1.xpose.msra.mxu0 0.0
  %2585 = vmatprep.subr.mxu0 0.0
  %2586 = vmatpush1.xpose.msra.mxu0 0.0
  %2587 = vmatprep.subr.mxu0 0.0
  %2588 = vmatpush1.xpose.msra.mxu0 0.0
  %2589 = vmatprep.subr.mxu0 0.0
  %2590 = vmatpush1.xpose.msra.mxu0 0.0
  %2591 = vmatprep.subr.mxu0 0.0
  %2592 = vmatpush1.xpose.msra.mxu0 0.0
  %2593 = vmatprep.subr.mxu0 0.0
  %2594 = vmatpush1.xpose.msra.mxu0 0.0
  %2595 = vmatprep.mubr.f32.mxu0 0.0
  %2596 = vmatmul.mubr.f32.gmra.mrb[0].mxu0 %v2527
  %v2597 = vpop.f32.mrb[0].mxu0
  %v2598 = vadd.f32 %v313, %v2597
  %v2599 = vpop.f32.mrb[0].mxu0
  %2600 = vdwg.mxu0
  %2601 = vrot.lane.b32.xlu0 %v2142, 96
  %v2602 = vpop.permute.xlu0 %2601
  %v2603 = vsel %vm318, %v2128, 0
  %v2605 = vsel %vm318, %v2602, 0
  %2607 = vmatprep.subr.mxu0 0.0
  %2608 = vmatpush1.xpose.msra.mxu0 %v2605
  %2609 = vmatprep.subr.mxu0 0.0
  %2610 = vmatpush1.xpose.msra.mxu0 0.0
  %2611 = vmatprep.subr.mxu0 0.0
  %2612 = vmatpush1.xpose.msra.mxu0 0.0
  %2613 = vmatprep.subr.mxu0 0.0
  %2614 = vmatpush1.xpose.msra.mxu0 0.0
  %2615 = vmatprep.subr.mxu0 0.0
  %2616 = vmatpush1.xpose.msra.mxu0 0.0
  %2617 = vmatprep.subr.mxu0 0.0
  %2618 = vmatpush1.xpose.msra.mxu0 0.0
  %2619 = vmatprep.subr.mxu0 0.0
  %2620 = vmatpush1.xpose.msra.mxu0 0.0
  %2621 = vmatprep.subr.mxu0 0.0
  %2622 = vmatpush1.xpose.msra.mxu0 0.0
  %2623 = vmatprep.subr.mxu0 0.0
  %2624 = vmatpush1.xpose.msra.mxu0 0.0
  %2625 = vmatprep.subr.mxu0 0.0
  %2626 = vmatpush1.xpose.msra.mxu0 0.0
  %2627 = vmatprep.subr.mxu0 0.0
  %2628 = vmatpush1.xpose.msra.mxu0 0.0
  %2629 = vmatprep.subr.mxu0 0.0
  %2630 = vmatpush1.xpose.msra.mxu0 0.0
  %2631 = vmatprep.subr.mxu0 0.0
  %2632 = vmatpush1.xpose.msra.mxu0 0.0
  %2633 = vmatprep.subr.mxu0 0.0
  %2634 = vmatpush1.xpose.msra.mxu0 0.0
  %2635 = vmatprep.subr.mxu0 0.0
  %2636 = vmatpush1.xpose.msra.mxu0 0.0
  %2637 = vmatprep.subr.mxu0 0.0
  %2638 = vmatpush1.xpose.msra.mxu0 0.0
  %2639 = vmatprep.subr.mxu0 0.0
  %2640 = vmatpush1.xpose.msra.mxu0 0.0
  %2641 = vmatprep.subr.mxu0 0.0
  %2642 = vmatpush1.xpose.msra.mxu0 0.0
  %2643 = vmatprep.subr.mxu0 0.0
  %2644 = vmatpush1.xpose.msra.mxu0 0.0
  %2645 = vmatprep.subr.mxu0 0.0
  %2646 = vmatpush1.xpose.msra.mxu0 0.0
  %2647 = vmatprep.subr.mxu0 0.0
  %2648 = vmatpush1.xpose.msra.mxu0 0.0
  %2649 = vmatprep.subr.mxu0 0.0
  %2650 = vmatpush1.xpose.msra.mxu0 0.0
  %2651 = vmatprep.subr.mxu0 0.0
  %2652 = vmatpush1.xpose.msra.mxu0 0.0
  %2653 = vmatprep.subr.mxu0 0.0
  %2654 = vmatpush1.xpose.msra.mxu0 0.0
  %2655 = vmatprep.subr.mxu0 0.0
  %2656 = vmatpush1.xpose.msra.mxu0 0.0
  %2657 = vmatprep.subr.mxu0 0.0
  %2658 = vmatpush1.xpose.msra.mxu0 0.0
  %2659 = vmatprep.subr.mxu0 0.0
  %2660 = vmatpush1.xpose.msra.mxu0 0.0
  %2661 = vmatprep.subr.mxu0 0.0
  %2662 = vmatpush1.xpose.msra.mxu0 0.0
  %2663 = vmatprep.subr.mxu0 0.0
  %2664 = vmatpush1.xpose.msra.mxu0 0.0
  %2665 = vmatprep.subr.mxu0 0.0
  %2666 = vmatpush1.xpose.msra.mxu0 0.0
  %2667 = vmatprep.subr.mxu0 0.0
  %2668 = vmatpush1.xpose.msra.mxu0 0.0
  %2669 = vmatprep.subr.mxu0 0.0
  %2670 = vmatpush1.xpose.msra.mxu0 0.0
  %2671 = vmatprep.mubr.f32.mxu0 0.0
  %2672 = vmatmul.mubr.f32.gmra.mrb[0].mxu0 %v2603
  %v2673 = vpop.f32.mrb[0].mxu0
  %v2674 = vadd.f32 %v309, %v2673
  %v2675 = vpop.f32.mrb[0].mxu0
  %2676 = vdwg.mxu0
  %2677 = vrot.lane.b32.xlu0 %v2144, 96
  %v2678 = vpop.permute.xlu0 %2677
  %v2679 = vsel %vm318, %v2130, 0
  %v2681 = vsel %vm318, %v2678, 0
  %2683 = vmatprep.subr.mxu0 0.0
  %2684 = vmatpush1.xpose.msra.mxu0 %v2681
  %2685 = vmatprep.subr.mxu0 0.0
  %2686 = vmatpush1.xpose.msra.mxu0 0.0
  %2687 = vmatprep.subr.mxu0 0.0
  %2688 = vmatpush1.xpose.msra.mxu0 0.0
  %2689 = vmatprep.subr.mxu0 0.0
  %2690 = vmatpush1.xpose.msra.mxu0 0.0
  %2691 = vmatprep.subr.mxu0 0.0
  %2692 = vmatpush1.xpose.msra.mxu0 0.0
  %2693 = vmatprep.subr.mxu0 0.0
  %2694 = vmatpush1.xpose.msra.mxu0 0.0
  %2695 = vmatprep.subr.mxu0 0.0
  %2696 = vmatpush1.xpose.msra.mxu0 0.0
  %2697 = vmatprep.subr.mxu0 0.0
  %2698 = vmatpush1.xpose.msra.mxu0 0.0
  %2699 = vmatprep.subr.mxu0 0.0
  %2700 = vmatpush1.xpose.msra.mxu0 0.0
  %2701 = vmatprep.subr.mxu0 0.0
  %2702 = vmatpush1.xpose.msra.mxu0 0.0
  %2703 = vmatprep.subr.mxu0 0.0
  %2704 = vmatpush1.xpose.msra.mxu0 0.0
  %2705 = vmatprep.subr.mxu0 0.0
  %2706 = vmatpush1.xpose.msra.mxu0 0.0
  %2707 = vmatprep.subr.mxu0 0.0
  %2708 = vmatpush1.xpose.msra.mxu0 0.0
  %2709 = vmatprep.subr.mxu0 0.0
  %2710 = vmatpush1.xpose.msra.mxu0 0.0
  %2711 = vmatprep.subr.mxu0 0.0
  %2712 = vmatpush1.xpose.msra.mxu0 0.0
  %2713 = vmatprep.subr.mxu0 0.0
  %2714 = vmatpush1.xpose.msra.mxu0 0.0
  %2715 = vmatprep.subr.mxu0 0.0
  %2716 = vmatpush1.xpose.msra.mxu0 0.0
  %2717 = vmatprep.subr.mxu0 0.0
  %2718 = vmatpush1.xpose.msra.mxu0 0.0
  %2719 = vmatprep.subr.mxu0 0.0
  %2720 = vmatpush1.xpose.msra.mxu0 0.0
  %2721 = vmatprep.subr.mxu0 0.0
  %2722 = vmatpush1.xpose.msra.mxu0 0.0
  %2723 = vmatprep.subr.mxu0 0.0
  %2724 = vmatpush1.xpose.msra.mxu0 0.0
  %2725 = vmatprep.subr.mxu0 0.0
  %2726 = vmatpush1.xpose.msra.mxu0 0.0
  %2727 = vmatprep.subr.mxu0 0.0
  %2728 = vmatpush1.xpose.msra.mxu0 0.0
  %2729 = vmatprep.subr.mxu0 0.0
  %2730 = vmatpush1.xpose.msra.mxu0 0.0
  %2731 = vmatprep.subr.mxu0 0.0
  %2732 = vmatpush1.xpose.msra.mxu0 0.0
  %2733 = vmatprep.subr.mxu0 0.0
  %2734 = vmatpush1.xpose.msra.mxu0 0.0
  %2735 = vmatprep.subr.mxu0 0.0
  %2736 = vmatpush1.xpose.msra.mxu0 0.0
  %2737 = vmatprep.subr.mxu0 0.0
  %2738 = vmatpush1.xpose.msra.mxu0 0.0
  %2739 = vmatprep.subr.mxu0 0.0
  %2740 = vmatpush1.xpose.msra.mxu0 0.0
  %2741 = vmatprep.subr.mxu0 0.0
  %2742 = vmatpush1.xpose.msra.mxu0 0.0
  %2743 = vmatprep.subr.mxu0 0.0
  %2744 = vmatpush1.xpose.msra.mxu0 0.0
  %2745 = vmatprep.subr.mxu0 0.0
  %2746 = vmatpush1.xpose.msra.mxu0 0.0
  %2747 = vmatprep.mubr.f32.mxu0 0.0
  %2748 = vmatmul.mubr.f32.gmra.mrb[0].mxu0 %v2679
  %v2749 = vpop.f32.mrb[0].mxu0
  %v2750 = vadd.f32 %v313, %v2749
  %v2751 = vpop.f32.mrb[0].mxu0
  %2752 = vdwg.mxu0
  %v2753 = vsel %vm318, %v2218, -inf
  %2754 = vmax.xlane.f32.xlu0 %v2753
  %v2755 = vpop.xlane.xlu0 %2754
  %v2756 = vsel %vm318, %v2294, -inf
  %2757 = vmax.xlane.f32.xlu0 %v2756
  %v2758 = vpop.xlane.xlu0 %2757
  %v2759 = vsel %vm318, %v2370, -inf
  %2760 = vmax.xlane.f32.xlu0 %v2759
  %v2761 = vpop.xlane.xlu0 %2760
  %v2762 = vsel %vm318, %v2446, -inf
  %2763 = vmax.xlane.f32.xlu0 %v2762
  %v2764 = vpop.xlane.xlu0 %2763
  %v2765 = vsel %vm318, %v2522, -inf
  %2766 = vmax.xlane.f32.xlu0 %v2765
  %v2767 = vpop.xlane.xlu0 %2766
  %v2768 = vsel %vm318, %v2598, -inf
  %2769 = vmax.xlane.f32.xlu0 %v2768
  %v2770 = vpop.xlane.xlu0 %2769
  %v2771 = vsel %vm318, %v2674, -inf
  %2772 = vmax.xlane.f32.xlu0 %v2771
  %v2773 = vpop.xlane.xlu0 %2772
  %v2774 = vsel %vm318, %v2750, -inf
  %2775 = vmax.xlane.f32.xlu0 %v2774
  %v2776 = vpop.xlane.xlu0 %2775
  %v2777 = vsub.f32 %v2218, %v2755
  %v2778 = vsub.f32 %v2294, %v2758
  %v2779 = vsub.f32 %v2370, %v2761
  %v2780 = vsub.f32 %v2446, %v2764
  %v2781 = vsub.f32 %v2522, %v2767
  %v2782 = vsub.f32 %v2598, %v2770
  %v2783 = vsub.f32 %v2674, %v2773
  %v2784 = vsub.f32 %v2750, %v2776
  %v2785 = vmul.f32 %v2777, 1.442695
  %v2786 = vpow.pop %v2785
  %v2787 = vmul.f32 %v2778, 1.442695
  %v2788 = vpow.pop %v2787
  %v2789 = vmul.f32 %v2779, 1.442695
  %v2790 = vpow.pop %v2789
  %v2791 = vmul.f32 %v2780, 1.442695
  %v2792 = vpow.pop %v2791
  %v2793 = vmul.f32 %v2781, 1.442695
  %v2794 = vpow.pop %v2793
  %v2795 = vmul.f32 %v2782, 1.442695
  %v2796 = vpow.pop %v2795
  %v2797 = vmul.f32 %v2783, 1.442695
  %v2798 = vpow.pop %v2797
  %v2799 = vmul.f32 %v2784, 1.442695
  %v2800 = vpow.pop %v2799
  %v2801 = vsel %vm318, %v2786, 0.0
  %2802 = vadd.xlane.f32.xlu0 %v2801
  %v2803 = vpop.xlane.xlu0 %2802
  %v2804 = vsel %vm318, %v2788, 0.0
  %2805 = vadd.xlane.f32.xlu0 %v2804
  %v2806 = vpop.xlane.xlu0 %2805
  %v2807 = vsel %vm318, %v2790, 0.0
  %2808 = vadd.xlane.f32.xlu0 %v2807
  %v2809 = vpop.xlane.xlu0 %2808
  %v2810 = vsel %vm318, %v2792, 0.0
  %2811 = vadd.xlane.f32.xlu0 %v2810
  %v2812 = vpop.xlane.xlu0 %2811
  %v2813 = vsel %vm318, %v2794, 0.0
  %2814 = vadd.xlane.f32.xlu0 %v2813
  %v2815 = vpop.xlane.xlu0 %2814
  %v2816 = vsel %vm318, %v2796, 0.0
  %2817 = vadd.xlane.f32.xlu0 %v2816
  %v2818 = vpop.xlane.xlu0 %2817
  %v2819 = vsel %vm318, %v2798, 0.0
  %2820 = vadd.xlane.f32.xlu0 %v2819
  %v2821 = vpop.xlane.xlu0 %2820
  %v2822 = vsel %vm318, %v2800, 0.0
  %2823 = vadd.xlane.f32.xlu0 %v2822
  %v2824 = vpop.xlane.xlu0 %2823
  %v2825 = vrcp.pop %v2803
  %v2826 = vrcp.pop %v2806
  %v2827 = vrcp.pop %v2809
  %v2828 = vrcp.pop %v2812
  %v2829 = vrcp.pop %v2815
  %v2830 = vrcp.pop %v2818
  %v2831 = vrcp.pop %v2821
  %v2832 = vrcp.pop %v2824
  %v2833 = vmul.f32 %v2786, %v2825
  %v2834 = vmul.f32 %v2788, %v2826
  %v2835 = vmul.f32 %v2790, %v2827
  %v2836 = vmul.f32 %v2792, %v2828
  %v2837 = vmul.f32 %v2794, %v2829
  %v2838 = vmul.f32 %v2796, %v2830
  %v2839 = vmul.f32 %v2798, %v2831
  %v2840 = vmul.f32 %v2800, %v2832
  %2841 = vrot.lane.b32.xlu0 %v2107, 64
  %v2842 = vpop.permute.xlu0 %2841
  %v2845 = vsel %vm318, %v2833, 0
  %2847 = vmatprep.subr.mxu0 0.0
  %2848 = vmatpush1.msra.mxu0 %v2842
  %2849 = vmatprep.subr.mxu0 0.0
  %2850 = vmatpush1.msra.mxu0 0.0
  %2851 = vmatprep.subr.mxu0 0.0
  %2852 = vmatpush1.msra.mxu0 0.0
  %2853 = vmatprep.subr.mxu0 0.0
  %2854 = vmatpush1.msra.mxu0 0.0
  %2855 = vmatprep.subr.mxu0 0.0
  %2856 = vmatpush1.msra.mxu0 0.0
  %2857 = vmatprep.subr.mxu0 0.0
  %2858 = vmatpush1.msra.mxu0 0.0
  %2859 = vmatprep.subr.mxu0 0.0
  %2860 = vmatpush1.msra.mxu0 0.0
  %2861 = vmatprep.subr.mxu0 0.0
  %2862 = vmatpush1.msra.mxu0 0.0
  %2863 = vmatprep.subr.mxu0 0.0
  %2864 = vmatpush1.msra.mxu0 0.0
  %2865 = vmatprep.subr.mxu0 0.0
  %2866 = vmatpush1.msra.mxu0 0.0
  %2867 = vmatprep.subr.mxu0 0.0
  %2868 = vmatpush1.msra.mxu0 0.0
  %2869 = vmatprep.subr.mxu0 0.0
  %2870 = vmatpush1.msra.mxu0 0.0
  %2871 = vmatprep.subr.mxu0 0.0
  %2872 = vmatpush1.msra.mxu0 0.0
  %2873 = vmatprep.subr.mxu0 0.0
  %2874 = vmatpush1.msra.mxu0 0.0
  %2875 = vmatprep.subr.mxu0 0.0
  %2876 = vmatpush1.msra.mxu0 0.0
  %2877 = vmatprep.subr.mxu0 0.0
  %2878 = vmatpush1.msra.mxu0 0.0
  %2879 = vmatprep.subr.mxu0 0.0
  %2880 = vmatpush1.msra.mxu0 0.0
  %2881 = vmatprep.subr.mxu0 0.0
  %2882 = vmatpush1.msra.mxu0 0.0
  %2883 = vmatprep.subr.mxu0 0.0
  %2884 = vmatpush1.msra.mxu0 0.0
  %2885 = vmatprep.subr.mxu0 0.0
  %2886 = vmatpush1.msra.mxu0 0.0
  %2887 = vmatprep.subr.mxu0 0.0
  %2888 = vmatpush1.msra.mxu0 0.0
  %2889 = vmatprep.subr.mxu0 0.0
  %2890 = vmatpush1.msra.mxu0 0.0
  %2891 = vmatprep.subr.mxu0 0.0
  %2892 = vmatpush1.msra.mxu0 0.0
  %2893 = vmatprep.subr.mxu0 0.0
  %2894 = vmatpush1.msra.mxu0 0.0
  %2895 = vmatprep.subr.mxu0 0.0
  %2896 = vmatpush1.msra.mxu0 0.0
  %2897 = vmatprep.subr.mxu0 0.0
  %2898 = vmatpush1.msra.mxu0 0.0
  %2899 = vmatprep.subr.mxu0 0.0
  %2900 = vmatpush1.msra.mxu0 0.0
  %2901 = vmatprep.subr.mxu0 0.0
  %2902 = vmatpush1.msra.mxu0 0.0
  %2903 = vmatprep.subr.mxu0 0.0
  %2904 = vmatpush1.msra.mxu0 0.0
  %2905 = vmatprep.subr.mxu0 0.0
  %2906 = vmatpush1.msra.mxu0 0.0
  %2907 = vmatprep.subr.mxu0 0.0
  %2908 = vmatpush1.msra.mxu0 0.0
  %2909 = vmatprep.subr.mxu0 0.0
  %2910 = vmatpush1.msra.mxu0 0.0
  %2911 = vmatprep.mubr.f32.mxu0 0.0
  %2912 = vmatmul.mubr.f32.gmra.mrb[0].mxu0 %v2845
  %v2913 = vpop.f32.mrb[0].mxu0
  %v2914 = vadd.f32 0.0, %v2913
  %v2915 = vpop.f32.mrb[0].mxu0
  %2916 = vdwg.mxu0
  %2917 = vrot.lane.b32.xlu0 %v2112, 64
  %v2918 = vpop.permute.xlu0 %2917
  %v2921 = vsel %vm318, %v2834, 0
  %2923 = vmatprep.subr.mxu0 0.0
  %2924 = vmatpush1.msra.mxu0 %v2918
  %2925 = vmatprep.subr.mxu0 0.0
  %2926 = vmatpush1.msra.mxu0 0.0
  %2927 = vmatprep.subr.mxu0 0.0
  %2928 = vmatpush1.msra.mxu0 0.0
  %2929 = vmatprep.subr.mxu0 0.0
  %2930 = vmatpush1.msra.mxu0 0.0
  %2931 = vmatprep.subr.mxu0 0.0
  %2932 = vmatpush1.msra.mxu0 0.0
  %2933 = vmatprep.subr.mxu0 0.0
  %2934 = vmatpush1.msra.mxu0 0.0
  %2935 = vmatprep.subr.mxu0 0.0
  %2936 = vmatpush1.msra.mxu0 0.0
  %2937 = vmatprep.subr.mxu0 0.0
  %2938 = vmatpush1.msra.mxu0 0.0
  %2939 = vmatprep.subr.mxu0 0.0
  %2940 = vmatpush1.msra.mxu0 0.0
  %2941 = vmatprep.subr.mxu0 0.0
  %2942 = vmatpush1.msra.mxu0 0.0
  %2943 = vmatprep.subr.mxu0 0.0
  %2944 = vmatpush1.msra.mxu0 0.0
  %2945 = vmatprep.subr.mxu0 0.0
  %2946 = vmatpush1.msra.mxu0 0.0
  %2947 = vmatprep.subr.mxu0 0.0
  %2948 = vmatpush1.msra.mxu0 0.0
  %2949 = vmatprep.subr.mxu0 0.0
  %2950 = vmatpush1.msra.mxu0 0.0
  %2951 = vmatprep.subr.mxu0 0.0
  %2952 = vmatpush1.msra.mxu0 0.0
  %2953 = vmatprep.subr.mxu0 0.0
  %2954 = vmatpush1.msra.mxu0 0.0
  %2955 = vmatprep.subr.mxu0 0.0
  %2956 = vmatpush1.msra.mxu0 0.0
  %2957 = vmatprep.subr.mxu0 0.0
  %2958 = vmatpush1.msra.mxu0 0.0
  %2959 = vmatprep.subr.mxu0 0.0
  %2960 = vmatpush1.msra.mxu0 0.0
  %2961 = vmatprep.subr.mxu0 0.0
  %2962 = vmatpush1.msra.mxu0 0.0
  %2963 = vmatprep.subr.mxu0 0.0
  %2964 = vmatpush1.msra.mxu0 0.0
  %2965 = vmatprep.subr.mxu0 0.0
  %2966 = vmatpush1.msra.mxu0 0.0
  %2967 = vmatprep.subr.mxu0 0.0
  %2968 = vmatpush1.msra.mxu0 0.0
  %2969 = vmatprep.subr.mxu0 0.0
  %2970 = vmatpush1.msra.mxu0 0.0
  %2971 = vmatprep.subr.mxu0 0.0
  %2972 = vmatpush1.msra.mxu0 0.0
  %2973 = vmatprep.subr.mxu0 0.0
  %2974 = vmatpush1.msra.mxu0 0.0
  %2975 = vmatprep.subr.mxu0 0.0
  %2976 = vmatpush1.msra.mxu0 0.0
  %2977 = vmatprep.subr.mxu0 0.0
  %2978 = vmatpush1.msra.mxu0 0.0
  %2979 = vmatprep.subr.mxu0 0.0
  %2980 = vmatpush1.msra.mxu0 0.0
  %2981 = vmatprep.subr.mxu0 0.0
  %2982 = vmatpush1.msra.mxu0 0.0
  %2983 = vmatprep.subr.mxu0 0.0
  %2984 = vmatpush1.msra.mxu0 0.0
  %2985 = vmatprep.subr.mxu0 0.0
  %2986 = vmatpush1.msra.mxu0 0.0
  %2987 = vmatprep.mubr.f32.mxu0 0.0
  %2988 = vmatmul.mubr.f32.gmra.mrb[0].mxu0 %v2921
  %v2989 = vpop.f32.mrb[0].mxu0
  %v2990 = vadd.f32 0.0, %v2989
  %v2991 = vpop.f32.mrb[0].mxu0
  %2992 = vdwg.mxu0
  %2993 = vrot.lane.b32.xlu0 %v2134, 64
  %v2994 = vpop.permute.xlu0 %2993
  %v2997 = vsel %vm318, %v2835, 0
  %2999 = vmatprep.subr.mxu0 0.0
  %3000 = vmatpush1.msra.mxu0 %v2994
  %3001 = vmatprep.subr.mxu0 0.0
  %3002 = vmatpush1.msra.mxu0 0.0
  %3003 = vmatprep.subr.mxu0 0.0
  %3004 = vmatpush1.msra.mxu0 0.0
  %3005 = vmatprep.subr.mxu0 0.0
  %3006 = vmatpush1.msra.mxu0 0.0
  %3007 = vmatprep.subr.mxu0 0.0
  %3008 = vmatpush1.msra.mxu0 0.0
  %3009 = vmatprep.subr.mxu0 0.0
  %3010 = vmatpush1.msra.mxu0 0.0
  %3011 = vmatprep.subr.mxu0 0.0
  %3012 = vmatpush1.msra.mxu0 0.0
  %3013 = vmatprep.subr.mxu0 0.0
  %3014 = vmatpush1.msra.mxu0 0.0
  %3015 = vmatprep.subr.mxu0 0.0
  %3016 = vmatpush1.msra.mxu0 0.0
  %3017 = vmatprep.subr.mxu0 0.0
  %3018 = vmatpush1.msra.mxu0 0.0
  %3019 = vmatprep.subr.mxu0 0.0
  %3020 = vmatpush1.msra.mxu0 0.0
  %3021 = vmatprep.subr.mxu0 0.0
  %3022 = vmatpush1.msra.mxu0 0.0
  %3023 = vmatprep.subr.mxu0 0.0
  %3024 = vmatpush1.msra.mxu0 0.0
  %3025 = vmatprep.subr.mxu0 0.0
  %3026 = vmatpush1.msra.mxu0 0.0
  %3027 = vmatprep.subr.mxu0 0.0
  %3028 = vmatpush1.msra.mxu0 0.0
  %3029 = vmatprep.subr.mxu0 0.0
  %3030 = vmatpush1.msra.mxu0 0.0
  %3031 = vmatprep.subr.mxu0 0.0
  %3032 = vmatpush1.msra.mxu0 0.0
  %3033 = vmatprep.subr.mxu0 0.0
  %3034 = vmatpush1.msra.mxu0 0.0
  %3035 = vmatprep.subr.mxu0 0.0
  %3036 = vmatpush1.msra.mxu0 0.0
  %3037 = vmatprep.subr.mxu0 0.0
  %3038 = vmatpush1.msra.mxu0 0.0
  %3039 = vmatprep.subr.mxu0 0.0
  %3040 = vmatpush1.msra.mxu0 0.0
  %3041 = vmatprep.subr.mxu0 0.0
  %3042 = vmatpush1.msra.mxu0 0.0
  %3043 = vmatprep.subr.mxu0 0.0
  %3044 = vmatpush1.msra.mxu0 0.0
  %3045 = vmatprep.subr.mxu0 0.0
  %3046 = vmatpush1.msra.mxu0 0.0
  %3047 = vmatprep.subr.mxu0 0.0
  %3048 = vmatpush1.msra.mxu0 0.0
  %3049 = vmatprep.subr.mxu0 0.0
  %3050 = vmatpush1.msra.mxu0 0.0
  %3051 = vmatprep.subr.mxu0 0.0
  %3052 = vmatpush1.msra.mxu0 0.0
  %3053 = vmatprep.subr.mxu0 0.0
  %3054 = vmatpush1.msra.mxu0 0.0
  %3055 = vmatprep.subr.mxu0 0.0
  %3056 = vmatpush1.msra.mxu0 0.0
  %3057 = vmatprep.subr.mxu0 0.0
  %3058 = vmatpush1.msra.mxu0 0.0
  %3059 = vmatprep.subr.mxu0 0.0
  %3060 = vmatpush1.msra.mxu0 0.0
  %3061 = vmatprep.subr.mxu0 0.0
  %3062 = vmatpush1.msra.mxu0 0.0
  %3063 = vmatprep.mubr.f32.mxu0 0.0
  %3064 = vmatmul.mubr.f32.gmra.mrb[0].mxu0 %v2997
  %v3065 = vpop.f32.mrb[0].mxu0
  %v3066 = vadd.f32 0.0, %v3065
  %v3067 = vpop.f32.mrb[0].mxu0
  %3068 = vdwg.mxu0
  %3069 = vrot.lane.b32.xlu0 %v2136, 64
  %v3070 = vpop.permute.xlu0 %3069
  %v3073 = vsel %vm318, %v2836, 0
  %3075 = vmatprep.subr.mxu0 0.0
  %3076 = vmatpush1.msra.mxu0 %v3070
  %3077 = vmatprep.subr.mxu0 0.0
  %3078 = vmatpush1.msra.mxu0 0.0
  %3079 = vmatprep.subr.mxu0 0.0
  %3080 = vmatpush1.msra.mxu0 0.0
  %3081 = vmatprep.subr.mxu0 0.0
  %3082 = vmatpush1.msra.mxu0 0.0
  %3083 = vmatprep.subr.mxu0 0.0
  %3084 = vmatpush1.msra.mxu0 0.0
  %3085 = vmatprep.subr.mxu0 0.0
  %3086 = vmatpush1.msra.mxu0 0.0
  %3087 = vmatprep.subr.mxu0 0.0
  %3088 = vmatpush1.msra.mxu0 0.0
  %3089 = vmatprep.subr.mxu0 0.0
  %3090 = vmatpush1.msra.mxu0 0.0
  %3091 = vmatprep.subr.mxu0 0.0
  %3092 = vmatpush1.msra.mxu0 0.0
  %3093 = vmatprep.subr.mxu0 0.0
  %3094 = vmatpush1.msra.mxu0 0.0
  %3095 = vmatprep.subr.mxu0 0.0
  %3096 = vmatpush1.msra.mxu0 0.0
  %3097 = vmatprep.subr.mxu0 0.0
  %3098 = vmatpush1.msra.mxu0 0.0
  %3099 = vmatprep.subr.mxu0 0.0
  %3100 = vmatpush1.msra.mxu0 0.0
  %3101 = vmatprep.subr.mxu0 0.0
  %3102 = vmatpush1.msra.mxu0 0.0
  %3103 = vmatprep.subr.mxu0 0.0
  %3104 = vmatpush1.msra.mxu0 0.0
  %3105 = vmatprep.subr.mxu0 0.0
  %3106 = vmatpush1.msra.mxu0 0.0
  %3107 = vmatprep.subr.mxu0 0.0
  %3108 = vmatpush1.msra.mxu0 0.0
  %3109 = vmatprep.subr.mxu0 0.0
  %3110 = vmatpush1.msra.mxu0 0.0
  %3111 = vmatprep.subr.mxu0 0.0
  %3112 = vmatpush1.msra.mxu0 0.0
  %3113 = vmatprep.subr.mxu0 0.0
  %3114 = vmatpush1.msra.mxu0 0.0
  %3115 = vmatprep.subr.mxu0 0.0
  %3116 = vmatpush1.msra.mxu0 0.0
  %3117 = vmatprep.subr.mxu0 0.0
  %3118 = vmatpush1.msra.mxu0 0.0
  %3119 = vmatprep.subr.mxu0 0.0
  %3120 = vmatpush1.msra.mxu0 0.0
  %3121 = vmatprep.subr.mxu0 0.0
  %3122 = vmatpush1.msra.mxu0 0.0
  %3123 = vmatprep.subr.mxu0 0.0
  %3124 = vmatpush1.msra.mxu0 0.0
  %3125 = vmatprep.subr.mxu0 0.0
  %3126 = vmatpush1.msra.mxu0 0.0
  %3127 = vmatprep.subr.mxu0 0.0
  %3128 = vmatpush1.msra.mxu0 0.0
  %3129 = vmatprep.subr.mxu0 0.0
  %3130 = vmatpush1.msra.mxu0 0.0
  %3131 = vmatprep.subr.mxu0 0.0
  %3132 = vmatpush1.msra.mxu0 0.0
  %3133 = vmatprep.subr.mxu0 0.0
  %3134 = vmatpush1.msra.mxu0 0.0
  %3135 = vmatprep.subr.mxu0 0.0
  %3136 = vmatpush1.msra.mxu0 0.0
  %3137 = vmatprep.subr.mxu0 0.0
  %3138 = vmatpush1.msra.mxu0 0.0
  %3139 = vmatprep.mubr.f32.mxu0 0.0
  %3140 = vmatmul.mubr.f32.gmra.mrb[0].mxu0 %v3073
  %v3141 = vpop.f32.mrb[0].mxu0
  %v3142 = vadd.f32 0.0, %v3141
  %v3143 = vpop.f32.mrb[0].mxu0
  %3144 = vdwg.mxu0
  %3145 = vrot.lane.b32.xlu0 %v2138, 64
  %v3146 = vpop.permute.xlu0 %3145
  %v3149 = vsel %vm318, %v2837, 0
  %3151 = vmatprep.subr.mxu0 0.0
  %3152 = vmatpush1.msra.mxu0 %v3146
  %3153 = vmatprep.subr.mxu0 0.0
  %3154 = vmatpush1.msra.mxu0 0.0
  %3155 = vmatprep.subr.mxu0 0.0
  %3156 = vmatpush1.msra.mxu0 0.0
  %3157 = vmatprep.subr.mxu0 0.0
  %3158 = vmatpush1.msra.mxu0 0.0
  %3159 = vmatprep.subr.mxu0 0.0
  %3160 = vmatpush1.msra.mxu0 0.0
  %3161 = vmatprep.subr.mxu0 0.0
  %3162 = vmatpush1.msra.mxu0 0.0
  %3163 = vmatprep.subr.mxu0 0.0
  %3164 = vmatpush1.msra.mxu0 0.0
  %3165 = vmatprep.subr.mxu0 0.0
  %3166 = vmatpush1.msra.mxu0 0.0
  %3167 = vmatprep.subr.mxu0 0.0
  %3168 = vmatpush1.msra.mxu0 0.0
  %3169 = vmatprep.subr.mxu0 0.0
  %3170 = vmatpush1.msra.mxu0 0.0
  %3171 = vmatprep.subr.mxu0 0.0
  %3172 = vmatpush1.msra.mxu0 0.0
  %3173 = vmatprep.subr.mxu0 0.0
  %3174 = vmatpush1.msra.mxu0 0.0
  %3175 = vmatprep.subr.mxu0 0.0
  %3176 = vmatpush1.msra.mxu0 0.0
  %3177 = vmatprep.subr.mxu0 0.0
  %3178 = vmatpush1.msra.mxu0 0.0
  %3179 = vmatprep.subr.mxu0 0.0
  %3180 = vmatpush1.msra.mxu0 0.0
  %3181 = vmatprep.subr.mxu0 0.0
  %3182 = vmatpush1.msra.mxu0 0.0
  %3183 = vmatprep.subr.mxu0 0.0
  %3184 = vmatpush1.msra.mxu0 0.0
  %3185 = vmatprep.subr.mxu0 0.0
  %3186 = vmatpush1.msra.mxu0 0.0
  %3187 = vmatprep.subr.mxu0 0.0
  %3188 = vmatpush1.msra.mxu0 0.0
  %3189 = vmatprep.subr.mxu0 0.0
  %3190 = vmatpush1.msra.mxu0 0.0
  %3191 = vmatprep.subr.mxu0 0.0
  %3192 = vmatpush1.msra.mxu0 0.0
  %3193 = vmatprep.subr.mxu0 0.0
  %3194 = vmatpush1.msra.mxu0 0.0
  %3195 = vmatprep.subr.mxu0 0.0
  %3196 = vmatpush1.msra.mxu0 0.0
  %3197 = vmatprep.subr.mxu0 0.0
  %3198 = vmatpush1.msra.mxu0 0.0
  %3199 = vmatprep.subr.mxu0 0.0
  %3200 = vmatpush1.msra.mxu0 0.0
  %3201 = vmatprep.subr.mxu0 0.0
  %3202 = vmatpush1.msra.mxu0 0.0
  %3203 = vmatprep.subr.mxu0 0.0
  %3204 = vmatpush1.msra.mxu0 0.0
  %3205 = vmatprep.subr.mxu0 0.0
  %3206 = vmatpush1.msra.mxu0 0.0
  %3207 = vmatprep.subr.mxu0 0.0
  %3208 = vmatpush1.msra.mxu0 0.0
  %3209 = vmatprep.subr.mxu0 0.0
  %3210 = vmatpush1.msra.mxu0 0.0
  %3211 = vmatprep.subr.mxu0 0.0
  %3212 = vmatpush1.msra.mxu0 0.0
  %3213 = vmatprep.subr.mxu0 0.0
  %3214 = vmatpush1.msra.mxu0 0.0
  %3215 = vmatprep.mubr.f32.mxu0 0.0
  %3216 = vmatmul.mubr.f32.gmra.mrb[0].mxu0 %v3149
  %v3217 = vpop.f32.mrb[0].mxu0
  %v3218 = vadd.f32 0.0, %v3217
  %v3219 = vpop.f32.mrb[0].mxu0
  %3220 = vdwg.mxu0
  %3221 = vrot.lane.b32.xlu0 %v2140, 64
  %v3222 = vpop.permute.xlu0 %3221
  %v3225 = vsel %vm318, %v2838, 0
  %3227 = vmatprep.subr.mxu0 0.0
  %3228 = vmatpush1.msra.mxu0 %v3222
  %3229 = vmatprep.subr.mxu0 0.0
  %3230 = vmatpush1.msra.mxu0 0.0
  %3231 = vmatprep.subr.mxu0 0.0
  %3232 = vmatpush1.msra.mxu0 0.0
  %3233 = vmatprep.subr.mxu0 0.0
  %3234 = vmatpush1.msra.mxu0 0.0
  %3235 = vmatprep.subr.mxu0 0.0
  %3236 = vmatpush1.msra.mxu0 0.0
  %3237 = vmatprep.subr.mxu0 0.0
  %3238 = vmatpush1.msra.mxu0 0.0
  %3239 = vmatprep.subr.mxu0 0.0
  %3240 = vmatpush1.msra.mxu0 0.0
  %3241 = vmatprep.subr.mxu0 0.0
  %3242 = vmatpush1.msra.mxu0 0.0
  %3243 = vmatprep.subr.mxu0 0.0
  %3244 = vmatpush1.msra.mxu0 0.0
  %3245 = vmatprep.subr.mxu0 0.0
  %3246 = vmatpush1.msra.mxu0 0.0
  %3247 = vmatprep.subr.mxu0 0.0
  %3248 = vmatpush1.msra.mxu0 0.0
  %3249 = vmatprep.subr.mxu0 0.0
  %3250 = vmatpush1.msra.mxu0 0.0
  %3251 = vmatprep.subr.mxu0 0.0
  %3252 = vmatpush1.msra.mxu0 0.0
  %3253 = vmatprep.subr.mxu0 0.0
  %3254 = vmatpush1.msra.mxu0 0.0
  %3255 = vmatprep.subr.mxu0 0.0
  %3256 = vmatpush1.msra.mxu0 0.0
  %3257 = vmatprep.subr.mxu0 0.0
  %3258 = vmatpush1.msra.mxu0 0.0
  %3259 = vmatprep.subr.mxu0 0.0
  %3260 = vmatpush1.msra.mxu0 0.0
  %3261 = vmatprep.subr.mxu0 0.0
  %3262 = vmatpush1.msra.mxu0 0.0
  %3263 = vmatprep.subr.mxu0 0.0
  %3264 = vmatpush1.msra.mxu0 0.0
  %3265 = vmatprep.subr.mxu0 0.0
  %3266 = vmatpush1.msra.mxu0 0.0
  %3267 = vmatprep.subr.mxu0 0.0
  %3268 = vmatpush1.msra.mxu0 0.0
  %3269 = vmatprep.subr.mxu0 0.0
  %3270 = vmatpush1.msra.mxu0 0.0
  %3271 = vmatprep.subr.mxu0 0.0
  %3272 = vmatpush1.msra.mxu0 0.0
  %3273 = vmatprep.subr.mxu0 0.0
  %3274 = vmatpush1.msra.mxu0 0.0
  %3275 = vmatprep.subr.mxu0 0.0
  %3276 = vmatpush1.msra.mxu0 0.0
  %3277 = vmatprep.subr.mxu0 0.0
  %3278 = vmatpush1.msra.mxu0 0.0
  %3279 = vmatprep.subr.mxu0 0.0
  %3280 = vmatpush1.msra.mxu0 0.0
  %3281 = vmatprep.subr.mxu0 0.0
  %3282 = vmatpush1.msra.mxu0 0.0
  %3283 = vmatprep.subr.mxu0 0.0
  %3284 = vmatpush1.msra.mxu0 0.0
  %3285 = vmatprep.subr.mxu0 0.0
  %3286 = vmatpush1.msra.mxu0 0.0
  %3287 = vmatprep.subr.mxu0 0.0
  %3288 = vmatpush1.msra.mxu0 0.0
  %3289 = vmatprep.subr.mxu0 0.0
  %3290 = vmatpush1.msra.mxu0 0.0
  %3291 = vmatprep.mubr.f32.mxu0 0.0
  %3292 = vmatmul.mubr.f32.gmra.mrb[0].mxu0 %v3225
  %v3293 = vpop.f32.mrb[0].mxu0
  %v3294 = vadd.f32 0.0, %v3293
  %v3295 = vpop.f32.mrb[0].mxu0
  %3296 = vdwg.mxu0
  %3297 = vrot.lane.b32.xlu0 %v2142, 64
  %v3298 = vpop.permute.xlu0 %3297
  %v3301 = vsel %vm318, %v2839, 0
  %3303 = vmatprep.subr.mxu0 0.0
  %3304 = vmatpush1.msra.mxu0 %v3298
  %3305 = vmatprep.subr.mxu0 0.0
  %3306 = vmatpush1.msra.mxu0 0.0
  %3307 = vmatprep.subr.mxu0 0.0
  %3308 = vmatpush1.msra.mxu0 0.0
  %3309 = vmatprep.subr.mxu0 0.0
  %3310 = vmatpush1.msra.mxu0 0.0
  %3311 = vmatprep.subr.mxu0 0.0
  %3312 = vmatpush1.msra.mxu0 0.0
  %3313 = vmatprep.subr.mxu0 0.0
  %3314 = vmatpush1.msra.mxu0 0.0
  %3315 = vmatprep.subr.mxu0 0.0
  %3316 = vmatpush1.msra.mxu0 0.0
  %3317 = vmatprep.subr.mxu0 0.0
  %3318 = vmatpush1.msra.mxu0 0.0
  %3319 = vmatprep.subr.mxu0 0.0
  %3320 = vmatpush1.msra.mxu0 0.0
  %3321 = vmatprep.subr.mxu0 0.0
  %3322 = vmatpush1.msra.mxu0 0.0
  %3323 = vmatprep.subr.mxu0 0.0
  %3324 = vmatpush1.msra.mxu0 0.0
  %3325 = vmatprep.subr.mxu0 0.0
  %3326 = vmatpush1.msra.mxu0 0.0
  %3327 = vmatprep.subr.mxu0 0.0
  %3328 = vmatpush1.msra.mxu0 0.0
  %3329 = vmatprep.subr.mxu0 0.0
  %3330 = vmatpush1.msra.mxu0 0.0
  %3331 = vmatprep.subr.mxu0 0.0
  %3332 = vmatpush1.msra.mxu0 0.0
  %3333 = vmatprep.subr.mxu0 0.0
  %3334 = vmatpush1.msra.mxu0 0.0
  %3335 = vmatprep.subr.mxu0 0.0
  %3336 = vmatpush1.msra.mxu0 0.0
  %3337 = vmatprep.subr.mxu0 0.0
  %3338 = vmatpush1.msra.mxu0 0.0
  %3339 = vmatprep.subr.mxu0 0.0
  %3340 = vmatpush1.msra.mxu0 0.0
  %3341 = vmatprep.subr.mxu0 0.0
  %3342 = vmatpush1.msra.mxu0 0.0
  %3343 = vmatprep.subr.mxu0 0.0
  %3344 = vmatpush1.msra.mxu0 0.0
  %3345 = vmatprep.subr.mxu0 0.0
  %3346 = vmatpush1.msra.mxu0 0.0
  %3347 = vmatprep.subr.mxu0 0.0
  %3348 = vmatpush1.msra.mxu0 0.0
  %3349 = vmatprep.subr.mxu0 0.0
  %3350 = vmatpush1.msra.mxu0 0.0
  %3351 = vmatprep.subr.mxu0 0.0
  %3352 = vmatpush1.msra.mxu0 0.0
  %3353 = vmatprep.subr.mxu0 0.0
  %3354 = vmatpush1.msra.mxu0 0.0
  %3355 = vmatprep.subr.mxu0 0.0
  %3356 = vmatpush1.msra.mxu0 0.0
  %3357 = vmatprep.subr.mxu0 0.0
  %3358 = vmatpush1.msra.mxu0 0.0
  %3359 = vmatprep.subr.mxu0 0.0
  %3360 = vmatpush1.msra.mxu0 0.0
  %3361 = vmatprep.subr.mxu0 0.0
  %3362 = vmatpush1.msra.mxu0 0.0
  %3363 = vmatprep.subr.mxu0 0.0
  %3364 = vmatpush1.msra.mxu0 0.0
  %3365 = vmatprep.subr.mxu0 0.0
  %3366 = vmatpush1.msra.mxu0 0.0
  %3367 = vmatprep.mubr.f32.mxu0 0.0
  %3368 = vmatmul.mubr.f32.gmra.mrb[0].mxu0 %v3301
  %v3369 = vpop.f32.mrb[0].mxu0
  %v3370 = vadd.f32 0.0, %v3369
  %v3371 = vpop.f32.mrb[0].mxu0
  %3372 = vdwg.mxu0
  %3373 = vrot.lane.b32.xlu0 %v2144, 64
  %v3374 = vpop.permute.xlu0 %3373
  %v3377 = vsel %vm318, %v2840, 0
  %3379 = vmatprep.subr.mxu0 0.0
  %3380 = vmatpush1.msra.mxu0 %v3374
  %3381 = vmatprep.subr.mxu0 0.0
  %3382 = vmatpush1.msra.mxu0 0.0
  %3383 = vmatprep.subr.mxu0 0.0
  %3384 = vmatpush1.msra.mxu0 0.0
  %3385 = vmatprep.subr.mxu0 0.0
  %3386 = vmatpush1.msra.mxu0 0.0
  %3387 = vmatprep.subr.mxu0 0.0
  %3388 = vmatpush1.msra.mxu0 0.0
  %3389 = vmatprep.subr.mxu0 0.0
  %3390 = vmatpush1.msra.mxu0 0.0
  %3391 = vmatprep.subr.mxu0 0.0
  %3392 = vmatpush1.msra.mxu0 0.0
  %3393 = vmatprep.subr.mxu0 0.0
  %3394 = vmatpush1.msra.mxu0 0.0
  %3395 = vmatprep.subr.mxu0 0.0
  %3396 = vmatpush1.msra.mxu0 0.0
  %3397 = vmatprep.subr.mxu0 0.0
  %3398 = vmatpush1.msra.mxu0 0.0
  %3399 = vmatprep.subr.mxu0 0.0
  %3400 = vmatpush1.msra.mxu0 0.0
  %3401 = vmatprep.subr.mxu0 0.0
  %3402 = vmatpush1.msra.mxu0 0.0
  %3403 = vmatprep.subr.mxu0 0.0
  %3404 = vmatpush1.msra.mxu0 0.0
  %3405 = vmatprep.subr.mxu0 0.0
  %3406 = vmatpush1.msra.mxu0 0.0
  %3407 = vmatprep.subr.mxu0 0.0
  %3408 = vmatpush1.msra.mxu0 0.0
  %3409 = vmatprep.subr.mxu0 0.0
  %3410 = vmatpush1.msra.mxu0 0.0
  %3411 = vmatprep.subr.mxu0 0.0
  %3412 = vmatpush1.msra.mxu0 0.0
  %3413 = vmatprep.subr.mxu0 0.0
  %3414 = vmatpush1.msra.mxu0 0.0
  %3415 = vmatprep.subr.mxu0 0.0
  %3416 = vmatpush1.msra.mxu0 0.0
  %3417 = vmatprep.subr.mxu0 0.0
  %3418 = vmatpush1.msra.mxu0 0.0
  %3419 = vmatprep.subr.mxu0 0.0
  %3420 = vmatpush1.msra.mxu0 0.0
  %3421 = vmatprep.subr.mxu0 0.0
  %3422 = vmatpush1.msra.mxu0 0.0
  %3423 = vmatprep.subr.mxu0 0.0
  %3424 = vmatpush1.msra.mxu0 0.0
  %3425 = vmatprep.subr.mxu0 0.0
  %3426 = vmatpush1.msra.mxu0 0.0
  %3427 = vmatprep.subr.mxu0 0.0
  %3428 = vmatpush1.msra.mxu0 0.0
  %3429 = vmatprep.subr.mxu0 0.0
  %3430 = vmatpush1.msra.mxu0 0.0
  %3431 = vmatprep.subr.mxu0 0.0
  %3432 = vmatpush1.msra.mxu0 0.0
  %3433 = vmatprep.subr.mxu0 0.0
  %3434 = vmatpush1.msra.mxu0 0.0
  %3435 = vmatprep.subr.mxu0 0.0
  %3436 = vmatpush1.msra.mxu0 0.0
  %3437 = vmatprep.subr.mxu0 0.0
  %3438 = vmatpush1.msra.mxu0 0.0
  %3439 = vmatprep.subr.mxu0 0.0
  %3440 = vmatpush1.msra.mxu0 0.0
  %3441 = vmatprep.subr.mxu0 0.0
  %3442 = vmatpush1.msra.mxu0 0.0
  %3443 = vmatprep.mubr.f32.mxu0 0.0
  %3444 = vmatmul.mubr.f32.gmra.mrb[0].mxu0 %v3377
  %v3445 = vpop.f32.mrb[0].mxu0
  %v3446 = vadd.f32 0.0, %v3445
  %v3447 = vpop.f32.mrb[0].mxu0
  %3448 = vdwg.mxu0
  %3451 = vrot.lane.b32.xlu0 %v3066, 8
  %v3452 = vpop.permute.xlu0 %3451
  %3453 = vrot.lane.b32.xlu0 %v3142, 8
  %v3454 = vpop.permute.xlu0 %3453
  %3459 = vrot.lane.b32.xlu0 %v3218, 16
  %v3460 = vpop.permute.xlu0 %3459
  %3461 = vrot.lane.b32.xlu0 %v3294, 16
  %v3462 = vpop.permute.xlu0 %3461
  %3467 = vrot.lane.b32.xlu0 %v3370, 24
  %v3468 = vpop.permute.xlu0 %3467
  %3469 = vrot.lane.b32.xlu0 %v3446, 24
  %v3470 = vpop.permute.xlu0 %3469
  %v3473 = vsel %vm318, %v2914, %v3452
  %v3474 = vsel %vm318, %v2990, %v3454
  %v3475 = vsel %vm1647, %v3473, %v3460
  %v3476 = vsel %vm1647, %v3474, %v3462
  %v3477 = vsel %vm1650, %v3475, %v3468
  %v3478 = vsel %vm1650, %v3476, %v3470
  %s3479 = scalar_lea.vmem %s7, 32
  %v3480 = vld [vmem:[%s3479] sm:$0xff]
  %v3481 = vld [vmem:[%s3479 + $0x8] sm:$0xff]
  %v3482 = vld [vmem:[%s3479 + $0x10] sm:$0xff]
  %v3483 = vld [vmem:[%s3479 + $0x18] sm:$0xff]
  %v3484 = vlaneseq
  %v3485 = vshrl.u32 %v3484, 7
  %v3486 = vsub.s32 2, %v3485
  %v3487 = vrot.slane %v2024, %v3486
  %v3489 = vsel %vm138, %v3477, 0
  %v3492 = vsel %vm138, %v3478, 0
  %3494 = vmatprep.subr.mxu0 0.0
  %3495 = vmatpush1.msra.mxu0 %v3480
  %3496 = vmatprep.subr.mxu0 0.0
  %3497 = vmatpush1.msra.mxu0 %v3481
  %3498 = vmatprep.subr.mxu0 0.0
  %3499 = vmatpush1.msra.mxu0 %v3482
  %3500 = vmatprep.subr.mxu0 0.0
  %3501 = vmatpush1.msra.mxu0 %v3483
  %3502 = vmatprep.subr.mxu0 0.0
  %3503 = vmatpush1.msra.mxu0 0.0
  %3504 = vmatprep.subr.mxu0 0.0
  %3505 = vmatpush1.msra.mxu0 0.0
  %3506 = vmatprep.subr.mxu0 0.0
  %3507 = vmatpush1.msra.mxu0 0.0
  %3508 = vmatprep.subr.mxu0 0.0
  %3509 = vmatpush1.msra.mxu0 0.0
  %3510 = vmatprep.subr.mxu0 0.0
  %3511 = vmatpush1.msra.mxu0 0.0
  %3512 = vmatprep.subr.mxu0 0.0
  %3513 = vmatpush1.msra.mxu0 0.0
  %3514 = vmatprep.subr.mxu0 0.0
  %3515 = vmatpush1.msra.mxu0 0.0
  %3516 = vmatprep.subr.mxu0 0.0
  %3517 = vmatpush1.msra.mxu0 0.0
  %3518 = vmatprep.subr.mxu0 0.0
  %3519 = vmatpush1.msra.mxu0 0.0
  %3520 = vmatprep.subr.mxu0 0.0
  %3521 = vmatpush1.msra.mxu0 0.0
  %3522 = vmatprep.subr.mxu0 0.0
  %3523 = vmatpush1.msra.mxu0 0.0
  %3524 = vmatprep.subr.mxu0 0.0
  %3525 = vmatpush1.msra.mxu0 0.0
  %3526 = vmatprep.subr.mxu0 0.0
  %3527 = vmatpush1.msra.mxu0 0.0
  %3528 = vmatprep.subr.mxu0 0.0
  %3529 = vmatpush1.msra.mxu0 0.0
  %3530 = vmatprep.subr.mxu0 0.0
  %3531 = vmatpush1.msra.mxu0 0.0
  %3532 = vmatprep.subr.mxu0 0.0
  %3533 = vmatpush1.msra.mxu0 0.0
  %3534 = vmatprep.subr.mxu0 0.0
  %3535 = vmatpush1.msra.mxu0 0.0
  %3536 = vmatprep.subr.mxu0 0.0
  %3537 = vmatpush1.msra.mxu0 0.0
  %3538 = vmatprep.subr.mxu0 0.0
  %3539 = vmatpush1.msra.mxu0 0.0
  %3540 = vmatprep.subr.mxu0 0.0
  %3541 = vmatpush1.msra.mxu0 0.0
  %3542 = vmatprep.subr.mxu0 0.0
  %3543 = vmatpush1.msra.mxu0 0.0
  %3544 = vmatprep.subr.mxu0 0.0
  %3545 = vmatpush1.msra.mxu0 0.0
  %3546 = vmatprep.subr.mxu0 0.0
  %3547 = vmatpush1.msra.mxu0 0.0
  %3548 = vmatprep.subr.mxu0 0.0
  %3549 = vmatpush1.msra.mxu0 0.0
  %3550 = vmatprep.subr.mxu0 0.0
  %3551 = vmatpush1.msra.mxu0 0.0
  %3552 = vmatprep.subr.mxu0 0.0
  %3553 = vmatpush1.msra.mxu0 0.0
  %3554 = vmatprep.subr.mxu0 0.0
  %3555 = vmatpush1.msra.mxu0 0.0
  %3556 = vmatprep.subr.mxu0 0.0
  %3557 = vmatpush1.msra.mxu0 0.0
  %3558 = vmatprep.mubr.f32.mxu0 0.0
  %3559 = vmatmul.mubr.f32.gmra.mrb[0].mxu0 %v3489
  %v3560 = vpop.f32.mrb[0].mxu0
  %v3561 = vadd.f32 %v3487, %v3560
  %v3562 = vpop.f32.mrb[0].mxu0
  %3563 = vmatprep.mubr.f32.mxu0 0.0
  %3564 = vmatmul.mubr.f32.gmra.mrb[0].mxu0 %v3492
  %v3565 = vpop.f32.mrb[0].mxu0
  %v3566 = vadd.f32 %v3487, %v3565
  %v3567 = vpop.f32.mrb[0].mxu0
  %3568 = vdwg.mxu0
  %v3569 = vadd.f32 %v3561, %v2021
  %v3570 = vadd.f32 %v3566, %v2022
  %v3571 = vsel %vm138, %v3569, 0.0
  %3572 = vadd.xlane.f32.xlu0 %v3571
  %v3573 = vpop.xlane.xlu0 %3572
  %v3574 = vsel %vm138, %v3570, 0.0
  %3575 = vadd.xlane.f32.xlu0 %v3574
  %v3576 = vpop.xlane.xlu0 %3575
  %v3577 = vmul.f32 %v3573, %v145
  %v3578 = vmul.f32 %v3576, %v145
  %v3579 = vsub.f32 %v3569, %v3577
  %v3580 = vsub.f32 %v3570, %v3578
  %v3581 = vmul.f32 %v3579, %v3579
  %v3582 = vmul.f32 %v3580, %v3580
  %v3583 = vsel %vm138, %v3581, 0.0
  %3584 = vadd.xlane.f32.xlu0 %v3583
  %v3585 = vpop.xlane.xlu0 %3584
  %v3586 = vsel %vm138, %v3582, 0.0
  %3587 = vadd.xlane.f32.xlu0 %v3586
  %v3588 = vpop.xlane.xlu0 %3587
  %v3589 = vmul.f32 %v3585, %v145
  %v3590 = vmul.f32 %v3588, %v145
  %v3591 = vadd.f32 %v3589, 1e-12
  %v3592 = vadd.f32 %v3590, 1e-12
  %v3593 = vrsqrt.pop %v3591
  %v3594 = vrsqrt.pop %v3592
  %v3595 = vmul.f32 %v3579, %v3593
  %v3596 = vmul.f32 %v3580, %v3594
  %v3597 = vlaneseq
  %v3598 = vshrl.u32 %v3597, 7
  %v3599 = vsub.s32 3, %v3598
  %v3600 = vrot.slane %v2024, %v3599
  %v3601 = vmul.f32 %v3595, %v3600
  %v3602 = vmul.f32 %v3596, %v3600
  %v3603 = vlaneseq
  %v3604 = vshrl.u32 %v3603, 7
  %v3605 = vsub.s32 4, %v3604
  %v3606 = vrot.slane %v2024, %v3605
  %v3607 = vadd.f32 %v3601, %v3606
  %v3608 = vadd.f32 %v3602, %v3606
  %s3609 = scalar_lea.vmem %s8, 32
  %v3610 = vld [vmem:[%s3609] sm:$0xff]
  %v3611 = vld [vmem:[%s3609 + $0x8] sm:$0xff]
  %v3612 = vld [vmem:[%s3609 + $0x10] sm:$0xff]
  %v3613 = vld [vmem:[%s3609 + $0x18] sm:$0xff]
  %v3614 = vlaneseq
  %v3615 = vshrl.u32 %v3614, 7
  %v3616 = vsub.s32 1, %v3615
  %v3617 = vrot.slane %v2024, %v3616
  %v3619 = vsel %vm138, %v3607, 0
  %v3622 = vsel %vm138, %v3608, 0
  %3624 = vmatprep.subr.mxu0 0.0
  %3625 = vmatpush1.msra.mxu0 %v3610
  %3626 = vmatprep.subr.mxu0 0.0
  %3627 = vmatpush1.msra.mxu0 %v3611
  %3628 = vmatprep.subr.mxu0 0.0
  %3629 = vmatpush1.msra.mxu0 %v3612
  %3630 = vmatprep.subr.mxu0 0.0
  %3631 = vmatpush1.msra.mxu0 %v3613
  %3632 = vmatprep.subr.mxu0 0.0
  %3633 = vmatpush1.msra.mxu0 0.0
  %3634 = vmatprep.subr.mxu0 0.0
  %3635 = vmatpush1.msra.mxu0 0.0
  %3636 = vmatprep.subr.mxu0 0.0
  %3637 = vmatpush1.msra.mxu0 0.0
  %3638 = vmatprep.subr.mxu0 0.0
  %3639 = vmatpush1.msra.mxu0 0.0
  %3640 = vmatprep.subr.mxu0 0.0
  %3641 = vmatpush1.msra.mxu0 0.0
  %3642 = vmatprep.subr.mxu0 0.0
  %3643 = vmatpush1.msra.mxu0 0.0
  %3644 = vmatprep.subr.mxu0 0.0
  %3645 = vmatpush1.msra.mxu0 0.0
  %3646 = vmatprep.subr.mxu0 0.0
  %3647 = vmatpush1.msra.mxu0 0.0
  %3648 = vmatprep.subr.mxu0 0.0
  %3649 = vmatpush1.msra.mxu0 0.0
  %3650 = vmatprep.subr.mxu0 0.0
  %3651 = vmatpush1.msra.mxu0 0.0
  %3652 = vmatprep.subr.mxu0 0.0
  %3653 = vmatpush1.msra.mxu0 0.0
  %3654 = vmatprep.subr.mxu0 0.0
  %3655 = vmatpush1.msra.mxu0 0.0
  %3656 = vmatprep.subr.mxu0 0.0
  %3657 = vmatpush1.msra.mxu0 0.0
  %3658 = vmatprep.subr.mxu0 0.0
  %3659 = vmatpush1.msra.mxu0 0.0
  %3660 = vmatprep.subr.mxu0 0.0
  %3661 = vmatpush1.msra.mxu0 0.0
  %3662 = vmatprep.subr.mxu0 0.0
  %3663 = vmatpush1.msra.mxu0 0.0
  %3664 = vmatprep.subr.mxu0 0.0
  %3665 = vmatpush1.msra.mxu0 0.0
  %3666 = vmatprep.subr.mxu0 0.0
  %3667 = vmatpush1.msra.mxu0 0.0
  %3668 = vmatprep.subr.mxu0 0.0
  %3669 = vmatpush1.msra.mxu0 0.0
  %3670 = vmatprep.subr.mxu0 0.0
  %3671 = vmatpush1.msra.mxu0 0.0
  %3672 = vmatprep.subr.mxu0 0.0
  %3673 = vmatpush1.msra.mxu0 0.0
  %3674 = vmatprep.subr.mxu0 0.0
  %3675 = vmatpush1.msra.mxu0 0.0
  %3676 = vmatprep.subr.mxu0 0.0
  %3677 = vmatpush1.msra.mxu0 0.0
  %3678 = vmatprep.subr.mxu0 0.0
  %3679 = vmatpush1.msra.mxu0 0.0
  %3680 = vmatprep.subr.mxu0 0.0
  %3681 = vmatpush1.msra.mxu0 0.0
  %3682 = vmatprep.subr.mxu0 0.0
  %3683 = vmatpush1.msra.mxu0 0.0
  %3684 = vmatprep.subr.mxu0 0.0
  %3685 = vmatpush1.msra.mxu0 0.0
  %3686 = vmatprep.subr.mxu0 0.0
  %3687 = vmatpush1.msra.mxu0 0.0
  %3688 = vmatprep.mubr.f32.mxu0 0.0
  %3689 = vmatmul.mubr.f32.gmra.mrb[0].mxu0 %v3619
  %v3690 = vpop.f32.mrb[0].mxu0
  %v3691 = vadd.f32 %v3617, %v3690
  %v3692 = vpop.f32.mrb[0].mxu0
  %3693 = vmatprep.mubr.f32.mxu0 0.0
  %3694 = vmatmul.mubr.f32.gmra.mrb[0].mxu0 %v3622
  %v3695 = vpop.f32.mrb[0].mxu0
  %v3696 = vadd.f32 %v3617, %v3695
  %v3697 = vpop.f32.mrb[0].mxu0
  %3698 = vdwg.mxu0
  %v3699 = vmul.f32 %v3691, 0.5
  %v3700 = vmul.f32 %v3696, 0.5
  %v3701 = vmul.f32 %v3691, 0.044715
  %v3702 = vmul.f32 %v3696, 0.044715
  %v3703 = vmul.f32 %v3701, %v3691
  %v3704 = vmul.f32 %v3702, %v3696
  %v3705 = vmul.f32 %v3703, %v3691
  %v3706 = vmul.f32 %v3704, %v3696
  %v3707 = vadd.f32 %v3691, %v3705
  %v3708 = vadd.f32 %v3696, %v3706
  %v3709 = vmul.f32 %v3707, 0.7978846
  %v3710 = vmul.f32 %v3708, 0.7978846
  %v3711 = vtanh.pop %v3709
  %v3712 = vtanh.pop %v3710
  %v3713 = vadd.f32 %v3711, 1.0
  %v3714 = vadd.f32 %v3712, 1.0
  %v3715 = vmul.f32 %v3699, %v3713
  %v3716 = vmul.f32 %v3700, %v3714
  %s3717 = scalar_lea.vmem %s9, 64
  %v3718 = vld [vmem:[%s3717] sm:$0xff]
  %v3719 = vld [vmem:[%s3717 + $0x8] sm:$0xff]
  %v3720 = vld [vmem:[%s3717 + $0x10] sm:$0xff]
  %v3721 = vld [vmem:[%s3717 + $0x18] sm:$0xff]
  %v3722 = vld [vmem:[%s3717 + $0x20] sm:$0xff]
  %v3723 = vld [vmem:[%s3717 + $0x28] sm:$0xff]
  %v3724 = vld [vmem:[%s3717 + $0x30] sm:$0xff]
  %v3725 = vld [vmem:[%s3717 + $0x38] sm:$0xff]
  %v3726 = vlaneseq
  %v3727 = vshrl.u32 %v3726, 7
  %v3728 = vsub.s32 5, %v3727
  %v3729 = vrot.slane %v2024, %v3728
  %v3731 = vsel %vm1901, %v3715, 0
  %v3734 = vsel %vm1901, %v3716, 0
  %3736 = vmatprep.subr.mxu0 0.0
  %3737 = vmatpush1.msra.mxu0 %v3718
  %3738 = vmatprep.subr.mxu0 0.0
  %3739 = vmatpush1.msra.mxu0 %v3719
  %3740 = vmatprep.subr.mxu0 0.0
  %3741 = vmatpush1.msra.mxu0 %v3720
  %3742 = vmatprep.subr.mxu0 0.0
  %3743 = vmatpush1.msra.mxu0 %v3721
  %3744 = vmatprep.subr.mxu0 0.0
  %3745 = vmatpush1.msra.mxu0 %v3722
  %3746 = vmatprep.subr.mxu0 0.0
  %3747 = vmatpush1.msra.mxu0 %v3723
  %3748 = vmatprep.subr.mxu0 0.0
  %3749 = vmatpush1.msra.mxu0 %v3724
  %3750 = vmatprep.subr.mxu0 0.0
  %3751 = vmatpush1.msra.mxu0 %v3725
  %3752 = vmatprep.subr.mxu0 0.0
  %3753 = vmatpush1.msra.mxu0 0.0
  %3754 = vmatprep.subr.mxu0 0.0
  %3755 = vmatpush1.msra.mxu0 0.0
  %3756 = vmatprep.subr.mxu0 0.0
  %3757 = vmatpush1.msra.mxu0 0.0
  %3758 = vmatprep.subr.mxu0 0.0
  %3759 = vmatpush1.msra.mxu0 0.0
  %3760 = vmatprep.subr.mxu0 0.0
  %3761 = vmatpush1.msra.mxu0 0.0
  %3762 = vmatprep.subr.mxu0 0.0
  %3763 = vmatpush1.msra.mxu0 0.0
  %3764 = vmatprep.subr.mxu0 0.0
  %3765 = vmatpush1.msra.mxu0 0.0
  %3766 = vmatprep.subr.mxu0 0.0
  %3767 = vmatpush1.msra.mxu0 0.0
  %3768 = vmatprep.subr.mxu0 0.0
  %3769 = vmatpush1.msra.mxu0 0.0
  %3770 = vmatprep.subr.mxu0 0.0
  %3771 = vmatpush1.msra.mxu0 0.0
  %3772 = vmatprep.subr.mxu0 0.0
  %3773 = vmatpush1.msra.mxu0 0.0
  %3774 = vmatprep.subr.mxu0 0.0
  %3775 = vmatpush1.msra.mxu0 0.0
  %3776 = vmatprep.subr.mxu0 0.0
  %3777 = vmatpush1.msra.mxu0 0.0
  %3778 = vmatprep.subr.mxu0 0.0
  %3779 = vmatpush1.msra.mxu0 0.0
  %3780 = vmatprep.subr.mxu0 0.0
  %3781 = vmatpush1.msra.mxu0 0.0
  %3782 = vmatprep.subr.mxu0 0.0
  %3783 = vmatpush1.msra.mxu0 0.0
  %3784 = vmatprep.subr.mxu0 0.0
  %3785 = vmatpush1.msra.mxu0 0.0
  %3786 = vmatprep.subr.mxu0 0.0
  %3787 = vmatpush1.msra.mxu0 0.0
  %3788 = vmatprep.subr.mxu0 0.0
  %3789 = vmatpush1.msra.mxu0 0.0
  %3790 = vmatprep.subr.mxu0 0.0
  %3791 = vmatpush1.msra.mxu0 0.0
  %3792 = vmatprep.subr.mxu0 0.0
  %3793 = vmatpush1.msra.mxu0 0.0
  %3794 = vmatprep.subr.mxu0 0.0
  %3795 = vmatpush1.msra.mxu0 0.0
  %3796 = vmatprep.subr.mxu0 0.0
  %3797 = vmatpush1.msra.mxu0 0.0
  %3798 = vmatprep.subr.mxu0 0.0
  %3799 = vmatpush1.msra.mxu0 0.0
  %3800 = vmatprep.mubr.f32.mxu0 0.0
  %3801 = vmatmul.mubr.f32.gmra.mrb[0].mxu0 %v3731
  %v3802 = vpop.f32.mrb[0].mxu0
  %v3803 = vadd.f32 %v3729, %v3802
  %v3804 = vpop.f32.mrb[0].mxu0
  %3805 = vmatprep.mubr.f32.mxu0 0.0
  %3806 = vmatmul.mubr.f32.gmra.mrb[0].mxu0 %v3734
  %v3807 = vpop.f32.mrb[0].mxu0
  %v3808 = vadd.f32 %v3729, %v3807
  %v3809 = vpop.f32.mrb[0].mxu0
  %3810 = vdwg.mxu0
  %v3811 = vadd.f32 %v3803, %v3607
  %v3812 = vadd.f32 %v3808, %v3608
  %v3813 = vsel %vm138, %v3811, 0.0
  %3814 = vadd.xlane.f32.xlu0 %v3813
  %v3815 = vpop.xlane.xlu0 %3814
  %v3816 = vsel %vm138, %v3812, 0.0
  %3817 = vadd.xlane.f32.xlu0 %v3816
  %v3818 = vpop.xlane.xlu0 %3817
  %v3819 = vmul.f32 %v3815, %v145
  %v3820 = vmul.f32 %v3818, %v145
  %v3821 = vsub.f32 %v3811, %v3819
  %v3822 = vsub.f32 %v3812, %v3820
  %v3823 = vmul.f32 %v3821, %v3821
  %v3824 = vmul.f32 %v3822, %v3822
  %v3825 = vsel %vm138, %v3823, 0.0
  %3826 = vadd.xlane.f32.xlu0 %v3825
  %v3827 = vpop.xlane.xlu0 %3826
  %v3828 = vsel %vm138, %v3824, 0.0
  %3829 = vadd.xlane.f32.xlu0 %v3828
  %v3830 = vpop.xlane.xlu0 %3829
  %v3831 = vmul.f32 %v3827, %v145
  %v3832 = vmul.f32 %v3830, %v145
  %v3833 = vadd.f32 %v3831, 1e-12
  %v3834 = vadd.f32 %v3832, 1e-12
  %v3835 = vrsqrt.pop %v3833
  %v3836 = vrsqrt.pop %v3834
  %v3837 = vmul.f32 %v3821, %v3835
  %v3838 = vmul.f32 %v3822, %v3836
  %v3839 = vlaneseq
  %v3840 = vshrl.u32 %v3839, 7
  %v3841 = vsub.s32 6, %v3840
  %v3842 = vrot.slane %v2024, %v3841
  %v3843 = vmul.f32 %v3837, %v3842
  %v3844 = vmul.f32 %v3838, %v3842
  %v3845 = vlaneseq
  %v3846 = vshrl.u32 %v3845, 7
  %v3847 = vsub.s32 7, %v3846
  %v3848 = vrot.slane %v2024, %v3847
  %v3849 = vadd.f32 %v3843, %v3848
  %v3850 = vadd.f32 %v3844, %v3848
  %3851 = vst.msk [vmem:[%s12] sm:$0xff] %vm138, %v3849
  %3852 = vst.msk [vmem:[%s12 + $0x8] sm:$0xff] %vm138, %v3850
  %v3853 = vld [vmem:[%s11] sm:$0xff]
  %v3854 = vld [vmem:[%s11 + $0x8] sm:$0xff]
  %v3855 = vld [vmem:[%s11 + $0x10] sm:$0xff]
  %v3856 = vld [vmem:[%s11 + $0x18] sm:$0xff]
  %v3857 = vld [vmem:[%s11 + $0x20] sm:$0x1]
  %v3858 = vld [vmem:[%s3] sm:$0xff]
  %v3859 = vld [vmem:[%s3 + $0x8] sm:$0xff]
  %vm3860 = vcmask 7168
  %v3861 = vsel %vm3860, %v3858, 0.0
  %v3862 = vrot.slane %v3861, 4
  %v3863 = vadd.f32 %v3861, %v3862
  %v3864 = vrot.slane %v3863, 2
  %v3865 = vadd.f32 %v3863, %v3864
  %v3866 = vrot.slane %v3865, 1
  %v3867 = vadd.f32 %v3865, %v3866
  %v3868 = vsel %vm3860, %v3859, 0.0
  %v3869 = vrot.slane %v3868, 4
  %v3870 = vadd.f32 %v3868, %v3869
  %v3871 = vrot.slane %v3870, 2
  %v3872 = vadd.f32 %v3870, %v3871
  %v3873 = vrot.slane %v3872, 1
  %v3874 = vadd.f32 %v3872, %v3873
  %v3875 = vrcp.pop %v3867
  %v3876 = vrcp.pop %v3874
  %3878 = vset.pattern.permute.xlu0 0
  %3879 = vperm.xlu0 %3878, %v3858
  %v3880 = vpop.permute.xlu0 %3879
  %3883 = vset.pattern.permute.xlu0 0
  %3884 = vperm.xlu0 %3883, %v3859
  %v3885 = vpop.permute.xlu0 %3884
  %v3887 = vmul.f32 %v3849, %v3880
  %v3888 = vmul.f32 %v3850, %v3885
  %v3889 = vsel %vm138, %v3887, 0.0
  %v3890 = vrot.slane %v3889, 4
  %v3891 = vadd.f32 %v3889, %v3890
  %v3892 = vrot.slane %v3891, 2
  %v3893 = vadd.f32 %v3891, %v3892
  %v3894 = vrot.slane %v3893, 1
  %v3895 = vadd.f32 %v3893, %v3894
  %v3896 = vsel %vm138, %v3888, 0.0
  %v3897 = vrot.slane %v3896, 4
  %v3898 = vadd.f32 %v3896, %v3897
  %v3899 = vrot.slane %v3898, 2
  %v3900 = vadd.f32 %v3898, %v3899
  %v3901 = vrot.slane %v3900, 1
  %v3902 = vadd.f32 %v3900, %v3901
  %3904 = vset.pattern.permute.xlu0 0
  %3905 = vperm.xlu0 %3904, %v3875
  %v3906 = vpop.permute.xlu0 %3905
  %3909 = vset.pattern.permute.xlu0 0
  %3910 = vperm.xlu0 %3909, %v3876
  %v3911 = vpop.permute.xlu0 %3910
  %v3913 = vmul.f32 %v3895, %v3906
  %v3914 = vmul.f32 %v3902, %v3911
  %v3915 = vlaneseq
  %v3916 = vshrl.u32 %v3915, 7
  %v3917 = vsub.s32 0, %v3916
  %v3918 = vrot.slane %v3857, %v3917
  %vm3921 = vcmask 1041409
  %v3922 = vsel %vm3921, %v3914, %v3913
  %v3923 = vsel %vm138, %v3922, 0
  %3925 = vmatprep.subr.mxu0 0.0
  %3926 = vmatpush1.msra.mxu0 %v3853
  %3927 = vmatprep.subr.mxu0 0.0
  %3928 = vmatpush1.msra.mxu0 %v3854
  %3929 = vmatprep.subr.mxu0 0.0
  %3930 = vmatpush1.msra.mxu0 %v3855
  %3931 = vmatprep.subr.mxu0 0.0
  %3932 = vmatpush1.msra.mxu0 %v3856
  %3933 = vmatprep.subr.mxu0 0.0
  %3934 = vmatpush1.msra.mxu0 0.0
  %3935 = vmatprep.subr.mxu0 0.0
  %3936 = vmatpush1.msra.mxu0 0.0
  %3937 = vmatprep.subr.mxu0 0.0
  %3938 = vmatpush1.msra.mxu0 0.0
  %3939 = vmatprep.subr.mxu0 0.0
  %3940 = vmatpush1.msra.mxu0 0.0
  %3941 = vmatprep.subr.mxu0 0.0
  %3942 = vmatpush1.msra.mxu0 0.0
  %3943 = vmatprep.subr.mxu0 0.0
  %3944 = vmatpush1.msra.mxu0 0.0
  %3945 = vmatprep.subr.mxu0 0.0
  %3946 = vmatpush1.msra.mxu0 0.0
  %3947 = vmatprep.subr.mxu0 0.0
  %3948 = vmatpush1.msra.mxu0 0.0
  %3949 = vmatprep.subr.mxu0 0.0
  %3950 = vmatpush1.msra.mxu0 0.0
  %3951 = vmatprep.subr.mxu0 0.0
  %3952 = vmatpush1.msra.mxu0 0.0
  %3953 = vmatprep.subr.mxu0 0.0
  %3954 = vmatpush1.msra.mxu0 0.0
  %3955 = vmatprep.subr.mxu0 0.0
  %3956 = vmatpush1.msra.mxu0 0.0
  %3957 = vmatprep.subr.mxu0 0.0
  %3958 = vmatpush1.msra.mxu0 0.0
  %3959 = vmatprep.subr.mxu0 0.0
  %3960 = vmatpush1.msra.mxu0 0.0
  %3961 = vmatprep.subr.mxu0 0.0
  %3962 = vmatpush1.msra.mxu0 0.0
  %3963 = vmatprep.subr.mxu0 0.0
  %3964 = vmatpush1.msra.mxu0 0.0
  %3965 = vmatprep.subr.mxu0 0.0
  %3966 = vmatpush1.msra.mxu0 0.0
  %3967 = vmatprep.subr.mxu0 0.0
  %3968 = vmatpush1.msra.mxu0 0.0
  %3969 = vmatprep.subr.mxu0 0.0
  %3970 = vmatpush1.msra.mxu0 0.0
  %3971 = vmatprep.subr.mxu0 0.0
  %3972 = vmatpush1.msra.mxu0 0.0
  %3973 = vmatprep.subr.mxu0 0.0
  %3974 = vmatpush1.msra.mxu0 0.0
  %3975 = vmatprep.subr.mxu0 0.0
  %3976 = vmatpush1.msra.mxu0 0.0
  %3977 = vmatprep.subr.mxu0 0.0
  %3978 = vmatpush1.msra.mxu0 0.0
  %3979 = vmatprep.subr.mxu0 0.0
  %3980 = vmatpush1.msra.mxu0 0.0
  %3981 = vmatprep.subr.mxu0 0.0
  %3982 = vmatpush1.msra.mxu0 0.0
  %3983 = vmatprep.subr.mxu0 0.0
  %3984 = vmatpush1.msra.mxu0 0.0
  %3985 = vmatprep.subr.mxu0 0.0
  %3986 = vmatpush1.msra.mxu0 0.0
  %3987 = vmatprep.subr.mxu0 0.0
  %3988 = vmatpush1.msra.mxu0 0.0
  %3989 = vmatprep.mubr.f32.mxu0 0.0
  %3990 = vmatmul.mubr.f32.gmra.mrb[0].mxu0 %v3923
  %v3991 = vpop.f32.mrb[0].mxu0
  %v3992 = vadd.f32 %v3918, %v3991
  %v3993 = vpop.f32.mrb[0].mxu0
  %3994 = vdwg.mxu0
  %v3995 = vmax.f32 %v3992, 0.0
  %v3996 = vand.u32 2147483647, %v3992
  %v3997 = vsub.f32 0.0, %v3996
  %v3998 = vmul.f32 %v3997, 1.442695
  %v3999 = vpow.pop %v3998
  %v4000 = vadd.f32 %v3999, 1.0
  %v4001 = vlog2.pop %v4000
  %v4002 = vmul.f32 %v4001, 0.6931472
  %v4003 = vmul.f32 -0.5, %v3999
  %v4004 = vadd.f32 %v4003, 1.0
  %v4005 = vmul.f32 %v4004, %v3999
  %v4006 = vand.u32 2147483647, %v3999
  %vm4007 = vcmp.lt.f32.partialorder %v4006, 0.0004427343
  %v4008 = vsel %vm4007, %v4005, %v4002
  %v4009 = vadd.f32 %v3995, %v4008
  %v4010 = vmax.f32 %v4009, 1e-07
  %v4011 = vrsqrt.pop %v4010
  %v4012 = vmul.f32 %v4010, %v4011
  %vm4013 = vcmp.eq.f32.partialorder %v4010, inf
  %v4014 = vsel %vm4013, %v4010, %v4012
  %vm4015 = vcmp.eq.f32.partialorder %v4010, 0.0
  %v4016 = vand.u32 %v4010, 2147483648
  %v4017 = vsel %vm4015, %v4016, %v4014
  %v4018 = vld [vmem:[%s4] sm:$0x3]
  %4020 = vrot.lane.b32.xlu0 %v4018, 8
  %v4021 = vpop.permute.xlu0 %4020
  %v4023 = vmul.f32 %v4017, %v4021
  %4025 = vrot.lane.b32.xlu0 %v4023, 120
  %v4026 = vpop.permute.xlu0 %4025
  %v4028 = vadd.f32 %v3992, %v4026
  %vm4029 = vcmask 58368
  %4030 = vst.msk [vmem:[%s12 + $0x10] sm:$0x3] %vm4029, %v4028
  // Predicated region
  $region50: #{bert_encoder_forward.1} parent=0 // pred_check
    _
  $region51: #{bert_encoder_forward.1} parent=0 // pred_check_branch
    %4032 = sbr.rel (0) target = $region53
  $region52: #{bert_encoder_forward.1} parent=0 // pred_region
    _
  $region53: #{bert_encoder_forward.1} parent=0 // pred_fallthru
    _
  // Predicated region
  $region54: #{bert_encoder_forward.1} parent=0 // pred_check
    _
  $region55: #{bert_encoder_forward.1} parent=0 // pred_check_branch
    %4034 = sbr.rel (0) target = $region57
  $region56: #{bert_encoder_forward.1} parent=0 // pred_region
    _
  $region57: #{bert_encoder_forward.1} parent=0 // pred_fallthru
    _

</llo_original>
